<compile_context>
chip_gen: v5e
topology: v5e:2x2
jax: 0.10.0
libtpu: 0.0.40
codegen_flags: <defaults>
</compile_context>

<pallas_src>
import jax
import jax.numpy as jnp
from jax.experimental import pallas as pl
from jax.experimental.pallas import tpu as pltpu

# ---- config consistent with S2VTMODEL(input_size, hidden_size, vocab_size, embed_dim)
INPUT_SIZE = 64   # video feature dim
HIDDEN     = 32
VOCAB      = 50
EMBED      = 16
BATCH      = 2
N_FRAMES   = 8    # encoder sequence length
CAP_LEN    = 6    # caption length (decoder runs CAP_LEN - 1 steps)
LANE       = 128  # lane width: padded hidden / padded vocab / per-gate slab width


def _round_up(x, m):
    return (x + m - 1) // m * m


# -------------------------------------------------------------------------------------
# Fused S2VT forward kernel: encoder GRU -> attention (once) -> decoder GRU -> one
# batched vocab projection + one lane-dense store.
# Gate layout convention: every "*_wx / *_whh / bias" operand has 3*LANE columns,
# gate g (r, z, n) occupying columns [g*LANE, g*LANE + H); the hidden state is carried
# at width LANE with lanes H: exactly zero.
# -------------------------------------------------------------------------------------
def s2vt_kernel(feats_ref, emb_ref,
                enc_wx_ref, enc_bx_ref, enc_whh_ref, enc_bhh_ref,
                attn_v_ref,
                dec_wxe_ref, dec_wxc_ref, dec_bx_ref, dec_whh_ref, dec_bhh_ref,
                wout_ref, bout_ref,
                out_ref):
    f32 = jnp.float32
    B, T, F = feats_ref.shape
    _, S, E = emb_ref.shape                    # S = decoder steps (= cap_len - 1)
    HP = enc_whh_ref.shape[0]                  # lane-padded hidden width (128)

    # PyTorch GRU gate order (r, z, n): h' = (1-z)*n + z*h.
    # All slices below start on a 128-lane (vreg) boundary -> no masked extraction.
    def gru_step(gx, gh, h):
        r = jax.nn.sigmoid(gx[:, :HP] + gh[:, :HP])
        z = jax.nn.sigmoid(gx[:, HP:2 * HP] + gh[:, HP:2 * HP])
        n = jnp.tanh(gx[:, 2 * HP:] + r * gh[:, 2 * HP:])
        return (1.0 - z) * n + z * h           # padded lanes stay exactly 0

    # ---------------- EncoderRNN: (compress folded) -> GRU ----------------
    feats2d = feats_ref[...].reshape(B * T, F)
    # input-gate pre-activations for ALL T frames, hoisted out of the recurrence
    gx_all = (jnp.dot(feats2d, enc_wx_ref[...], preferred_element_type=f32)
              + enc_bx_ref[...]).reshape(B, T, 3 * HP)

    ewhh = enc_whh_ref[...]
    ebhh = enc_bhh_ref[...]
    h = jnp.zeros((B, HP), f32)                # GRU default h0 = zeros
    enc_states = []                            # kept in registers (no scratch round-trip)
    for t in range(T):                         # static unroll (recurrence; tiny T)
        gh = jnp.dot(h, ewhh, preferred_element_type=f32) + ebhh
        h = gru_step(gx_all[:, t, :], gh, h)
        enc_states.append(h)
    enc = jnp.stack(enc_states, axis=1)        # (B, T, HP) encoder_outputs

    # ---------------- Attention: computed ONCE per sequence ----------------
    # The linear W1->W2->W3->to_weight chain is folded into attn_v in the wrapper;
    # the decoder-hidden term and all biases cancel under softmax, so the attention
    # weights / context are independent of the decoder hidden state (exact).
    scores = jnp.sum(enc * attn_v_ref[...][None, :, :], axis=-1)          # (B, T)
    scores = scores - jnp.max(scores, axis=1, keepdims=True)
    e = jnp.exp(scores)
    attn = e * pl.reciprocal(jnp.sum(e, axis=1, keepdims=True), approx=False)
    context = jnp.sum(attn[:, :, None] * enc, axis=1)                     # (B, HP)

    # ---------------- DecoderRNN (teacher forcing; dropout = identity) ----------------
    emb2d = emb_ref[...].reshape(B * S, E)
    # embed-part of the input gates for ALL steps, hoisted out of the recurrence
    gxe_all = jnp.dot(emb2d, dec_wxe_ref[...],
                      preferred_element_type=f32).reshape(B, S, 3 * HP)
    # context-part + input bias is constant across steps
    gxc = jnp.dot(context, dec_wxc_ref[...], preferred_element_type=f32) + dec_bx_ref[...]

    dwhh = dec_whh_ref[...]
    dbhh = dec_bhh_ref[...]
    h = jnp.zeros((B, HP), f32)                # DecoderRNN.init_state -> zeros
    dec_states = []
    for i in range(S):                         # static unroll; step i consumes targets[:, i]
        gh = jnp.dot(h, dwhh, preferred_element_type=f32) + dbhh
        h = gru_step(gxe_all[:, i, :] + gxc, gh, h)
        dec_states.append(h)

    # One batched vocab projection + ONE unmasked lane-dense store (step-major rows).
    h_all = jnp.concatenate(dec_states, axis=0)                           # (S*B, HP)
    out_ref[...] = (jnp.dot(h_all, wout_ref[...], preferred_element_type=f32)
                    + bout_ref[...])


# -------------------------------------------------------------------------------------
# Wrapper-side weight folds / padding (exact), then the single pallas_call.
# -------------------------------------------------------------------------------------
def _gate_pad_cols(w, lane=LANE):
    """(rows, 3H) -> (rows, 3*lane); gate g occupies cols [g*lane, g*lane+H), rest 0."""
    h = w.shape[1] // 3
    blocks = [jnp.pad(w[:, g * h:(g + 1) * h], ((0, 0), (0, lane - h))) for g in range(3)]
    return jnp.concatenate(blocks, axis=1)


def _row_pad(w, rows):
    return jnp.pad(w, ((0, rows - w.shape[0]), (0, 0)))


def s2vt_forward(params, features, target_captions):
    B, T, _F = features.shape
    L = target_captions.shape[1]
    H = params['enc_whh'].shape[0]
    V = params['wout'].shape[1]
    HP = _round_up(H, LANE)                    # lane-padded hidden (128)
    VP = _round_up(V, LANE)                    # lane-padded vocab  (128)
    nsteps = L - 1

    # encoder: compress Linear folded into the GRU input-gate matmul (dropout = identity)
    enc_wx = _gate_pad_cols(params['enc_cw'] @ params['enc_wih'])
    enc_bx = _gate_pad_cols(params['enc_cb'] @ params['enc_wih'] + params['enc_bih'])
    enc_whh = _row_pad(_gate_pad_cols(params['enc_whh']), HP)
    enc_bhh = _gate_pad_cols(params['enc_bhh'])

    # attention: linear chain W1(enc)->W2->W3->to_weight folded into one (H,) vector.
    # The W1(hidden) term and b1/b2/b3 are constant over seq_len -> cancel under softmax.
    v = (params['w1e'] @ params['w2'] @ params['w3'] @ params['wto'].T)[:, 0]
    attn_v = jnp.zeros((1, HP), jnp.float32).at[0, :H].set(v)

    # decoder GRU (input = cat([embed, context]) -> pre-split weights)
    dec_wxe = _gate_pad_cols(params['dec_wih_e'])
    dec_wxc = _row_pad(_gate_pad_cols(params['dec_wih_c']), HP)
    dec_bx = _gate_pad_cols(params['dec_bih'])
    dec_whh = _row_pad(_gate_pad_cols(params['dec_whh']), HP)
    dec_bhh = _gate_pad_cols(params['dec_bhh'])

    # output projection: lane-dense padded (rows to HP, cols to VP)
    wout_p = _row_pad(jnp.pad(params['wout'], ((0, 0), (0, VP - V))), HP)
    bout_p = jnp.pad(params['bout'], ((0, 0), (0, VP - V)))

    # embedding gather (teacher-forced inputs: decoder consumes targets[:, :L-1])
    tgt_emb = params['embedding'][target_captions][:, :nsteps]            # (B, nsteps, E)

    args = (features, tgt_emb,
            enc_wx, enc_bx, enc_whh, enc_bhh,
            attn_v,
            dec_wxe, dec_wxc, dec_bx, dec_whh, dec_bhh,
            wout_p, bout_p)

    vmem_spec = pl.BlockSpec(memory_space=pltpu.MemorySpace.VMEM)
    logits_p = pl.pallas_call(                                            # no grid
        s2vt_kernel,
        out_shape=jax.ShapeDtypeStruct((nsteps * B, VP), jnp.float32),
        in_specs=[vmem_spec] * len(args),
        out_specs=vmem_spec,
    )(*args)

    # (nsteps*B, VP) step-major -> (B, nsteps, V)
    seq_logProb = jnp.transpose(logits_p.reshape(nsteps, B, VP), (1, 0, 2))[:, :, :V]
    caption_preds = jnp.argmax(seq_logProb, axis=2)                       # (B, L-1)
    return seq_logProb, caption_preds


# -------------------------------------------------------------------------------------
# Deterministic parameter init (synthetic; shapes follow the PyTorch module __init__)
# -------------------------------------------------------------------------------------
def init_params(key):
    keys = iter(jax.random.split(key, 32))
    H, V, E, F = HIDDEN, VOCAB, EMBED, INPUT_SIZE

    def uni(shape, fan_in):
        lim = 1.0 / (fan_in ** 0.5)
        return jax.random.uniform(next(keys), shape, jnp.float32, -lim, lim)

    p = {}
    # EncoderRNN
    p['enc_cw'] = uni((F, H), F)
    p['enc_cb'] = uni((1, H), F)
    p['enc_wih'] = uni((H, 3 * H), H)
    p['enc_whh'] = uni((H, 3 * H), H)
    p['enc_bih'] = uni((1, 3 * H), H)
    p['enc_bhh'] = uni((1, 3 * H), H)
    # Embedding
    p['embedding'] = jax.random.normal(next(keys), (V, E), jnp.float32)
    # Attention (W1 split into enc / hidden halves of the 2H input).
    # w1h / b1 / b2 / b3 contributions cancel under the shift-invariant softmax
    # (the chain is purely linear); kept for parameter-shape fidelity.
    p['w1e'] = uni((H, H), 2 * H)
    p['w1h'] = uni((H, H), 2 * H)
    p['b1'] = uni((1, H), 2 * H)
    p['w2'] = uni((H, H), H)
    p['b2'] = uni((1, H), H)
    p['w3'] = uni((H, H), H)
    p['b3'] = uni((1, H), H)
    p['wto'] = uni((1, H), H)            # to_weight (bias=False), stored as row vector
    # Decoder GRU (input = cat([embed(E), context(H)]) -> split weights)
    p['dec_wih_e'] = uni((E, 3 * H), H)
    p['dec_wih_c'] = uni((H, 3 * H), H)
    p['dec_whh'] = uni((H, 3 * H), H)
    p['dec_bih'] = uni((1, 3 * H), H)
    p['dec_bhh'] = uni((1, 3 * H), H)
    # Output Linear
    p['wout'] = uni((H, V), H)
    p['bout'] = uni((1, V), H)
    return p


if __name__ == "__main__":
    key = jax.random.PRNGKey(0)
    kp, kf, kt = jax.random.split(key, 3)
    params = init_params(kp)
    features = jax.random.normal(kf, (BATCH, N_FRAMES, INPUT_SIZE), jnp.float32)
    target_captions = jax.random.randint(kt, (BATCH, CAP_LEN), 0, VOCAB)

    fwd = jax.jit(s2vt_forward)
    seq_logProb, caption_preds = fwd(params, features, target_captions)
    jax.block_until_ready((seq_logProb, caption_preds))

    assert seq_logProb.shape == (BATCH, CAP_LEN - 1, VOCAB)
    assert caption_preds.shape == (BATCH, CAP_LEN - 1)
    assert bool(jnp.all(jnp.isfinite(seq_logProb)))
    print("KERNEL_OK")
</pallas_src>

<mosaic_0001>
module attributes {stable_mosaic.version = 11 : i64} {
  func.func @s2vt_kernel(%arg0: memref<2x8x64xf32, #tpu.memory_space<vmem>>, %arg1: memref<2x5x16xf32, #tpu.memory_space<vmem>>, %arg2: memref<64x384xf32, #tpu.memory_space<vmem>>, %arg3: memref<1x384xf32, #tpu.memory_space<vmem>>, %arg4: memref<128x384xf32, #tpu.memory_space<vmem>>, %arg5: memref<1x384xf32, #tpu.memory_space<vmem>>, %arg6: memref<1x128xf32, #tpu.memory_space<vmem>>, %arg7: memref<16x384xf32, #tpu.memory_space<vmem>>, %arg8: memref<128x384xf32, #tpu.memory_space<vmem>>, %arg9: memref<1x384xf32, #tpu.memory_space<vmem>>, %arg10: memref<128x384xf32, #tpu.memory_space<vmem>>, %arg11: memref<1x384xf32, #tpu.memory_space<vmem>>, %arg12: memref<128x128xf32, #tpu.memory_space<vmem>>, %arg13: memref<1x128xf32, #tpu.memory_space<vmem>>, %arg14: memref<10x128xf32, #tpu.memory_space<vmem>>) attributes {dimension_semantics = [], scalar_prefetch = 0 : i64, scratch_operands = 0 : i64, tpu.core_type = #tpu.core_type<tc>} {
    %c0 = arith.constant 0 : index
    %c0_0 = arith.constant 0 : index
    %c0_1 = arith.constant 0 : index
    %0 = vector.load %arg0[%c0, %c0_0, %c0_1] : memref<2x8x64xf32, #tpu.memory_space<vmem>>, vector<2x8x64xf32>
    %1 = vector.shape_cast %0 : vector<2x8x64xf32> to vector<16x64xf32>
    %c0_2 = arith.constant 0 : index
    %c0_3 = arith.constant 0 : index
    %2 = vector.load %arg2[%c0_2, %c0_3] : memref<64x384xf32, #tpu.memory_space<vmem>>, vector<64x384xf32>
    %cst = arith.constant dense<0.000000e+00> : vector<16x384xf32>
    %3 = tpu.matmul %1, %2, %cst {dimension_numbers = #tpu.dot_dimension_numbers<[1], [0], [0], [1], [0, 0, 1, 1], [], []>} : vector<16x64xf32>, vector<64x384xf32>, vector<16x384xf32> -> vector<16x384xf32>
    %c0_4 = arith.constant 0 : index
    %c0_5 = arith.constant 0 : index
    %4 = vector.load %arg3[%c0_4, %c0_5] : memref<1x384xf32, #tpu.memory_space<vmem>>, vector<1x384xf32>
    %5 = vector.broadcast %4 : vector<1x384xf32> to vector<16x384xf32>
    %6 = arith.addf %3, %5 : vector<16x384xf32>
    %7 = vector.shape_cast %6 : vector<16x384xf32> to vector<2x8x384xf32>
    %c0_6 = arith.constant 0 : index
    %c0_7 = arith.constant 0 : index
    %8 = vector.load %arg4[%c0_6, %c0_7] : memref<128x384xf32, #tpu.memory_space<vmem>>, vector<128x384xf32>
    %c0_8 = arith.constant 0 : index
    %c0_9 = arith.constant 0 : index
    %9 = vector.load %arg5[%c0_8, %c0_9] : memref<1x384xf32, #tpu.memory_space<vmem>>, vector<1x384xf32>
    %cst_10 = arith.constant 0.000000e+00 : f32
    %10 = vector.broadcast %cst_10 : f32 to vector<2x128xf32>
    %cst_11 = arith.constant dense<0.000000e+00> : vector<2x384xf32>
    %11 = tpu.matmul %10, %8, %cst_11 {dimension_numbers = #tpu.dot_dimension_numbers<[1], [0], [0], [1], [0, 0, 1, 1], [], []>} : vector<2x128xf32>, vector<128x384xf32>, vector<2x384xf32> -> vector<2x384xf32>
    %12 = vector.broadcast %9 : vector<1x384xf32> to vector<2x384xf32>
    %13 = arith.addf %11, %12 : vector<2x384xf32>
    %14 = vector.extract_strided_slice %7 {offsets = [0, 0, 0], sizes = [2, 1, 384], strides = [1, 1, 1]} : vector<2x8x384xf32> to vector<2x1x384xf32>
    %15 = vector.shape_cast %14 : vector<2x1x384xf32> to vector<2x384xf32>
    %16 = vector.extract_strided_slice %15 {offsets = [0, 0], sizes = [2, 128], strides = [1, 1]} : vector<2x384xf32> to vector<2x128xf32>
    %17 = vector.extract_strided_slice %13 {offsets = [0, 0], sizes = [2, 128], strides = [1, 1]} : vector<2x384xf32> to vector<2x128xf32>
    %18 = arith.addf %16, %17 : vector<2x128xf32>
    %19 = arith.negf %18 : vector<2x128xf32>
    %20 = math.exp %19 : vector<2x128xf32>
    %cst_12 = arith.constant 1.000000e+00 : f32
    %21 = vector.broadcast %cst_12 : f32 to vector<2x128xf32>
    %22 = arith.addf %21, %20 : vector<2x128xf32>
    %23 = arith.divf %21, %22 : vector<2x128xf32>
    %24 = vector.extract_strided_slice %15 {offsets = [0, 128], sizes = [2, 128], strides = [1, 1]} : vector<2x384xf32> to vector<2x128xf32>
    %25 = vector.extract_strided_slice %13 {offsets = [0, 128], sizes = [2, 128], strides = [1, 1]} : vector<2x384xf32> to vector<2x128xf32>
    %26 = arith.addf %24, %25 : vector<2x128xf32>
    %27 = arith.negf %26 : vector<2x128xf32>
    %28 = math.exp %27 : vector<2x128xf32>
    %cst_13 = arith.constant 1.000000e+00 : f32
    %29 = vector.broadcast %cst_13 : f32 to vector<2x128xf32>
    %30 = arith.addf %29, %28 : vector<2x128xf32>
    %31 = arith.divf %29, %30 : vector<2x128xf32>
    %32 = vector.extract_strided_slice %15 {offsets = [0, 256], sizes = [2, 128], strides = [1, 1]} : vector<2x384xf32> to vector<2x128xf32>
    %33 = vector.extract_strided_slice %13 {offsets = [0, 256], sizes = [2, 128], strides = [1, 1]} : vector<2x384xf32> to vector<2x128xf32>
    %34 = arith.mulf %23, %33 : vector<2x128xf32>
    %35 = arith.addf %32, %34 : vector<2x128xf32>
    %36 = math.tanh %35 : vector<2x128xf32>
    %cst_14 = arith.constant 1.000000e+00 : f32
    %37 = vector.broadcast %cst_14 : f32 to vector<2x128xf32>
    %38 = arith.subf %37, %31 : vector<2x128xf32>
    %39 = arith.mulf %38, %36 : vector<2x128xf32>
    %40 = arith.mulf %31, %10 : vector<2x128xf32>
    %41 = arith.addf %39, %40 : vector<2x128xf32>
    %cst_15 = arith.constant dense<0.000000e+00> : vector<2x384xf32>
    %42 = tpu.matmul %41, %8, %cst_15 {dimension_numbers = #tpu.dot_dimension_numbers<[1], [0], [0], [1], [0, 0, 1, 1], [], []>} : vector<2x128xf32>, vector<128x384xf32>, vector<2x384xf32> -> vector<2x384xf32>
    %43 = vector.broadcast %9 : vector<1x384xf32> to vector<2x384xf32>
    %44 = arith.addf %42, %43 : vector<2x384xf32>
    %45 = vector.extract_strided_slice %7 {offsets = [0, 1, 0], sizes = [2, 1, 384], strides = [1, 1, 1]} : vector<2x8x384xf32> to vector<2x1x384xf32>
    %46 = vector.shape_cast %45 : vector<2x1x384xf32> to vector<2x384xf32>
    %47 = vector.extract_strided_slice %46 {offsets = [0, 0], sizes = [2, 128], strides = [1, 1]} : vector<2x384xf32> to vector<2x128xf32>
    %48 = vector.extract_strided_slice %44 {offsets = [0, 0], sizes = [2, 128], strides = [1, 1]} : vector<2x384xf32> to vector<2x128xf32>
    %49 = arith.addf %47, %48 : vector<2x128xf32>
    %50 = arith.negf %49 : vector<2x128xf32>
    %51 = math.exp %50 : vector<2x128xf32>
    %cst_16 = arith.constant 1.000000e+00 : f32
    %52 = vector.broadcast %cst_16 : f32 to vector<2x128xf32>
    %53 = arith.addf %52, %51 : vector<2x128xf32>
    %54 = arith.divf %52, %53 : vector<2x128xf32>
    %55 = vector.extract_strided_slice %46 {offsets = [0, 128], sizes = [2, 128], strides = [1, 1]} : vector<2x384xf32> to vector<2x128xf32>
    %56 = vector.extract_strided_slice %44 {offsets = [0, 128], sizes = [2, 128], strides = [1, 1]} : vector<2x384xf32> to vector<2x128xf32>
    %57 = arith.addf %55, %56 : vector<2x128xf32>
    %58 = arith.negf %57 : vector<2x128xf32>
    %59 = math.exp %58 : vector<2x128xf32>
    %cst_17 = arith.constant 1.000000e+00 : f32
    %60 = vector.broadcast %cst_17 : f32 to vector<2x128xf32>
    %61 = arith.addf %60, %59 : vector<2x128xf32>
    %62 = arith.divf %60, %61 : vector<2x128xf32>
    %63 = vector.extract_strided_slice %46 {offsets = [0, 256], sizes = [2, 128], strides = [1, 1]} : vector<2x384xf32> to vector<2x128xf32>
    %64 = vector.extract_strided_slice %44 {offsets = [0, 256], sizes = [2, 128], strides = [1, 1]} : vector<2x384xf32> to vector<2x128xf32>
    %65 = arith.mulf %54, %64 : vector<2x128xf32>
    %66 = arith.addf %63, %65 : vector<2x128xf32>
    %67 = math.tanh %66 : vector<2x128xf32>
    %cst_18 = arith.constant 1.000000e+00 : f32
    %68 = vector.broadcast %cst_18 : f32 to vector<2x128xf32>
    %69 = arith.subf %68, %62 : vector<2x128xf32>
    %70 = arith.mulf %69, %67 : vector<2x128xf32>
    %71 = arith.mulf %62, %41 : vector<2x128xf32>
    %72 = arith.addf %70, %71 : vector<2x128xf32>
    %cst_19 = arith.constant dense<0.000000e+00> : vector<2x384xf32>
    %73 = tpu.matmul %72, %8, %cst_19 {dimension_numbers = #tpu.dot_dimension_numbers<[1], [0], [0], [1], [0, 0, 1, 1], [], []>} : vector<2x128xf32>, vector<128x384xf32>, vector<2x384xf32> -> vector<2x384xf32>
    %74 = vector.broadcast %9 : vector<1x384xf32> to vector<2x384xf32>
    %75 = arith.addf %73, %74 : vector<2x384xf32>
    %76 = vector.extract_strided_slice %7 {offsets = [0, 2, 0], sizes = [2, 1, 384], strides = [1, 1, 1]} : vector<2x8x384xf32> to vector<2x1x384xf32>
    %77 = vector.shape_cast %76 : vector<2x1x384xf32> to vector<2x384xf32>
    %78 = vector.extract_strided_slice %77 {offsets = [0, 0], sizes = [2, 128], strides = [1, 1]} : vector<2x384xf32> to vector<2x128xf32>
    %79 = vector.extract_strided_slice %75 {offsets = [0, 0], sizes = [2, 128], strides = [1, 1]} : vector<2x384xf32> to vector<2x128xf32>
    %80 = arith.addf %78, %79 : vector<2x128xf32>
    %81 = arith.negf %80 : vector<2x128xf32>
    %82 = math.exp %81 : vector<2x128xf32>
    %cst_20 = arith.constant 1.000000e+00 : f32
    %83 = vector.broadcast %cst_20 : f32 to vector<2x128xf32>
    %84 = arith.addf %83, %82 : vector<2x128xf32>
    %85 = arith.divf %83, %84 : vector<2x128xf32>
    %86 = vector.extract_strided_slice %77 {offsets = [0, 128], sizes = [2, 128], strides = [1, 1]} : vector<2x384xf32> to vector<2x128xf32>
    %87 = vector.extract_strided_slice %75 {offsets = [0, 128], sizes = [2, 128], strides = [1, 1]} : vector<2x384xf32> to vector<2x128xf32>
    %88 = arith.addf %86, %87 : vector<2x128xf32>
    %89 = arith.negf %88 : vector<2x128xf32>
    %90 = math.exp %89 : vector<2x128xf32>
    %cst_21 = arith.constant 1.000000e+00 : f32
    %91 = vector.broadcast %cst_21 : f32 to vector<2x128xf32>
    %92 = arith.addf %91, %90 : vector<2x128xf32>
    %93 = arith.divf %91, %92 : vector<2x128xf32>
    %94 = vector.extract_strided_slice %77 {offsets = [0, 256], sizes = [2, 128], strides = [1, 1]} : vector<2x384xf32> to vector<2x128xf32>
    %95 = vector.extract_strided_slice %75 {offsets = [0, 256], sizes = [2, 128], strides = [1, 1]} : vector<2x384xf32> to vector<2x128xf32>
    %96 = arith.mulf %85, %95 : vector<2x128xf32>
    %97 = arith.addf %94, %96 : vector<2x128xf32>
    %98 = math.tanh %97 : vector<2x128xf32>
    %cst_22 = arith.constant 1.000000e+00 : f32
    %99 = vector.broadcast %cst_22 : f32 to vector<2x128xf32>
    %100 = arith.subf %99, %93 : vector<2x128xf32>
    %101 = arith.mulf %100, %98 : vector<2x128xf32>
    %102 = arith.mulf %93, %72 : vector<2x128xf32>
    %103 = arith.addf %101, %102 : vector<2x128xf32>
    %cst_23 = arith.constant dense<0.000000e+00> : vector<2x384xf32>
    %104 = tpu.matmul %103, %8, %cst_23 {dimension_numbers = #tpu.dot_dimension_numbers<[1], [0], [0], [1], [0, 0, 1, 1], [], []>} : vector<2x128xf32>, vector<128x384xf32>, vector<2x384xf32> -> vector<2x384xf32>
    %105 = vector.broadcast %9 : vector<1x384xf32> to vector<2x384xf32>
    %106 = arith.addf %104, %105 : vector<2x384xf32>
    %107 = vector.extract_strided_slice %7 {offsets = [0, 3, 0], sizes = [2, 1, 384], strides = [1, 1, 1]} : vector<2x8x384xf32> to vector<2x1x384xf32>
    %108 = vector.shape_cast %107 : vector<2x1x384xf32> to vector<2x384xf32>
    %109 = vector.extract_strided_slice %108 {offsets = [0, 0], sizes = [2, 128], strides = [1, 1]} : vector<2x384xf32> to vector<2x128xf32>
    %110 = vector.extract_strided_slice %106 {offsets = [0, 0], sizes = [2, 128], strides = [1, 1]} : vector<2x384xf32> to vector<2x128xf32>
    %111 = arith.addf %109, %110 : vector<2x128xf32>
    %112 = arith.negf %111 : vector<2x128xf32>
    %113 = math.exp %112 : vector<2x128xf32>
    %cst_24 = arith.constant 1.000000e+00 : f32
    %114 = vector.broadcast %cst_24 : f32 to vector<2x128xf32>
    %115 = arith.addf %114, %113 : vector<2x128xf32>
    %116 = arith.divf %114, %115 : vector<2x128xf32>
    %117 = vector.extract_strided_slice %108 {offsets = [0, 128], sizes = [2, 128], strides = [1, 1]} : vector<2x384xf32> to vector<2x128xf32>
    %118 = vector.extract_strided_slice %106 {offsets = [0, 128], sizes = [2, 128], strides = [1, 1]} : vector<2x384xf32> to vector<2x128xf32>
    %119 = arith.addf %117, %118 : vector<2x128xf32>
    %120 = arith.negf %119 : vector<2x128xf32>
    %121 = math.exp %120 : vector<2x128xf32>
    %cst_25 = arith.constant 1.000000e+00 : f32
    %122 = vector.broadcast %cst_25 : f32 to vector<2x128xf32>
    %123 = arith.addf %122, %121 : vector<2x128xf32>
    %124 = arith.divf %122, %123 : vector<2x128xf32>
    %125 = vector.extract_strided_slice %108 {offsets = [0, 256], sizes = [2, 128], strides = [1, 1]} : vector<2x384xf32> to vector<2x128xf32>
    %126 = vector.extract_strided_slice %106 {offsets = [0, 256], sizes = [2, 128], strides = [1, 1]} : vector<2x384xf32> to vector<2x128xf32>
    %127 = arith.mulf %116, %126 : vector<2x128xf32>
    %128 = arith.addf %125, %127 : vector<2x128xf32>
    %129 = math.tanh %128 : vector<2x128xf32>
    %cst_26 = arith.constant 1.000000e+00 : f32
    %130 = vector.broadcast %cst_26 : f32 to vector<2x128xf32>
    %131 = arith.subf %130, %124 : vector<2x128xf32>
    %132 = arith.mulf %131, %129 : vector<2x128xf32>
    %133 = arith.mulf %124, %103 : vector<2x128xf32>
    %134 = arith.addf %132, %133 : vector<2x128xf32>
    %cst_27 = arith.constant dense<0.000000e+00> : vector<2x384xf32>
    %135 = tpu.matmul %134, %8, %cst_27 {dimension_numbers = #tpu.dot_dimension_numbers<[1], [0], [0], [1], [0, 0, 1, 1], [], []>} : vector<2x128xf32>, vector<128x384xf32>, vector<2x384xf32> -> vector<2x384xf32>
    %136 = vector.broadcast %9 : vector<1x384xf32> to vector<2x384xf32>
    %137 = arith.addf %135, %136 : vector<2x384xf32>
    %138 = vector.extract_strided_slice %7 {offsets = [0, 4, 0], sizes = [2, 1, 384], strides = [1, 1, 1]} : vector<2x8x384xf32> to vector<2x1x384xf32>
    %139 = vector.shape_cast %138 : vector<2x1x384xf32> to vector<2x384xf32>
    %140 = vector.extract_strided_slice %139 {offsets = [0, 0], sizes = [2, 128], strides = [1, 1]} : vector<2x384xf32> to vector<2x128xf32>
    %141 = vector.extract_strided_slice %137 {offsets = [0, 0], sizes = [2, 128], strides = [1, 1]} : vector<2x384xf32> to vector<2x128xf32>
    %142 = arith.addf %140, %141 : vector<2x128xf32>
    %143 = arith.negf %142 : vector<2x128xf32>
    %144 = math.exp %143 : vector<2x128xf32>
    %cst_28 = arith.constant 1.000000e+00 : f32
    %145 = vector.broadcast %cst_28 : f32 to vector<2x128xf32>
    %146 = arith.addf %145, %144 : vector<2x128xf32>
    %147 = arith.divf %145, %146 : vector<2x128xf32>
    %148 = vector.extract_strided_slice %139 {offsets = [0, 128], sizes = [2, 128], strides = [1, 1]} : vector<2x384xf32> to vector<2x128xf32>
    %149 = vector.extract_strided_slice %137 {offsets = [0, 128], sizes = [2, 128], strides = [1, 1]} : vector<2x384xf32> to vector<2x128xf32>
    %150 = arith.addf %148, %149 : vector<2x128xf32>
    %151 = arith.negf %150 : vector<2x128xf32>
    %152 = math.exp %151 : vector<2x128xf32>
    %cst_29 = arith.constant 1.000000e+00 : f32
    %153 = vector.broadcast %cst_29 : f32 to vector<2x128xf32>
    %154 = arith.addf %153, %152 : vector<2x128xf32>
    %155 = arith.divf %153, %154 : vector<2x128xf32>
    %156 = vector.extract_strided_slice %139 {offsets = [0, 256], sizes = [2, 128], strides = [1, 1]} : vector<2x384xf32> to vector<2x128xf32>
    %157 = vector.extract_strided_slice %137 {offsets = [0, 256], sizes = [2, 128], strides = [1, 1]} : vector<2x384xf32> to vector<2x128xf32>
    %158 = arith.mulf %147, %157 : vector<2x128xf32>
    %159 = arith.addf %156, %158 : vector<2x128xf32>
    %160 = math.tanh %159 : vector<2x128xf32>
    %cst_30 = arith.constant 1.000000e+00 : f32
    %161 = vector.broadcast %cst_30 : f32 to vector<2x128xf32>
    %162 = arith.subf %161, %155 : vector<2x128xf32>
    %163 = arith.mulf %162, %160 : vector<2x128xf32>
    %164 = arith.mulf %155, %134 : vector<2x128xf32>
    %165 = arith.addf %163, %164 : vector<2x128xf32>
    %cst_31 = arith.constant dense<0.000000e+00> : vector<2x384xf32>
    %166 = tpu.matmul %165, %8, %cst_31 {dimension_numbers = #tpu.dot_dimension_numbers<[1], [0], [0], [1], [0, 0, 1, 1], [], []>} : vector<2x128xf32>, vector<128x384xf32>, vector<2x384xf32> -> vector<2x384xf32>
    %167 = vector.broadcast %9 : vector<1x384xf32> to vector<2x384xf32>
    %168 = arith.addf %166, %167 : vector<2x384xf32>
    %169 = vector.extract_strided_slice %7 {offsets = [0, 5, 0], sizes = [2, 1, 384], strides = [1, 1, 1]} : vector<2x8x384xf32> to vector<2x1x384xf32>
    %170 = vector.shape_cast %169 : vector<2x1x384xf32> to vector<2x384xf32>
    %171 = vector.extract_strided_slice %170 {offsets = [0, 0], sizes = [2, 128], strides = [1, 1]} : vector<2x384xf32> to vector<2x128xf32>
    %172 = vector.extract_strided_slice %168 {offsets = [0, 0], sizes = [2, 128], strides = [1, 1]} : vector<2x384xf32> to vector<2x128xf32>
    %173 = arith.addf %171, %172 : vector<2x128xf32>
    %174 = arith.negf %173 : vector<2x128xf32>
    %175 = math.exp %174 : vector<2x128xf32>
    %cst_32 = arith.constant 1.000000e+00 : f32
    %176 = vector.broadcast %cst_32 : f32 to vector<2x128xf32>
    %177 = arith.addf %176, %175 : vector<2x128xf32>
    %178 = arith.divf %176, %177 : vector<2x128xf32>
    %179 = vector.extract_strided_slice %170 {offsets = [0, 128], sizes = [2, 128], strides = [1, 1]} : vector<2x384xf32> to vector<2x128xf32>
    %180 = vector.extract_strided_slice %168 {offsets = [0, 128], sizes = [2, 128], strides = [1, 1]} : vector<2x384xf32> to vector<2x128xf32>
    %181 = arith.addf %179, %180 : vector<2x128xf32>
    %182 = arith.negf %181 : vector<2x128xf32>
    %183 = math.exp %182 : vector<2x128xf32>
    %cst_33 = arith.constant 1.000000e+00 : f32
    %184 = vector.broadcast %cst_33 : f32 to vector<2x128xf32>
    %185 = arith.addf %184, %183 : vector<2x128xf32>
    %186 = arith.divf %184, %185 : vector<2x128xf32>
    %187 = vector.extract_strided_slice %170 {offsets = [0, 256], sizes = [2, 128], strides = [1, 1]} : vector<2x384xf32> to vector<2x128xf32>
    %188 = vector.extract_strided_slice %168 {offsets = [0, 256], sizes = [2, 128], strides = [1, 1]} : vector<2x384xf32> to vector<2x128xf32>
    %189 = arith.mulf %178, %188 : vector<2x128xf32>
    %190 = arith.addf %187, %189 : vector<2x128xf32>
    %191 = math.tanh %190 : vector<2x128xf32>
    %cst_34 = arith.constant 1.000000e+00 : f32
    %192 = vector.broadcast %cst_34 : f32 to vector<2x128xf32>
    %193 = arith.subf %192, %186 : vector<2x128xf32>
    %194 = arith.mulf %193, %191 : vector<2x128xf32>
    %195 = arith.mulf %186, %165 : vector<2x128xf32>
    %196 = arith.addf %194, %195 : vector<2x128xf32>
    %cst_35 = arith.constant dense<0.000000e+00> : vector<2x384xf32>
    %197 = tpu.matmul %196, %8, %cst_35 {dimension_numbers = #tpu.dot_dimension_numbers<[1], [0], [0], [1], [0, 0, 1, 1], [], []>} : vector<2x128xf32>, vector<128x384xf32>, vector<2x384xf32> -> vector<2x384xf32>
    %198 = vector.broadcast %9 : vector<1x384xf32> to vector<2x384xf32>
    %199 = arith.addf %197, %198 : vector<2x384xf32>
    %200 = vector.extract_strided_slice %7 {offsets = [0, 6, 0], sizes = [2, 1, 384], strides = [1, 1, 1]} : vector<2x8x384xf32> to vector<2x1x384xf32>
    %201 = vector.shape_cast %200 : vector<2x1x384xf32> to vector<2x384xf32>
    %202 = vector.extract_strided_slice %201 {offsets = [0, 0], sizes = [2, 128], strides = [1, 1]} : vector<2x384xf32> to vector<2x128xf32>
    %203 = vector.extract_strided_slice %199 {offsets = [0, 0], sizes = [2, 128], strides = [1, 1]} : vector<2x384xf32> to vector<2x128xf32>
    %204 = arith.addf %202, %203 : vector<2x128xf32>
    %205 = arith.negf %204 : vector<2x128xf32>
    %206 = math.exp %205 : vector<2x128xf32>
    %cst_36 = arith.constant 1.000000e+00 : f32
    %207 = vector.broadcast %cst_36 : f32 to vector<2x128xf32>
    %208 = arith.addf %207, %206 : vector<2x128xf32>
    %209 = arith.divf %207, %208 : vector<2x128xf32>
    %210 = vector.extract_strided_slice %201 {offsets = [0, 128], sizes = [2, 128], strides = [1, 1]} : vector<2x384xf32> to vector<2x128xf32>
    %211 = vector.extract_strided_slice %199 {offsets = [0, 128], sizes = [2, 128], strides = [1, 1]} : vector<2x384xf32> to vector<2x128xf32>
    %212 = arith.addf %210, %211 : vector<2x128xf32>
    %213 = arith.negf %212 : vector<2x128xf32>
    %214 = math.exp %213 : vector<2x128xf32>
    %cst_37 = arith.constant 1.000000e+00 : f32
    %215 = vector.broadcast %cst_37 : f32 to vector<2x128xf32>
    %216 = arith.addf %215, %214 : vector<2x128xf32>
    %217 = arith.divf %215, %216 : vector<2x128xf32>
    %218 = vector.extract_strided_slice %201 {offsets = [0, 256], sizes = [2, 128], strides = [1, 1]} : vector<2x384xf32> to vector<2x128xf32>
    %219 = vector.extract_strided_slice %199 {offsets = [0, 256], sizes = [2, 128], strides = [1, 1]} : vector<2x384xf32> to vector<2x128xf32>
    %220 = arith.mulf %209, %219 : vector<2x128xf32>
    %221 = arith.addf %218, %220 : vector<2x128xf32>
    %222 = math.tanh %221 : vector<2x128xf32>
    %cst_38 = arith.constant 1.000000e+00 : f32
    %223 = vector.broadcast %cst_38 : f32 to vector<2x128xf32>
    %224 = arith.subf %223, %217 : vector<2x128xf32>
    %225 = arith.mulf %224, %222 : vector<2x128xf32>
    %226 = arith.mulf %217, %196 : vector<2x128xf32>
    %227 = arith.addf %225, %226 : vector<2x128xf32>
    %cst_39 = arith.constant dense<0.000000e+00> : vector<2x384xf32>
    %228 = tpu.matmul %227, %8, %cst_39 {dimension_numbers = #tpu.dot_dimension_numbers<[1], [0], [0], [1], [0, 0, 1, 1], [], []>} : vector<2x128xf32>, vector<128x384xf32>, vector<2x384xf32> -> vector<2x384xf32>
    %229 = vector.broadcast %9 : vector<1x384xf32> to vector<2x384xf32>
    %230 = arith.addf %228, %229 : vector<2x384xf32>
    %231 = vector.extract_strided_slice %7 {offsets = [0, 7, 0], sizes = [2, 1, 384], strides = [1, 1, 1]} : vector<2x8x384xf32> to vector<2x1x384xf32>
    %232 = vector.shape_cast %231 : vector<2x1x384xf32> to vector<2x384xf32>
    %233 = vector.extract_strided_slice %232 {offsets = [0, 0], sizes = [2, 128], strides = [1, 1]} : vector<2x384xf32> to vector<2x128xf32>
    %234 = vector.extract_strided_slice %230 {offsets = [0, 0], sizes = [2, 128], strides = [1, 1]} : vector<2x384xf32> to vector<2x128xf32>
    %235 = arith.addf %233, %234 : vector<2x128xf32>
    %236 = arith.negf %235 : vector<2x128xf32>
    %237 = math.exp %236 : vector<2x128xf32>
    %cst_40 = arith.constant 1.000000e+00 : f32
    %238 = vector.broadcast %cst_40 : f32 to vector<2x128xf32>
    %239 = arith.addf %238, %237 : vector<2x128xf32>
    %240 = arith.divf %238, %239 : vector<2x128xf32>
    %241 = vector.extract_strided_slice %232 {offsets = [0, 128], sizes = [2, 128], strides = [1, 1]} : vector<2x384xf32> to vector<2x128xf32>
    %242 = vector.extract_strided_slice %230 {offsets = [0, 128], sizes = [2, 128], strides = [1, 1]} : vector<2x384xf32> to vector<2x128xf32>
    %243 = arith.addf %241, %242 : vector<2x128xf32>
    %244 = arith.negf %243 : vector<2x128xf32>
    %245 = math.exp %244 : vector<2x128xf32>
    %cst_41 = arith.constant 1.000000e+00 : f32
    %246 = vector.broadcast %cst_41 : f32 to vector<2x128xf32>
    %247 = arith.addf %246, %245 : vector<2x128xf32>
    %248 = arith.divf %246, %247 : vector<2x128xf32>
    %249 = vector.extract_strided_slice %232 {offsets = [0, 256], sizes = [2, 128], strides = [1, 1]} : vector<2x384xf32> to vector<2x128xf32>
    %250 = vector.extract_strided_slice %230 {offsets = [0, 256], sizes = [2, 128], strides = [1, 1]} : vector<2x384xf32> to vector<2x128xf32>
    %251 = arith.mulf %240, %250 : vector<2x128xf32>
    %252 = arith.addf %249, %251 : vector<2x128xf32>
    %253 = math.tanh %252 : vector<2x128xf32>
    %cst_42 = arith.constant 1.000000e+00 : f32
    %254 = vector.broadcast %cst_42 : f32 to vector<2x128xf32>
    %255 = arith.subf %254, %248 : vector<2x128xf32>
    %256 = arith.mulf %255, %253 : vector<2x128xf32>
    %257 = arith.mulf %248, %227 : vector<2x128xf32>
    %258 = arith.addf %256, %257 : vector<2x128xf32>
    %259 = vector.shape_cast %41 : vector<2x128xf32> to vector<2x1x128xf32>
    %260 = vector.shape_cast %72 : vector<2x128xf32> to vector<2x1x128xf32>
    %261 = vector.shape_cast %103 : vector<2x128xf32> to vector<2x1x128xf32>
    %262 = vector.shape_cast %134 : vector<2x128xf32> to vector<2x1x128xf32>
    %263 = vector.shape_cast %165 : vector<2x128xf32> to vector<2x1x128xf32>
    %264 = vector.shape_cast %196 : vector<2x128xf32> to vector<2x1x128xf32>
    %265 = vector.shape_cast %227 : vector<2x128xf32> to vector<2x1x128xf32>
    %266 = vector.shape_cast %258 : vector<2x128xf32> to vector<2x1x128xf32>
    %267 = tpu.concatenate %259, %260, %261, %262, %263, %264, %265, %266 in 1 : vector<2x1x128xf32>, vector<2x1x128xf32>, vector<2x1x128xf32>, vector<2x1x128xf32>, vector<2x1x128xf32>, vector<2x1x128xf32>, vector<2x1x128xf32>, vector<2x1x128xf32> -> vector<2x8x128xf32>
    %c0_43 = arith.constant 0 : index
    %c0_44 = arith.constant 0 : index
    %268 = vector.load %arg6[%c0_43, %c0_44] : memref<1x128xf32, #tpu.memory_space<vmem>>, vector<1x128xf32>
    %269 = vector.shape_cast %268 : vector<1x128xf32> to vector<1x1x128xf32>
    %270 = vector.broadcast %269 : vector<1x1x128xf32> to vector<2x8x128xf32>
    %271 = arith.mulf %267, %270 : vector<2x8x128xf32>
    %cst_45 = arith.constant dense<0.000000e+00> : vector<2x8xf32>
    %272 = vector.multi_reduction <add>, %271, %cst_45 [2] : vector<2x8x128xf32> to vector<2x8xf32>
    %cst_46 = arith.constant dense<0xFF800000> : vector<2xf32>
    %273 = vector.multi_reduction <maximumf>, %272, %cst_46 [1] : vector<2x8xf32> to vector<2xf32>
    %274 = vector.shape_cast %273 : vector<2xf32> to vector<2x1xf32>
    %275 = vector.broadcast %274 : vector<2x1xf32> to vector<2x8xf32>
    %276 = arith.subf %272, %275 : vector<2x8xf32>
    %277 = math.exp %276 : vector<2x8xf32>
    %cst_47 = arith.constant dense<0.000000e+00> : vector<2xf32>
    %278 = vector.multi_reduction <add>, %277, %cst_47 [1] : vector<2x8xf32> to vector<2xf32>
    %279 = vector.shape_cast %278 : vector<2xf32> to vector<2x1xf32>
    %280 = tpu.reciprocal %279 : vector<2x1xf32> -> vector<2x1xf32>
    %281 = vector.broadcast %280 : vector<2x1xf32> to vector<2x8xf32>
    %282 = arith.mulf %277, %281 : vector<2x8xf32>
    %283 = vector.shape_cast %282 : vector<2x8xf32> to vector<2x8x1xf32>
    %284 = vector.broadcast %283 : vector<2x8x1xf32> to vector<2x8x128xf32>
    %285 = arith.mulf %284, %267 : vector<2x8x128xf32>
    %cst_48 = arith.constant dense<0.000000e+00> : vector<2x128xf32>
    %286 = vector.multi_reduction <add>, %285, %cst_48 [1] : vector<2x8x128xf32> to vector<2x128xf32>
    %c0_49 = arith.constant 0 : index
    %c0_50 = arith.constant 0 : index
    %c0_51 = arith.constant 0 : index
    %287 = vector.load %arg1[%c0_49, %c0_50, %c0_51] : memref<2x5x16xf32, #tpu.memory_space<vmem>>, vector<2x5x16xf32>
    %288 = vector.shape_cast %287 : vector<2x5x16xf32> to vector<10x16xf32>
    %c0_52 = arith.constant 0 : index
    %c0_53 = arith.constant 0 : index
    %289 = vector.load %arg7[%c0_52, %c0_53] : memref<16x384xf32, #tpu.memory_space<vmem>>, vector<16x384xf32>
    %cst_54 = arith.constant dense<0.000000e+00> : vector<10x384xf32>
    %290 = tpu.matmul %288, %289, %cst_54 {dimension_numbers = #tpu.dot_dimension_numbers<[1], [0], [0], [1], [0, 0, 1, 1], [], []>} : vector<10x16xf32>, vector<16x384xf32>, vector<10x384xf32> -> vector<10x384xf32>
    %291 = vector.shape_cast %290 : vector<10x384xf32> to vector<2x5x384xf32>
    %c0_55 = arith.constant 0 : index
    %c0_56 = arith.constant 0 : index
    %292 = vector.load %arg8[%c0_55, %c0_56] : memref<128x384xf32, #tpu.memory_space<vmem>>, vector<128x384xf32>
    %cst_57 = arith.constant dense<0.000000e+00> : vector<2x384xf32>
    %293 = tpu.matmul %286, %292, %cst_57 {dimension_numbers = #tpu.dot_dimension_numbers<[1], [0], [0], [1], [0, 0, 1, 1], [], []>} : vector<2x128xf32>, vector<128x384xf32>, vector<2x384xf32> -> vector<2x384xf32>
    %c0_58 = arith.constant 0 : index
    %c0_59 = arith.constant 0 : index
    %294 = vector.load %arg9[%c0_58, %c0_59] : memref<1x384xf32, #tpu.memory_space<vmem>>, vector<1x384xf32>
    %295 = vector.broadcast %294 : vector<1x384xf32> to vector<2x384xf32>
    %296 = arith.addf %293, %295 : vector<2x384xf32>
    %c0_60 = arith.constant 0 : index
    %c0_61 = arith.constant 0 : index
    %297 = vector.load %arg10[%c0_60, %c0_61] : memref<128x384xf32, #tpu.memory_space<vmem>>, vector<128x384xf32>
    %c0_62 = arith.constant 0 : index
    %c0_63 = arith.constant 0 : index
    %298 = vector.load %arg11[%c0_62, %c0_63] : memref<1x384xf32, #tpu.memory_space<vmem>>, vector<1x384xf32>
    %cst_64 = arith.constant 0.000000e+00 : f32
    %299 = vector.broadcast %cst_64 : f32 to vector<2x128xf32>
    %cst_65 = arith.constant dense<0.000000e+00> : vector<2x384xf32>
    %300 = tpu.matmul %299, %297, %cst_65 {dimension_numbers = #tpu.dot_dimension_numbers<[1], [0], [0], [1], [0, 0, 1, 1], [], []>} : vector<2x128xf32>, vector<128x384xf32>, vector<2x384xf32> -> vector<2x384xf32>
    %301 = vector.broadcast %298 : vector<1x384xf32> to vector<2x384xf32>
    %302 = arith.addf %300, %301 : vector<2x384xf32>
    %303 = vector.extract_strided_slice %291 {offsets = [0, 0, 0], sizes = [2, 1, 384], strides = [1, 1, 1]} : vector<2x5x384xf32> to vector<2x1x384xf32>
    %304 = vector.shape_cast %303 : vector<2x1x384xf32> to vector<2x384xf32>
    %305 = arith.addf %304, %296 : vector<2x384xf32>
    %306 = vector.extract_strided_slice %305 {offsets = [0, 0], sizes = [2, 128], strides = [1, 1]} : vector<2x384xf32> to vector<2x128xf32>
    %307 = vector.extract_strided_slice %302 {offsets = [0, 0], sizes = [2, 128], strides = [1, 1]} : vector<2x384xf32> to vector<2x128xf32>
    %308 = arith.addf %306, %307 : vector<2x128xf32>
    %309 = arith.negf %308 : vector<2x128xf32>
    %310 = math.exp %309 : vector<2x128xf32>
    %cst_66 = arith.constant 1.000000e+00 : f32
    %311 = vector.broadcast %cst_66 : f32 to vector<2x128xf32>
    %312 = arith.addf %311, %310 : vector<2x128xf32>
    %313 = arith.divf %311, %312 : vector<2x128xf32>
    %314 = vector.extract_strided_slice %305 {offsets = [0, 128], sizes = [2, 128], strides = [1, 1]} : vector<2x384xf32> to vector<2x128xf32>
    %315 = vector.extract_strided_slice %302 {offsets = [0, 128], sizes = [2, 128], strides = [1, 1]} : vector<2x384xf32> to vector<2x128xf32>
    %316 = arith.addf %314, %315 : vector<2x128xf32>
    %317 = arith.negf %316 : vector<2x128xf32>
    %318 = math.exp %317 : vector<2x128xf32>
    %cst_67 = arith.constant 1.000000e+00 : f32
    %319 = vector.broadcast %cst_67 : f32 to vector<2x128xf32>
    %320 = arith.addf %319, %318 : vector<2x128xf32>
    %321 = arith.divf %319, %320 : vector<2x128xf32>
    %322 = vector.extract_strided_slice %305 {offsets = [0, 256], sizes = [2, 128], strides = [1, 1]} : vector<2x384xf32> to vector<2x128xf32>
    %323 = vector.extract_strided_slice %302 {offsets = [0, 256], sizes = [2, 128], strides = [1, 1]} : vector<2x384xf32> to vector<2x128xf32>
    %324 = arith.mulf %313, %323 : vector<2x128xf32>
    %325 = arith.addf %322, %324 : vector<2x128xf32>
    %326 = math.tanh %325 : vector<2x128xf32>
    %cst_68 = arith.constant 1.000000e+00 : f32
    %327 = vector.broadcast %cst_68 : f32 to vector<2x128xf32>
    %328 = arith.subf %327, %321 : vector<2x128xf32>
    %329 = arith.mulf %328, %326 : vector<2x128xf32>
    %330 = arith.mulf %321, %299 : vector<2x128xf32>
    %331 = arith.addf %329, %330 : vector<2x128xf32>
    %cst_69 = arith.constant dense<0.000000e+00> : vector<2x384xf32>
    %332 = tpu.matmul %331, %297, %cst_69 {dimension_numbers = #tpu.dot_dimension_numbers<[1], [0], [0], [1], [0, 0, 1, 1], [], []>} : vector<2x128xf32>, vector<128x384xf32>, vector<2x384xf32> -> vector<2x384xf32>
    %333 = vector.broadcast %298 : vector<1x384xf32> to vector<2x384xf32>
    %334 = arith.addf %332, %333 : vector<2x384xf32>
    %335 = vector.extract_strided_slice %291 {offsets = [0, 1, 0], sizes = [2, 1, 384], strides = [1, 1, 1]} : vector<2x5x384xf32> to vector<2x1x384xf32>
    %336 = vector.shape_cast %335 : vector<2x1x384xf32> to vector<2x384xf32>
    %337 = arith.addf %336, %296 : vector<2x384xf32>
    %338 = vector.extract_strided_slice %337 {offsets = [0, 0], sizes = [2, 128], strides = [1, 1]} : vector<2x384xf32> to vector<2x128xf32>
    %339 = vector.extract_strided_slice %334 {offsets = [0, 0], sizes = [2, 128], strides = [1, 1]} : vector<2x384xf32> to vector<2x128xf32>
    %340 = arith.addf %338, %339 : vector<2x128xf32>
    %341 = arith.negf %340 : vector<2x128xf32>
    %342 = math.exp %341 : vector<2x128xf32>
    %cst_70 = arith.constant 1.000000e+00 : f32
    %343 = vector.broadcast %cst_70 : f32 to vector<2x128xf32>
    %344 = arith.addf %343, %342 : vector<2x128xf32>
    %345 = arith.divf %343, %344 : vector<2x128xf32>
    %346 = vector.extract_strided_slice %337 {offsets = [0, 128], sizes = [2, 128], strides = [1, 1]} : vector<2x384xf32> to vector<2x128xf32>
    %347 = vector.extract_strided_slice %334 {offsets = [0, 128], sizes = [2, 128], strides = [1, 1]} : vector<2x384xf32> to vector<2x128xf32>
    %348 = arith.addf %346, %347 : vector<2x128xf32>
    %349 = arith.negf %348 : vector<2x128xf32>
    %350 = math.exp %349 : vector<2x128xf32>
    %cst_71 = arith.constant 1.000000e+00 : f32
    %351 = vector.broadcast %cst_71 : f32 to vector<2x128xf32>
    %352 = arith.addf %351, %350 : vector<2x128xf32>
    %353 = arith.divf %351, %352 : vector<2x128xf32>
    %354 = vector.extract_strided_slice %337 {offsets = [0, 256], sizes = [2, 128], strides = [1, 1]} : vector<2x384xf32> to vector<2x128xf32>
    %355 = vector.extract_strided_slice %334 {offsets = [0, 256], sizes = [2, 128], strides = [1, 1]} : vector<2x384xf32> to vector<2x128xf32>
    %356 = arith.mulf %345, %355 : vector<2x128xf32>
    %357 = arith.addf %354, %356 : vector<2x128xf32>
    %358 = math.tanh %357 : vector<2x128xf32>
    %cst_72 = arith.constant 1.000000e+00 : f32
    %359 = vector.broadcast %cst_72 : f32 to vector<2x128xf32>
    %360 = arith.subf %359, %353 : vector<2x128xf32>
    %361 = arith.mulf %360, %358 : vector<2x128xf32>
    %362 = arith.mulf %353, %331 : vector<2x128xf32>
    %363 = arith.addf %361, %362 : vector<2x128xf32>
    %cst_73 = arith.constant dense<0.000000e+00> : vector<2x384xf32>
    %364 = tpu.matmul %363, %297, %cst_73 {dimension_numbers = #tpu.dot_dimension_numbers<[1], [0], [0], [1], [0, 0, 1, 1], [], []>} : vector<2x128xf32>, vector<128x384xf32>, vector<2x384xf32> -> vector<2x384xf32>
    %365 = vector.broadcast %298 : vector<1x384xf32> to vector<2x384xf32>
    %366 = arith.addf %364, %365 : vector<2x384xf32>
    %367 = vector.extract_strided_slice %291 {offsets = [0, 2, 0], sizes = [2, 1, 384], strides = [1, 1, 1]} : vector<2x5x384xf32> to vector<2x1x384xf32>
    %368 = vector.shape_cast %367 : vector<2x1x384xf32> to vector<2x384xf32>
    %369 = arith.addf %368, %296 : vector<2x384xf32>
    %370 = vector.extract_strided_slice %369 {offsets = [0, 0], sizes = [2, 128], strides = [1, 1]} : vector<2x384xf32> to vector<2x128xf32>
    %371 = vector.extract_strided_slice %366 {offsets = [0, 0], sizes = [2, 128], strides = [1, 1]} : vector<2x384xf32> to vector<2x128xf32>
    %372 = arith.addf %370, %371 : vector<2x128xf32>
    %373 = arith.negf %372 : vector<2x128xf32>
    %374 = math.exp %373 : vector<2x128xf32>
    %cst_74 = arith.constant 1.000000e+00 : f32
    %375 = vector.broadcast %cst_74 : f32 to vector<2x128xf32>
    %376 = arith.addf %375, %374 : vector<2x128xf32>
    %377 = arith.divf %375, %376 : vector<2x128xf32>
    %378 = vector.extract_strided_slice %369 {offsets = [0, 128], sizes = [2, 128], strides = [1, 1]} : vector<2x384xf32> to vector<2x128xf32>
    %379 = vector.extract_strided_slice %366 {offsets = [0, 128], sizes = [2, 128], strides = [1, 1]} : vector<2x384xf32> to vector<2x128xf32>
    %380 = arith.addf %378, %379 : vector<2x128xf32>
    %381 = arith.negf %380 : vector<2x128xf32>
    %382 = math.exp %381 : vector<2x128xf32>
    %cst_75 = arith.constant 1.000000e+00 : f32
    %383 = vector.broadcast %cst_75 : f32 to vector<2x128xf32>
    %384 = arith.addf %383, %382 : vector<2x128xf32>
    %385 = arith.divf %383, %384 : vector<2x128xf32>
    %386 = vector.extract_strided_slice %369 {offsets = [0, 256], sizes = [2, 128], strides = [1, 1]} : vector<2x384xf32> to vector<2x128xf32>
    %387 = vector.extract_strided_slice %366 {offsets = [0, 256], sizes = [2, 128], strides = [1, 1]} : vector<2x384xf32> to vector<2x128xf32>
    %388 = arith.mulf %377, %387 : vector<2x128xf32>
    %389 = arith.addf %386, %388 : vector<2x128xf32>
    %390 = math.tanh %389 : vector<2x128xf32>
    %cst_76 = arith.constant 1.000000e+00 : f32
    %391 = vector.broadcast %cst_76 : f32 to vector<2x128xf32>
    %392 = arith.subf %391, %385 : vector<2x128xf32>
    %393 = arith.mulf %392, %390 : vector<2x128xf32>
    %394 = arith.mulf %385, %363 : vector<2x128xf32>
    %395 = arith.addf %393, %394 : vector<2x128xf32>
    %cst_77 = arith.constant dense<0.000000e+00> : vector<2x384xf32>
    %396 = tpu.matmul %395, %297, %cst_77 {dimension_numbers = #tpu.dot_dimension_numbers<[1], [0], [0], [1], [0, 0, 1, 1], [], []>} : vector<2x128xf32>, vector<128x384xf32>, vector<2x384xf32> -> vector<2x384xf32>
    %397 = vector.broadcast %298 : vector<1x384xf32> to vector<2x384xf32>
    %398 = arith.addf %396, %397 : vector<2x384xf32>
    %399 = vector.extract_strided_slice %291 {offsets = [0, 3, 0], sizes = [2, 1, 384], strides = [1, 1, 1]} : vector<2x5x384xf32> to vector<2x1x384xf32>
    %400 = vector.shape_cast %399 : vector<2x1x384xf32> to vector<2x384xf32>
    %401 = arith.addf %400, %296 : vector<2x384xf32>
    %402 = vector.extract_strided_slice %401 {offsets = [0, 0], sizes = [2, 128], strides = [1, 1]} : vector<2x384xf32> to vector<2x128xf32>
    %403 = vector.extract_strided_slice %398 {offsets = [0, 0], sizes = [2, 128], strides = [1, 1]} : vector<2x384xf32> to vector<2x128xf32>
    %404 = arith.addf %402, %403 : vector<2x128xf32>
    %405 = arith.negf %404 : vector<2x128xf32>
    %406 = math.exp %405 : vector<2x128xf32>
    %cst_78 = arith.constant 1.000000e+00 : f32
    %407 = vector.broadcast %cst_78 : f32 to vector<2x128xf32>
    %408 = arith.addf %407, %406 : vector<2x128xf32>
    %409 = arith.divf %407, %408 : vector<2x128xf32>
    %410 = vector.extract_strided_slice %401 {offsets = [0, 128], sizes = [2, 128], strides = [1, 1]} : vector<2x384xf32> to vector<2x128xf32>
    %411 = vector.extract_strided_slice %398 {offsets = [0, 128], sizes = [2, 128], strides = [1, 1]} : vector<2x384xf32> to vector<2x128xf32>
    %412 = arith.addf %410, %411 : vector<2x128xf32>
    %413 = arith.negf %412 : vector<2x128xf32>
    %414 = math.exp %413 : vector<2x128xf32>
    %cst_79 = arith.constant 1.000000e+00 : f32
    %415 = vector.broadcast %cst_79 : f32 to vector<2x128xf32>
    %416 = arith.addf %415, %414 : vector<2x128xf32>
    %417 = arith.divf %415, %416 : vector<2x128xf32>
    %418 = vector.extract_strided_slice %401 {offsets = [0, 256], sizes = [2, 128], strides = [1, 1]} : vector<2x384xf32> to vector<2x128xf32>
    %419 = vector.extract_strided_slice %398 {offsets = [0, 256], sizes = [2, 128], strides = [1, 1]} : vector<2x384xf32> to vector<2x128xf32>
    %420 = arith.mulf %409, %419 : vector<2x128xf32>
    %421 = arith.addf %418, %420 : vector<2x128xf32>
    %422 = math.tanh %421 : vector<2x128xf32>
    %cst_80 = arith.constant 1.000000e+00 : f32
    %423 = vector.broadcast %cst_80 : f32 to vector<2x128xf32>
    %424 = arith.subf %423, %417 : vector<2x128xf32>
    %425 = arith.mulf %424, %422 : vector<2x128xf32>
    %426 = arith.mulf %417, %395 : vector<2x128xf32>
    %427 = arith.addf %425, %426 : vector<2x128xf32>
    %cst_81 = arith.constant dense<0.000000e+00> : vector<2x384xf32>
    %428 = tpu.matmul %427, %297, %cst_81 {dimension_numbers = #tpu.dot_dimension_numbers<[1], [0], [0], [1], [0, 0, 1, 1], [], []>} : vector<2x128xf32>, vector<128x384xf32>, vector<2x384xf32> -> vector<2x384xf32>
    %429 = vector.broadcast %298 : vector<1x384xf32> to vector<2x384xf32>
    %430 = arith.addf %428, %429 : vector<2x384xf32>
    %431 = vector.extract_strided_slice %291 {offsets = [0, 4, 0], sizes = [2, 1, 384], strides = [1, 1, 1]} : vector<2x5x384xf32> to vector<2x1x384xf32>
    %432 = vector.shape_cast %431 : vector<2x1x384xf32> to vector<2x384xf32>
    %433 = arith.addf %432, %296 : vector<2x384xf32>
    %434 = vector.extract_strided_slice %433 {offsets = [0, 0], sizes = [2, 128], strides = [1, 1]} : vector<2x384xf32> to vector<2x128xf32>
    %435 = vector.extract_strided_slice %430 {offsets = [0, 0], sizes = [2, 128], strides = [1, 1]} : vector<2x384xf32> to vector<2x128xf32>
    %436 = arith.addf %434, %435 : vector<2x128xf32>
    %437 = arith.negf %436 : vector<2x128xf32>
    %438 = math.exp %437 : vector<2x128xf32>
    %cst_82 = arith.constant 1.000000e+00 : f32
    %439 = vector.broadcast %cst_82 : f32 to vector<2x128xf32>
    %440 = arith.addf %439, %438 : vector<2x128xf32>
    %441 = arith.divf %439, %440 : vector<2x128xf32>
    %442 = vector.extract_strided_slice %433 {offsets = [0, 128], sizes = [2, 128], strides = [1, 1]} : vector<2x384xf32> to vector<2x128xf32>
    %443 = vector.extract_strided_slice %430 {offsets = [0, 128], sizes = [2, 128], strides = [1, 1]} : vector<2x384xf32> to vector<2x128xf32>
    %444 = arith.addf %442, %443 : vector<2x128xf32>
    %445 = arith.negf %444 : vector<2x128xf32>
    %446 = math.exp %445 : vector<2x128xf32>
    %cst_83 = arith.constant 1.000000e+00 : f32
    %447 = vector.broadcast %cst_83 : f32 to vector<2x128xf32>
    %448 = arith.addf %447, %446 : vector<2x128xf32>
    %449 = arith.divf %447, %448 : vector<2x128xf32>
    %450 = vector.extract_strided_slice %433 {offsets = [0, 256], sizes = [2, 128], strides = [1, 1]} : vector<2x384xf32> to vector<2x128xf32>
    %451 = vector.extract_strided_slice %430 {offsets = [0, 256], sizes = [2, 128], strides = [1, 1]} : vector<2x384xf32> to vector<2x128xf32>
    %452 = arith.mulf %441, %451 : vector<2x128xf32>
    %453 = arith.addf %450, %452 : vector<2x128xf32>
    %454 = math.tanh %453 : vector<2x128xf32>
    %cst_84 = arith.constant 1.000000e+00 : f32
    %455 = vector.broadcast %cst_84 : f32 to vector<2x128xf32>
    %456 = arith.subf %455, %449 : vector<2x128xf32>
    %457 = arith.mulf %456, %454 : vector<2x128xf32>
    %458 = arith.mulf %449, %427 : vector<2x128xf32>
    %459 = arith.addf %457, %458 : vector<2x128xf32>
    %460 = tpu.concatenate %331, %363, %395, %427, %459 in 0 : vector<2x128xf32>, vector<2x128xf32>, vector<2x128xf32>, vector<2x128xf32>, vector<2x128xf32> -> vector<10x128xf32>
    %c0_85 = arith.constant 0 : index
    %c0_86 = arith.constant 0 : index
    %461 = vector.load %arg12[%c0_85, %c0_86] : memref<128x128xf32, #tpu.memory_space<vmem>>, vector<128x128xf32>
    %cst_87 = arith.constant dense<0.000000e+00> : vector<10x128xf32>
    %462 = tpu.matmul %460, %461, %cst_87 {dimension_numbers = #tpu.dot_dimension_numbers<[1], [0], [0], [1], [0, 0, 1, 1], [], []>} : vector<10x128xf32>, vector<128x128xf32>, vector<10x128xf32> -> vector<10x128xf32>
    %c0_88 = arith.constant 0 : index
    %c0_89 = arith.constant 0 : index
    %463 = vector.load %arg13[%c0_88, %c0_89] : memref<1x128xf32, #tpu.memory_space<vmem>>, vector<1x128xf32>
    %464 = vector.broadcast %463 : vector<1x128xf32> to vector<10x128xf32>
    %465 = arith.addf %462, %464 : vector<10x128xf32>
    %c0_90 = arith.constant 0 : index
    %c0_91 = arith.constant 0 : index
    %466 = vector.load %arg14[%c0_90, %c0_91] : memref<10x128xf32, #tpu.memory_space<vmem>>, vector<10x128xf32>
    tpu.vector_store %arg14[%c0_90, %c0_91], %465 {strides = array<i32>} : memref<10x128xf32, #tpu.memory_space<vmem>>, vector<10x128xf32>,
    return
  }
}

</mosaic_0001>

<llo_original>
// kernel: s2vt_forward.1
$region0: #{s2vt_forward.1}
  #allocation0 [shape = 'u32[]', space=smem, size = 0x4, offset = 0x4, fixed_abs, tag = 'smem constant byte address 0x4 - core index']
  #allocation1 [shape = 'u32[72,128]{1,0:T(1,128)}', space=vmem, size = 0x9000, scoped, tag = 'internal scratch']
  %s0 = inlined_call_operand.vmem [shape: f32[2,8,64], index: 0, kind: input, shape index: {}]
  %s1 = inlined_call_operand.vmem [shape: f32[2,5,16], index: 1, kind: input, shape index: {}]
  %s2 = inlined_call_operand.vmem [shape: f32[64,384], index: 2, kind: input, shape index: {}]
  %s3 = inlined_call_operand.vmem [shape: f32[1,384], index: 3, kind: input, shape index: {}]
  %s4 = inlined_call_operand.vmem [shape: f32[128,384], index: 4, kind: input, shape index: {}]
  %s5 = inlined_call_operand.vmem [shape: f32[1,384], index: 5, kind: input, shape index: {}]
  %s6 = inlined_call_operand.vmem [shape: f32[1,128], index: 6, kind: input, shape index: {}]
  %s7 = inlined_call_operand.vmem [shape: f32[16,384], index: 7, kind: input, shape index: {}]
  %s8 = inlined_call_operand.vmem [shape: f32[128,384], index: 8, kind: input, shape index: {}]
  %s9 = inlined_call_operand.vmem [shape: f32[1,384], index: 9, kind: input, shape index: {}]
  %s10 = inlined_call_operand.vmem [shape: f32[128,384], index: 10, kind: input, shape index: {}]
  %s11 = inlined_call_operand.vmem [shape: f32[1,384], index: 11, kind: input, shape index: {}]
  %s12 = inlined_call_operand.vmem [shape: f32[128,128], index: 12, kind: input, shape index: {}]
  %s13 = inlined_call_operand.vmem [shape: f32[1,128], index: 13, kind: input, shape index: {}]
  %s14 = inlined_call_operand.vmem [shape: f32[10,128], index: 14, kind: output, shape index: {}]
  %s15 = sld [smem:[#allocation0]]
  $region66: #{s2vt_forward.1} parent=0
    _
  %s17 = ssub.s32 1, %s15
  %s18 = scalar_select 0, %s17, %s15
  // Predicated region
  $region2: #{s2vt_forward.1} parent=0 // pred_check
    _
  $region3: #{s2vt_forward.1} parent=0 // pred_check_branch
    %20 = sbr.rel (0) target = $region5
  $region4: #{s2vt_forward.1} parent=0 // pred_region
    _
  $region5: #{s2vt_forward.1} parent=0 // pred_fallthru
    _
  // Predicated region
  $region6: #{s2vt_forward.1} parent=0 // pred_check
    _
  $region7: #{s2vt_forward.1} parent=0 // pred_check_branch
    %22 = sbr.rel (0) target = $region9
  $region8: #{s2vt_forward.1} parent=0 // pred_region
    _
  $region9: #{s2vt_forward.1} parent=0 // pred_fallthru
    _
  // Predicated region
  $region10: #{s2vt_forward.1} parent=0 // pred_check
    _
  $region11: #{s2vt_forward.1} parent=0 // pred_check_branch
    %24 = sbr.rel (0) target = $region13
  $region12: #{s2vt_forward.1} parent=0 // pred_region
    _
  $region13: #{s2vt_forward.1} parent=0 // pred_fallthru
    _
  // Predicated region
  $region14: #{s2vt_forward.1} parent=0 // pred_check
    _
  $region15: #{s2vt_forward.1} parent=0 // pred_check_branch
    %26 = sbr.rel (0) target = $region17
  $region16: #{s2vt_forward.1} parent=0 // pred_region
    _
  $region17: #{s2vt_forward.1} parent=0 // pred_fallthru
    _
  // Predicated region
  $region18: #{s2vt_forward.1} parent=0 // pred_check
    _
  $region19: #{s2vt_forward.1} parent=0 // pred_check_branch
    %28 = sbr.rel (0) target = $region21
  $region20: #{s2vt_forward.1} parent=0 // pred_region
    _
  $region21: #{s2vt_forward.1} parent=0 // pred_fallthru
    _
  // Predicated region
  $region22: #{s2vt_forward.1} parent=0 // pred_check
    _
  $region23: #{s2vt_forward.1} parent=0 // pred_check_branch
    %30 = sbr.rel (0) target = $region25
  $region24: #{s2vt_forward.1} parent=0 // pred_region
    _
  $region25: #{s2vt_forward.1} parent=0 // pred_fallthru
    _
  // Predicated region
  $region26: #{s2vt_forward.1} parent=0 // pred_check
    _
  $region27: #{s2vt_forward.1} parent=0 // pred_check_branch
    %32 = sbr.rel (0) target = $region29
  $region28: #{s2vt_forward.1} parent=0 // pred_region
    _
  $region29: #{s2vt_forward.1} parent=0 // pred_fallthru
    _
  // Predicated region
  $region30: #{s2vt_forward.1} parent=0 // pred_check
    _
  $region31: #{s2vt_forward.1} parent=0 // pred_check_branch
    %34 = sbr.rel (0) target = $region33
  $region32: #{s2vt_forward.1} parent=0 // pred_region
    _
  $region33: #{s2vt_forward.1} parent=0 // pred_fallthru
    _
  // Predicated region
  $region34: #{s2vt_forward.1} parent=0 // pred_check
    _
  $region35: #{s2vt_forward.1} parent=0 // pred_check_branch
    %36 = sbr.rel (0) target = $region37
  $region36: #{s2vt_forward.1} parent=0 // pred_region
    _
  $region37: #{s2vt_forward.1} parent=0 // pred_fallthru
    _
  // Predicated region
  $region38: #{s2vt_forward.1} parent=0 // pred_check
    _
  $region39: #{s2vt_forward.1} parent=0 // pred_check_branch
    %38 = sbr.rel (0) target = $region41
  $region40: #{s2vt_forward.1} parent=0 // pred_region
    _
  $region41: #{s2vt_forward.1} parent=0 // pred_fallthru
    _
  // Predicated region
  $region42: #{s2vt_forward.1} parent=0 // pred_check
    _
  $region43: #{s2vt_forward.1} parent=0 // pred_check_branch
    %40 = sbr.rel (0) target = $region45
  $region44: #{s2vt_forward.1} parent=0 // pred_region
    _
  $region45: #{s2vt_forward.1} parent=0 // pred_fallthru
    _
  // Predicated region
  $region46: #{s2vt_forward.1} parent=0 // pred_check
    _
  $region47: #{s2vt_forward.1} parent=0 // pred_check_branch
    %42 = sbr.rel (0) target = $region49
  $region48: #{s2vt_forward.1} parent=0 // pred_region
    _
  $region49: #{s2vt_forward.1} parent=0 // pred_fallthru
    _
  // Predicated region
  $region50: #{s2vt_forward.1} parent=0 // pred_check
    _
  $region51: #{s2vt_forward.1} parent=0 // pred_check_branch
    %44 = sbr.rel (0) target = $region53
  $region52: #{s2vt_forward.1} parent=0 // pred_region
    _
  $region53: #{s2vt_forward.1} parent=0 // pred_fallthru
    _
  // Predicated region
  $region54: #{s2vt_forward.1} parent=0 // pred_check
    _
  $region55: #{s2vt_forward.1} parent=0 // pred_check_branch
    %46 = sbr.rel (0) target = $region57
  $region56: #{s2vt_forward.1} parent=0 // pred_region
    _
  $region57: #{s2vt_forward.1} parent=0 // pred_fallthru
    _
  %v47 = vld [vmem:[%s0] sm:$0xff]
  %v48 = vld [vmem:[%s0 + $0x8] sm:$0xff]
  %v49 = vld [vmem:[%s2] sm:$0xff]
  %v50 = vld [vmem:[%s2 + $0x8] sm:$0xff]
  %v51 = vld [vmem:[%s2 + $0x10] sm:$0xff]
  %v52 = vld [vmem:[%s2 + $0x18] sm:$0xff]
  %v53 = vld [vmem:[%s2 + $0x20] sm:$0xff]
  %v54 = vld [vmem:[%s2 + $0x28] sm:$0xff]
  %v55 = vld [vmem:[%s2 + $0x30] sm:$0xff]
  %v56 = vld [vmem:[%s2 + $0x38] sm:$0xff]
  %v57 = vld [vmem:[%s2 + $0x40] sm:$0xff]
  %v58 = vld [vmem:[%s2 + $0x48] sm:$0xff]
  %v59 = vld [vmem:[%s2 + $0x50] sm:$0xff]
  %v60 = vld [vmem:[%s2 + $0x58] sm:$0xff]
  %v61 = vld [vmem:[%s2 + $0x60] sm:$0xff]
  %v62 = vld [vmem:[%s2 + $0x68] sm:$0xff]
  %v63 = vld [vmem:[%s2 + $0x70] sm:$0xff]
  %v64 = vld [vmem:[%s2 + $0x78] sm:$0xff]
  %v65 = vld [vmem:[%s2 + $0x80] sm:$0xff]
  %v66 = vld [vmem:[%s2 + $0x88] sm:$0xff]
  %v67 = vld [vmem:[%s2 + $0x90] sm:$0xff]
  %v68 = vld [vmem:[%s2 + $0x98] sm:$0xff]
  %v69 = vld [vmem:[%s2 + $0xa0] sm:$0xff]
  %v70 = vld [vmem:[%s2 + $0xa8] sm:$0xff]
  %v71 = vld [vmem:[%s2 + $0xb0] sm:$0xff]
  %v72 = vld [vmem:[%s2 + $0xb8] sm:$0xff]
  %v73 = vld [vmem:[%s3] sm:$0x7]
  %v75 = vperm.slane %v73, 0
  %v76 = vperm.slane %v73, 1
  %v77 = vperm.slane %v73, 2
  %vm81 = vcmask 523264
  %v83 = vsel %vm81, %v47, 0
  %v86 = vsel %vm81, %v48, 0
  %88 = vmatpush.msra.mxu0 0.0
  %89 = vmatpush.msra.mxu0 0.0
  %90 = vmatpush.msra.mxu0 0.0
  %91 = vmatpush.msra.mxu0 0.0
  %92 = vmatpush.msra.mxu0 0.0
  %93 = vmatpush.msra.mxu0 0.0
  %94 = vmatpush.msra.mxu0 0.0
  %95 = vmatpush.msra.mxu0 0.0
  %96 = vmatpush.msra.mxu0 %v70
  %97 = vmatpush.msra.mxu0 %v67
  %98 = vmatpush.msra.mxu0 %v64
  %99 = vmatpush.msra.mxu0 %v61
  %100 = vmatpush.msra.mxu0 %v58
  %101 = vmatpush.msra.mxu0 %v55
  %102 = vmatpush.msra.mxu0 %v52
  %103 = vmatpush.msra.mxu0 %v49
  %104 = vmatmul.f32.gmra.mxu0 %v83
  %v105 = vpop.f32.mrf.mxu0
  %v106 = vadd.f32 %v75, %v105
  %107 = vmatmul.f32.gmra.mxu0 %v86
  %v108 = vpop.f32.mrf.mxu0
  %v109 = vadd.f32 %v75, %v108
  %110 = vdwg.mxu0
  %111 = vmatpush.msra.mxu0 0.0
  %112 = vmatpush.msra.mxu0 0.0
  %113 = vmatpush.msra.mxu0 0.0
  %114 = vmatpush.msra.mxu0 0.0
  %115 = vmatpush.msra.mxu0 0.0
  %116 = vmatpush.msra.mxu0 0.0
  %117 = vmatpush.msra.mxu0 0.0
  %118 = vmatpush.msra.mxu0 0.0
  %119 = vmatpush.msra.mxu0 %v71
  %120 = vmatpush.msra.mxu0 %v68
  %121 = vmatpush.msra.mxu0 %v65
  %122 = vmatpush.msra.mxu0 %v62
  %123 = vmatpush.msra.mxu0 %v59
  %124 = vmatpush.msra.mxu0 %v56
  %125 = vmatpush.msra.mxu0 %v53
  %126 = vmatpush.msra.mxu0 %v50
  %127 = vmatmul.f32.gmra.mxu0 %v83
  %v128 = vpop.f32.mrf.mxu0
  %v129 = vadd.f32 %v76, %v128
  %130 = vmatmul.f32.gmra.mxu0 %v86
  %v131 = vpop.f32.mrf.mxu0
  %v132 = vadd.f32 %v76, %v131
  %133 = vdwg.mxu0
  %134 = vmatpush.msra.mxu0 0.0
  %135 = vmatpush.msra.mxu0 0.0
  %136 = vmatpush.msra.mxu0 0.0
  %137 = vmatpush.msra.mxu0 0.0
  %138 = vmatpush.msra.mxu0 0.0
  %139 = vmatpush.msra.mxu0 0.0
  %140 = vmatpush.msra.mxu0 0.0
  %141 = vmatpush.msra.mxu0 0.0
  %142 = vmatpush.msra.mxu0 %v72
  %143 = vmatpush.msra.mxu0 %v69
  %144 = vmatpush.msra.mxu0 %v66
  %145 = vmatpush.msra.mxu0 %v63
  %146 = vmatpush.msra.mxu0 %v60
  %147 = vmatpush.msra.mxu0 %v57
  %148 = vmatpush.msra.mxu0 %v54
  %149 = vmatpush.msra.mxu0 %v51
  %150 = vmatmul.f32.gmra.mxu0 %v83
  %v151 = vpop.f32.mrf.mxu0
  %v152 = vadd.f32 %v77, %v151
  %153 = vmatmul.f32.gmra.mxu0 %v86
  %v154 = vpop.f32.mrf.mxu0
  %v155 = vadd.f32 %v77, %v154
  %156 = vdwg.mxu0
  %v157 = vld [vmem:[%s4] sm:$0xff]
  %v158 = vld [vmem:[%s4 + $0x8] sm:$0xff]
  %v159 = vld [vmem:[%s4 + $0x10] sm:$0xff]
  %v160 = vld [vmem:[%s4 + $0x18] sm:$0xff]
  %v161 = vld [vmem:[%s4 + $0x20] sm:$0xff]
  %v162 = vld [vmem:[%s4 + $0x28] sm:$0xff]
  %v163 = vld [vmem:[%s4 + $0x30] sm:$0xff]
  %v164 = vld [vmem:[%s4 + $0x38] sm:$0xff]
  %v165 = vld [vmem:[%s4 + $0x40] sm:$0xff]
  %v166 = vld [vmem:[%s4 + $0x48] sm:$0xff]
  %v167 = vld [vmem:[%s4 + $0x50] sm:$0xff]
  %v168 = vld [vmem:[%s4 + $0x58] sm:$0xff]
  %v169 = vld [vmem:[%s4 + $0x60] sm:$0xff]
  %v170 = vld [vmem:[%s4 + $0x68] sm:$0xff]
  %v171 = vld [vmem:[%s4 + $0x70] sm:$0xff]
  %v172 = vld [vmem:[%s4 + $0x78] sm:$0xff]
  %v173 = vld [vmem:[%s4 + $0x80] sm:$0xff]
  %v174 = vld [vmem:[%s4 + $0x88] sm:$0xff]
  %v175 = vld [vmem:[%s4 + $0x90] sm:$0xff]
  %v176 = vld [vmem:[%s4 + $0x98] sm:$0xff]
  %v177 = vld [vmem:[%s4 + $0xa0] sm:$0xff]
  %v178 = vld [vmem:[%s4 + $0xa8] sm:$0xff]
  %v179 = vld [vmem:[%s4 + $0xb0] sm:$0xff]
  %v180 = vld [vmem:[%s4 + $0xb8] sm:$0xff]
  %v181 = vld [vmem:[%s4 + $0xc0] sm:$0xff]
  %v182 = vld [vmem:[%s4 + $0xc8] sm:$0xff]
  %v183 = vld [vmem:[%s4 + $0xd0] sm:$0xff]
  %v184 = vld [vmem:[%s4 + $0xd8] sm:$0xff]
  %v185 = vld [vmem:[%s4 + $0xe0] sm:$0xff]
  %v186 = vld [vmem:[%s4 + $0xe8] sm:$0xff]
  %v187 = vld [vmem:[%s4 + $0xf0] sm:$0xff]
  %v188 = vld [vmem:[%s4 + $0xf8] sm:$0xff]
  %v189 = vld [vmem:[%s4 + $0x100] sm:$0xff]
  %v190 = vld [vmem:[%s4 + $0x108] sm:$0xff]
  %v191 = vld [vmem:[%s4 + $0x110] sm:$0xff]
  %v192 = vld [vmem:[%s4 + $0x118] sm:$0xff]
  %v193 = vld [vmem:[%s4 + $0x120] sm:$0xff]
  %v194 = vld [vmem:[%s4 + $0x128] sm:$0xff]
  %v195 = vld [vmem:[%s4 + $0x130] sm:$0xff]
  %v196 = vld [vmem:[%s4 + $0x138] sm:$0xff]
  %v197 = vld [vmem:[%s4 + $0x140] sm:$0xff]
  %v198 = vld [vmem:[%s4 + $0x148] sm:$0xff]
  %v199 = vld [vmem:[%s4 + $0x150] sm:$0xff]
  %v200 = vld [vmem:[%s4 + $0x158] sm:$0xff]
  %v201 = vld [vmem:[%s4 + $0x160] sm:$0xff]
  %v202 = vld [vmem:[%s4 + $0x168] sm:$0xff]
  %v203 = vld [vmem:[%s4 + $0x170] sm:$0xff]
  %v204 = vld [vmem:[%s4 + $0x178] sm:$0xff]
  %v205 = vld [vmem:[%s5] sm:$0x7]
  %v207 = vperm.slane %v205, 0
  %v208 = vperm.slane %v205, 1
  %v209 = vperm.slane %v205, 2
  %213 = vmatpush.msra.mxu0 %v202
  %214 = vmatpush.msra.mxu0 %v199
  %215 = vmatpush.msra.mxu0 %v196
  %216 = vmatpush.msra.mxu0 %v193
  %217 = vmatpush.msra.mxu0 %v190
  %218 = vmatpush.msra.mxu0 %v187
  %219 = vmatpush.msra.mxu0 %v184
  %220 = vmatpush.msra.mxu0 %v181
  %221 = vmatpush.msra.mxu0 %v178
  %222 = vmatpush.msra.mxu0 %v175
  %223 = vmatpush.msra.mxu0 %v172
  %224 = vmatpush.msra.mxu0 %v169
  %225 = vmatpush.msra.mxu0 %v166
  %226 = vmatpush.msra.mxu0 %v163
  %227 = vmatpush.msra.mxu0 %v160
  %228 = vmatpush.msra.mxu0 %v157
  %229 = vmatmul.f32.gmra.mxu0 0.0
  %v230 = vpop.f32.mrf.mxu0
  %v231 = vadd.f32 %v207, %v230
  %232 = vdwg.mxu0
  %233 = vmatpush.msra.mxu0 %v203
  %234 = vmatpush.msra.mxu0 %v200
  %235 = vmatpush.msra.mxu0 %v197
  %236 = vmatpush.msra.mxu0 %v194
  %237 = vmatpush.msra.mxu0 %v191
  %238 = vmatpush.msra.mxu0 %v188
  %239 = vmatpush.msra.mxu0 %v185
  %240 = vmatpush.msra.mxu0 %v182
  %241 = vmatpush.msra.mxu0 %v179
  %242 = vmatpush.msra.mxu0 %v176
  %243 = vmatpush.msra.mxu0 %v173
  %244 = vmatpush.msra.mxu0 %v170
  %245 = vmatpush.msra.mxu0 %v167
  %246 = vmatpush.msra.mxu0 %v164
  %247 = vmatpush.msra.mxu0 %v161
  %248 = vmatpush.msra.mxu0 %v158
  %249 = vmatmul.f32.gmra.mxu0 0.0
  %v250 = vpop.f32.mrf.mxu0
  %v251 = vadd.f32 %v208, %v250
  %252 = vdwg.mxu0
  %253 = vmatpush.msra.mxu0 %v204
  %254 = vmatpush.msra.mxu0 %v201
  %255 = vmatpush.msra.mxu0 %v198
  %256 = vmatpush.msra.mxu0 %v195
  %257 = vmatpush.msra.mxu0 %v192
  %258 = vmatpush.msra.mxu0 %v189
  %259 = vmatpush.msra.mxu0 %v186
  %260 = vmatpush.msra.mxu0 %v183
  %261 = vmatpush.msra.mxu0 %v180
  %262 = vmatpush.msra.mxu0 %v177
  %263 = vmatpush.msra.mxu0 %v174
  %264 = vmatpush.msra.mxu0 %v171
  %265 = vmatpush.msra.mxu0 %v168
  %266 = vmatpush.msra.mxu0 %v165
  %267 = vmatpush.msra.mxu0 %v162
  %268 = vmatpush.msra.mxu0 %v159
  %269 = vmatmul.f32.gmra.mxu0 0.0
  %v270 = vpop.f32.mrf.mxu0
  %v271 = vadd.f32 %v209, %v270
  %272 = vdwg.mxu0
  %v274 = vrot.slane %v231, 1
  %v277 = vadd.f32 %v106, %v231
  %v278 = vadd.f32 %v109, %v274
  %v279 = vxor.u32 %v277, 2147483648
  %v280 = vxor.u32 %v278, 2147483648
  %v281 = vmul.f32 %v279, 1.442695
  %v282 = vpow.pop %v281
  %v283 = vmul.f32 %v280, 1.442695
  %v284 = vpow.pop %v283
  %v285 = vadd.f32 %v282, 1.0
  %v286 = vadd.f32 %v284, 1.0
  %v287 = vrcp.pop %v285
  %v288 = vmul.f32 %v285, %v287
  %v289 = vsub.f32 1.0, %v288
  %v290 = vmul.f32 %v287, %v289
  %v291 = vadd.f32 %v287, %v290
  %vm292 = vweird.f32 %v285
  %vm293 = vweird.f32 %v287
  %vm294 = vmor %vm292, %vm293
  %v295 = vsel %vm294, %v287, %v291
  %v296 = vand.u32 2147483647, %v285
  %vm297 = vcmp.eq.f32.partialorder %v296, 8.507059e+37
  %v298 = vand.u32 %v285, 2147483648
  %v299 = vor.u32 1.1754944e-38, %v298
  %v300 = vsel %vm297, %v299, %v295
  %v301 = vmul.f32 1.0, %v300
  %v302 = vrcp.pop %v286
  %v303 = vmul.f32 %v286, %v302
  %v304 = vsub.f32 1.0, %v303
  %v305 = vmul.f32 %v302, %v304
  %v306 = vadd.f32 %v302, %v305
  %vm307 = vweird.f32 %v286
  %vm308 = vweird.f32 %v302
  %vm309 = vmor %vm307, %vm308
  %v310 = vsel %vm309, %v302, %v306
  %v311 = vand.u32 2147483647, %v286
  %vm312 = vcmp.eq.f32.partialorder %v311, 8.507059e+37
  %v313 = vand.u32 %v286, 2147483648
  %v314 = vor.u32 1.1754944e-38, %v313
  %v315 = vsel %vm312, %v314, %v310
  %v316 = vmul.f32 1.0, %v315
  %v318 = vrot.slane %v251, 1
  %v321 = vadd.f32 %v129, %v251
  %v322 = vadd.f32 %v132, %v318
  %v323 = vxor.u32 %v321, 2147483648
  %v324 = vxor.u32 %v322, 2147483648
  %v325 = vmul.f32 %v323, 1.442695
  %v326 = vpow.pop %v325
  %v327 = vmul.f32 %v324, 1.442695
  %v328 = vpow.pop %v327
  %v329 = vadd.f32 %v326, 1.0
  %v330 = vadd.f32 %v328, 1.0
  %v331 = vrcp.pop %v329
  %v332 = vmul.f32 %v329, %v331
  %v333 = vsub.f32 1.0, %v332
  %v334 = vmul.f32 %v331, %v333
  %v335 = vadd.f32 %v331, %v334
  %vm336 = vweird.f32 %v329
  %vm337 = vweird.f32 %v331
  %vm338 = vmor %vm336, %vm337
  %v339 = vsel %vm338, %v331, %v335
  %v340 = vand.u32 2147483647, %v329
  %vm341 = vcmp.eq.f32.partialorder %v340, 8.507059e+37
  %v342 = vand.u32 %v329, 2147483648
  %v343 = vor.u32 1.1754944e-38, %v342
  %v344 = vsel %vm341, %v343, %v339
  %v345 = vmul.f32 1.0, %v344
  %v346 = vrcp.pop %v330
  %v347 = vmul.f32 %v330, %v346
  %v348 = vsub.f32 1.0, %v347
  %v349 = vmul.f32 %v346, %v348
  %v350 = vadd.f32 %v346, %v349
  %vm351 = vweird.f32 %v330
  %vm352 = vweird.f32 %v346
  %vm353 = vmor %vm351, %vm352
  %v354 = vsel %vm353, %v346, %v350
  %v355 = vand.u32 2147483647, %v330
  %vm356 = vcmp.eq.f32.partialorder %v355, 8.507059e+37
  %v357 = vand.u32 %v330, 2147483648
  %v358 = vor.u32 1.1754944e-38, %v357
  %v359 = vsel %vm356, %v358, %v354
  %v360 = vmul.f32 1.0, %v359
  %v362 = vrot.slane %v271, 1
  %v365 = vmul.f32 %v301, %v271
  %v366 = vmul.f32 %v316, %v362
  %v367 = vadd.f32 %v152, %v365
  %v368 = vadd.f32 %v155, %v366
  %v369 = vtanh.pop %v367
  %v370 = vtanh.pop %v368
  %v371 = vsub.f32 1.0, %v345
  %v372 = vsub.f32 1.0, %v360
  %v373 = vmul.f32 %v371, %v369
  %v374 = vmul.f32 %v372, %v370
  %v375 = vmul.f32 %v345, 0.0
  %v376 = vmul.f32 %v360, 0.0
  %v377 = vadd.f32 %v373, %v375
  %v378 = vadd.f32 %v374, %v376
  %v381 = vrot.slane %v378, 7
  %vm382 = vcmask 1041409
  %v383 = vsel %vm382, %v381, %v377
  %385 = vmatpush.msra.mxu0 %v202
  %386 = vmatpush.msra.mxu0 %v199
  %387 = vmatpush.msra.mxu0 %v196
  %388 = vmatpush.msra.mxu0 %v193
  %389 = vmatpush.msra.mxu0 %v190
  %390 = vmatpush.msra.mxu0 %v187
  %391 = vmatpush.msra.mxu0 %v184
  %392 = vmatpush.msra.mxu0 %v181
  %393 = vmatpush.msra.mxu0 %v178
  %394 = vmatpush.msra.mxu0 %v175
  %395 = vmatpush.msra.mxu0 %v172
  %396 = vmatpush.msra.mxu0 %v169
  %397 = vmatpush.msra.mxu0 %v166
  %398 = vmatpush.msra.mxu0 %v163
  %399 = vmatpush.msra.mxu0 %v160
  %400 = vmatpush.msra.mxu0 %v157
  %401 = vmatmul.f32.gmra.mxu0 %v383
  %v402 = vpop.f32.mrf.mxu0
  %v403 = vadd.f32 %v207, %v402
  %404 = vdwg.mxu0
  %405 = vmatpush.msra.mxu0 %v203
  %406 = vmatpush.msra.mxu0 %v200
  %407 = vmatpush.msra.mxu0 %v197
  %408 = vmatpush.msra.mxu0 %v194
  %409 = vmatpush.msra.mxu0 %v191
  %410 = vmatpush.msra.mxu0 %v188
  %411 = vmatpush.msra.mxu0 %v185
  %412 = vmatpush.msra.mxu0 %v182
  %413 = vmatpush.msra.mxu0 %v179
  %414 = vmatpush.msra.mxu0 %v176
  %415 = vmatpush.msra.mxu0 %v173
  %416 = vmatpush.msra.mxu0 %v170
  %417 = vmatpush.msra.mxu0 %v167
  %418 = vmatpush.msra.mxu0 %v164
  %419 = vmatpush.msra.mxu0 %v161
  %420 = vmatpush.msra.mxu0 %v158
  %421 = vmatmul.f32.gmra.mxu0 %v383
  %v422 = vpop.f32.mrf.mxu0
  %v423 = vadd.f32 %v208, %v422
  %424 = vdwg.mxu0
  %425 = vmatpush.msra.mxu0 %v204
  %426 = vmatpush.msra.mxu0 %v201
  %427 = vmatpush.msra.mxu0 %v198
  %428 = vmatpush.msra.mxu0 %v195
  %429 = vmatpush.msra.mxu0 %v192
  %430 = vmatpush.msra.mxu0 %v189
  %431 = vmatpush.msra.mxu0 %v186
  %432 = vmatpush.msra.mxu0 %v183
  %433 = vmatpush.msra.mxu0 %v180
  %434 = vmatpush.msra.mxu0 %v177
  %435 = vmatpush.msra.mxu0 %v174
  %436 = vmatpush.msra.mxu0 %v171
  %437 = vmatpush.msra.mxu0 %v168
  %438 = vmatpush.msra.mxu0 %v165
  %439 = vmatpush.msra.mxu0 %v162
  %440 = vmatpush.msra.mxu0 %v159
  %441 = vmatmul.f32.gmra.mxu0 %v383
  %v442 = vpop.f32.mrf.mxu0
  %v443 = vadd.f32 %v209, %v442
  %444 = vdwg.mxu0
  %v446 = vrot.slane %v403, 7
  %v449 = vadd.f32 %v106, %v446
  %v450 = vadd.f32 %v109, %v403
  %v451 = vxor.u32 %v449, 2147483648
  %v452 = vxor.u32 %v450, 2147483648
  %v453 = vmul.f32 %v451, 1.442695
  %v454 = vpow.pop %v453
  %v455 = vmul.f32 %v452, 1.442695
  %v456 = vpow.pop %v455
  %v457 = vadd.f32 %v454, 1.0
  %v458 = vadd.f32 %v456, 1.0
  %v459 = vrcp.pop %v457
  %v460 = vmul.f32 %v457, %v459
  %v461 = vsub.f32 1.0, %v460
  %v462 = vmul.f32 %v459, %v461
  %v463 = vadd.f32 %v459, %v462
  %vm464 = vweird.f32 %v457
  %vm465 = vweird.f32 %v459
  %vm466 = vmor %vm464, %vm465
  %v467 = vsel %vm466, %v459, %v463
  %v468 = vand.u32 2147483647, %v457
  %vm469 = vcmp.eq.f32.partialorder %v468, 8.507059e+37
  %v470 = vand.u32 %v457, 2147483648
  %v471 = vor.u32 1.1754944e-38, %v470
  %v472 = vsel %vm469, %v471, %v467
  %v473 = vmul.f32 1.0, %v472
  %v474 = vrcp.pop %v458
  %v475 = vmul.f32 %v458, %v474
  %v476 = vsub.f32 1.0, %v475
  %v477 = vmul.f32 %v474, %v476
  %v478 = vadd.f32 %v474, %v477
  %vm479 = vweird.f32 %v458
  %vm480 = vweird.f32 %v474
  %vm481 = vmor %vm479, %vm480
  %v482 = vsel %vm481, %v474, %v478
  %v483 = vand.u32 2147483647, %v458
  %vm484 = vcmp.eq.f32.partialorder %v483, 8.507059e+37
  %v485 = vand.u32 %v458, 2147483648
  %v486 = vor.u32 1.1754944e-38, %v485
  %v487 = vsel %vm484, %v486, %v482
  %v488 = vmul.f32 1.0, %v487
  %v490 = vrot.slane %v423, 7
  %v493 = vadd.f32 %v129, %v490
  %v494 = vadd.f32 %v132, %v423
  %v495 = vxor.u32 %v493, 2147483648
  %v496 = vxor.u32 %v494, 2147483648
  %v497 = vmul.f32 %v495, 1.442695
  %v498 = vpow.pop %v497
  %v499 = vmul.f32 %v496, 1.442695
  %v500 = vpow.pop %v499
  %v501 = vadd.f32 %v498, 1.0
  %v502 = vadd.f32 %v500, 1.0
  %v503 = vrcp.pop %v501
  %v504 = vmul.f32 %v501, %v503
  %v505 = vsub.f32 1.0, %v504
  %v506 = vmul.f32 %v503, %v505
  %v507 = vadd.f32 %v503, %v506
  %vm508 = vweird.f32 %v501
  %vm509 = vweird.f32 %v503
  %vm510 = vmor %vm508, %vm509
  %v511 = vsel %vm510, %v503, %v507
  %v512 = vand.u32 2147483647, %v501
  %vm513 = vcmp.eq.f32.partialorder %v512, 8.507059e+37
  %v514 = vand.u32 %v501, 2147483648
  %v515 = vor.u32 1.1754944e-38, %v514
  %v516 = vsel %vm513, %v515, %v511
  %v517 = vmul.f32 1.0, %v516
  %v518 = vrcp.pop %v502
  %v519 = vmul.f32 %v502, %v518
  %v520 = vsub.f32 1.0, %v519
  %v521 = vmul.f32 %v518, %v520
  %v522 = vadd.f32 %v518, %v521
  %vm523 = vweird.f32 %v502
  %vm524 = vweird.f32 %v518
  %vm525 = vmor %vm523, %vm524
  %v526 = vsel %vm525, %v518, %v522
  %v527 = vand.u32 2147483647, %v502
  %vm528 = vcmp.eq.f32.partialorder %v527, 8.507059e+37
  %v529 = vand.u32 %v502, 2147483648
  %v530 = vor.u32 1.1754944e-38, %v529
  %v531 = vsel %vm528, %v530, %v526
  %v532 = vmul.f32 1.0, %v531
  %v534 = vrot.slane %v443, 7
  %v537 = vmul.f32 %v473, %v534
  %v538 = vmul.f32 %v488, %v443
  %v539 = vadd.f32 %v152, %v537
  %v540 = vadd.f32 %v155, %v538
  %v541 = vtanh.pop %v539
  %v542 = vtanh.pop %v540
  %v543 = vsub.f32 1.0, %v517
  %v544 = vsub.f32 1.0, %v532
  %v545 = vmul.f32 %v543, %v541
  %v546 = vmul.f32 %v544, %v542
  %v547 = vrot.slane %v377, 7
  %v550 = vmul.f32 %v517, %v547
  %v551 = vmul.f32 %v532, %v381
  %v552 = vadd.f32 %v545, %v550
  %v553 = vadd.f32 %v546, %v551
  %v556 = vrot.slane %v552, 1
  %v557 = vsel %vm382, %v553, %v556
  %559 = vmatpush.msra.mxu0 %v202
  %560 = vmatpush.msra.mxu0 %v199
  %561 = vmatpush.msra.mxu0 %v196
  %562 = vmatpush.msra.mxu0 %v193
  %563 = vmatpush.msra.mxu0 %v190
  %564 = vmatpush.msra.mxu0 %v187
  %565 = vmatpush.msra.mxu0 %v184
  %566 = vmatpush.msra.mxu0 %v181
  %567 = vmatpush.msra.mxu0 %v178
  %568 = vmatpush.msra.mxu0 %v175
  %569 = vmatpush.msra.mxu0 %v172
  %570 = vmatpush.msra.mxu0 %v169
  %571 = vmatpush.msra.mxu0 %v166
  %572 = vmatpush.msra.mxu0 %v163
  %573 = vmatpush.msra.mxu0 %v160
  %574 = vmatpush.msra.mxu0 %v157
  %575 = vmatmul.f32.gmra.mxu0 %v557
  %v576 = vpop.f32.mrf.mxu0
  %v577 = vadd.f32 %v207, %v576
  %578 = vdwg.mxu0
  %579 = vmatpush.msra.mxu0 %v203
  %580 = vmatpush.msra.mxu0 %v200
  %581 = vmatpush.msra.mxu0 %v197
  %582 = vmatpush.msra.mxu0 %v194
  %583 = vmatpush.msra.mxu0 %v191
  %584 = vmatpush.msra.mxu0 %v188
  %585 = vmatpush.msra.mxu0 %v185
  %586 = vmatpush.msra.mxu0 %v182
  %587 = vmatpush.msra.mxu0 %v179
  %588 = vmatpush.msra.mxu0 %v176
  %589 = vmatpush.msra.mxu0 %v173
  %590 = vmatpush.msra.mxu0 %v170
  %591 = vmatpush.msra.mxu0 %v167
  %592 = vmatpush.msra.mxu0 %v164
  %593 = vmatpush.msra.mxu0 %v161
  %594 = vmatpush.msra.mxu0 %v158
  %595 = vmatmul.f32.gmra.mxu0 %v557
  %v596 = vpop.f32.mrf.mxu0
  %v597 = vadd.f32 %v208, %v596
  %598 = vdwg.mxu0
  %599 = vmatpush.msra.mxu0 %v204
  %600 = vmatpush.msra.mxu0 %v201
  %601 = vmatpush.msra.mxu0 %v198
  %602 = vmatpush.msra.mxu0 %v195
  %603 = vmatpush.msra.mxu0 %v192
  %604 = vmatpush.msra.mxu0 %v189
  %605 = vmatpush.msra.mxu0 %v186
  %606 = vmatpush.msra.mxu0 %v183
  %607 = vmatpush.msra.mxu0 %v180
  %608 = vmatpush.msra.mxu0 %v177
  %609 = vmatpush.msra.mxu0 %v174
  %610 = vmatpush.msra.mxu0 %v171
  %611 = vmatpush.msra.mxu0 %v168
  %612 = vmatpush.msra.mxu0 %v165
  %613 = vmatpush.msra.mxu0 %v162
  %614 = vmatpush.msra.mxu0 %v159
  %615 = vmatmul.f32.gmra.mxu0 %v557
  %v616 = vpop.f32.mrf.mxu0
  %v617 = vadd.f32 %v209, %v616
  %618 = vdwg.mxu0
  %v620 = vrot.slane %v577, 6
  %v621 = vrot.slane %v577, 7
  %v624 = vadd.f32 %v106, %v620
  %v625 = vadd.f32 %v109, %v621
  %v626 = vxor.u32 %v624, 2147483648
  %v627 = vxor.u32 %v625, 2147483648
  %v628 = vmul.f32 %v626, 1.442695
  %v629 = vpow.pop %v628
  %v630 = vmul.f32 %v627, 1.442695
  %v631 = vpow.pop %v630
  %v632 = vadd.f32 %v629, 1.0
  %v633 = vadd.f32 %v631, 1.0
  %v634 = vrcp.pop %v632
  %v635 = vmul.f32 %v632, %v634
  %v636 = vsub.f32 1.0, %v635
  %v637 = vmul.f32 %v634, %v636
  %v638 = vadd.f32 %v634, %v637
  %vm639 = vweird.f32 %v632
  %vm640 = vweird.f32 %v634
  %vm641 = vmor %vm639, %vm640
  %v642 = vsel %vm641, %v634, %v638
  %v643 = vand.u32 2147483647, %v632
  %vm644 = vcmp.eq.f32.partialorder %v643, 8.507059e+37
  %v645 = vand.u32 %v632, 2147483648
  %v646 = vor.u32 1.1754944e-38, %v645
  %v647 = vsel %vm644, %v646, %v642
  %v648 = vmul.f32 1.0, %v647
  %v649 = vrcp.pop %v633
  %v650 = vmul.f32 %v633, %v649
  %v651 = vsub.f32 1.0, %v650
  %v652 = vmul.f32 %v649, %v651
  %v653 = vadd.f32 %v649, %v652
  %vm654 = vweird.f32 %v633
  %vm655 = vweird.f32 %v649
  %vm656 = vmor %vm654, %vm655
  %v657 = vsel %vm656, %v649, %v653
  %v658 = vand.u32 2147483647, %v633
  %vm659 = vcmp.eq.f32.partialorder %v658, 8.507059e+37
  %v660 = vand.u32 %v633, 2147483648
  %v661 = vor.u32 1.1754944e-38, %v660
  %v662 = vsel %vm659, %v661, %v657
  %v663 = vmul.f32 1.0, %v662
  %v665 = vrot.slane %v597, 6
  %v666 = vrot.slane %v597, 7
  %v669 = vadd.f32 %v129, %v665
  %v670 = vadd.f32 %v132, %v666
  %v671 = vxor.u32 %v669, 2147483648
  %v672 = vxor.u32 %v670, 2147483648
  %v673 = vmul.f32 %v671, 1.442695
  %v674 = vpow.pop %v673
  %v675 = vmul.f32 %v672, 1.442695
  %v676 = vpow.pop %v675
  %v677 = vadd.f32 %v674, 1.0
  %v678 = vadd.f32 %v676, 1.0
  %v679 = vrcp.pop %v677
  %v680 = vmul.f32 %v677, %v679
  %v681 = vsub.f32 1.0, %v680
  %v682 = vmul.f32 %v679, %v681
  %v683 = vadd.f32 %v679, %v682
  %vm684 = vweird.f32 %v677
  %vm685 = vweird.f32 %v679
  %vm686 = vmor %vm684, %vm685
  %v687 = vsel %vm686, %v679, %v683
  %v688 = vand.u32 2147483647, %v677
  %vm689 = vcmp.eq.f32.partialorder %v688, 8.507059e+37
  %v690 = vand.u32 %v677, 2147483648
  %v691 = vor.u32 1.1754944e-38, %v690
  %v692 = vsel %vm689, %v691, %v687
  %v693 = vmul.f32 1.0, %v692
  %v694 = vrcp.pop %v678
  %v695 = vmul.f32 %v678, %v694
  %v696 = vsub.f32 1.0, %v695
  %v697 = vmul.f32 %v694, %v696
  %v698 = vadd.f32 %v694, %v697
  %vm699 = vweird.f32 %v678
  %vm700 = vweird.f32 %v694
  %vm701 = vmor %vm699, %vm700
  %v702 = vsel %vm701, %v694, %v698
  %v703 = vand.u32 2147483647, %v678
  %vm704 = vcmp.eq.f32.partialorder %v703, 8.507059e+37
  %v705 = vand.u32 %v678, 2147483648
  %v706 = vor.u32 1.1754944e-38, %v705
  %v707 = vsel %vm704, %v706, %v702
  %v708 = vmul.f32 1.0, %v707
  %v710 = vrot.slane %v617, 6
  %v711 = vrot.slane %v617, 7
  %v714 = vmul.f32 %v648, %v710
  %v715 = vmul.f32 %v663, %v711
  %v716 = vadd.f32 %v152, %v714
  %v717 = vadd.f32 %v155, %v715
  %v718 = vtanh.pop %v716
  %v719 = vtanh.pop %v717
  %v720 = vsub.f32 1.0, %v693
  %v721 = vsub.f32 1.0, %v708
  %v722 = vmul.f32 %v720, %v718
  %v723 = vmul.f32 %v721, %v719
  %v724 = vrot.slane %v552, 7
  %v725 = vrot.slane %v553, 7
  %v728 = vmul.f32 %v693, %v724
  %v729 = vmul.f32 %v708, %v725
  %v730 = vadd.f32 %v722, %v728
  %v731 = vadd.f32 %v723, %v729
  %v734 = vrot.slane %v730, 2
  %v735 = vrot.slane %v731, 1
  %v736 = vsel %vm382, %v735, %v734
  %738 = vmatpush.msra.mxu0 %v202
  %739 = vmatpush.msra.mxu0 %v199
  %740 = vmatpush.msra.mxu0 %v196
  %741 = vmatpush.msra.mxu0 %v193
  %742 = vmatpush.msra.mxu0 %v190
  %743 = vmatpush.msra.mxu0 %v187
  %744 = vmatpush.msra.mxu0 %v184
  %745 = vmatpush.msra.mxu0 %v181
  %746 = vmatpush.msra.mxu0 %v178
  %747 = vmatpush.msra.mxu0 %v175
  %748 = vmatpush.msra.mxu0 %v172
  %749 = vmatpush.msra.mxu0 %v169
  %750 = vmatpush.msra.mxu0 %v166
  %751 = vmatpush.msra.mxu0 %v163
  %752 = vmatpush.msra.mxu0 %v160
  %753 = vmatpush.msra.mxu0 %v157
  %754 = vmatmul.f32.gmra.mxu0 %v736
  %v755 = vpop.f32.mrf.mxu0
  %v756 = vadd.f32 %v207, %v755
  %757 = vdwg.mxu0
  %758 = vmatpush.msra.mxu0 %v203
  %759 = vmatpush.msra.mxu0 %v200
  %760 = vmatpush.msra.mxu0 %v197
  %761 = vmatpush.msra.mxu0 %v194
  %762 = vmatpush.msra.mxu0 %v191
  %763 = vmatpush.msra.mxu0 %v188
  %764 = vmatpush.msra.mxu0 %v185
  %765 = vmatpush.msra.mxu0 %v182
  %766 = vmatpush.msra.mxu0 %v179
  %767 = vmatpush.msra.mxu0 %v176
  %768 = vmatpush.msra.mxu0 %v173
  %769 = vmatpush.msra.mxu0 %v170
  %770 = vmatpush.msra.mxu0 %v167
  %771 = vmatpush.msra.mxu0 %v164
  %772 = vmatpush.msra.mxu0 %v161
  %773 = vmatpush.msra.mxu0 %v158
  %774 = vmatmul.f32.gmra.mxu0 %v736
  %v775 = vpop.f32.mrf.mxu0
  %v776 = vadd.f32 %v208, %v775
  %777 = vdwg.mxu0
  %778 = vmatpush.msra.mxu0 %v204
  %779 = vmatpush.msra.mxu0 %v201
  %780 = vmatpush.msra.mxu0 %v198
  %781 = vmatpush.msra.mxu0 %v195
  %782 = vmatpush.msra.mxu0 %v192
  %783 = vmatpush.msra.mxu0 %v189
  %784 = vmatpush.msra.mxu0 %v186
  %785 = vmatpush.msra.mxu0 %v183
  %786 = vmatpush.msra.mxu0 %v180
  %787 = vmatpush.msra.mxu0 %v177
  %788 = vmatpush.msra.mxu0 %v174
  %789 = vmatpush.msra.mxu0 %v171
  %790 = vmatpush.msra.mxu0 %v168
  %791 = vmatpush.msra.mxu0 %v165
  %792 = vmatpush.msra.mxu0 %v162
  %793 = vmatpush.msra.mxu0 %v159
  %794 = vmatmul.f32.gmra.mxu0 %v736
  %v795 = vpop.f32.mrf.mxu0
  %v796 = vadd.f32 %v209, %v795
  %797 = vdwg.mxu0
  %v799 = vrot.slane %v756, 5
  %v800 = vrot.slane %v756, 6
  %v803 = vadd.f32 %v106, %v799
  %v804 = vadd.f32 %v109, %v800
  %v805 = vxor.u32 %v803, 2147483648
  %v806 = vxor.u32 %v804, 2147483648
  %v807 = vmul.f32 %v805, 1.442695
  %v808 = vpow.pop %v807
  %v809 = vmul.f32 %v806, 1.442695
  %v810 = vpow.pop %v809
  %v811 = vadd.f32 %v808, 1.0
  %v812 = vadd.f32 %v810, 1.0
  %v813 = vrcp.pop %v811
  %v814 = vmul.f32 %v811, %v813
  %v815 = vsub.f32 1.0, %v814
  %v816 = vmul.f32 %v813, %v815
  %v817 = vadd.f32 %v813, %v816
  %vm818 = vweird.f32 %v811
  %vm819 = vweird.f32 %v813
  %vm820 = vmor %vm818, %vm819
  %v821 = vsel %vm820, %v813, %v817
  %v822 = vand.u32 2147483647, %v811
  %vm823 = vcmp.eq.f32.partialorder %v822, 8.507059e+37
  %v824 = vand.u32 %v811, 2147483648
  %v825 = vor.u32 1.1754944e-38, %v824
  %v826 = vsel %vm823, %v825, %v821
  %v827 = vmul.f32 1.0, %v826
  %v828 = vrcp.pop %v812
  %v829 = vmul.f32 %v812, %v828
  %v830 = vsub.f32 1.0, %v829
  %v831 = vmul.f32 %v828, %v830
  %v832 = vadd.f32 %v828, %v831
  %vm833 = vweird.f32 %v812
  %vm834 = vweird.f32 %v828
  %vm835 = vmor %vm833, %vm834
  %v836 = vsel %vm835, %v828, %v832
  %v837 = vand.u32 2147483647, %v812
  %vm838 = vcmp.eq.f32.partialorder %v837, 8.507059e+37
  %v839 = vand.u32 %v812, 2147483648
  %v840 = vor.u32 1.1754944e-38, %v839
  %v841 = vsel %vm838, %v840, %v836
  %v842 = vmul.f32 1.0, %v841
  %v844 = vrot.slane %v776, 5
  %v845 = vrot.slane %v776, 6
  %v848 = vadd.f32 %v129, %v844
  %v849 = vadd.f32 %v132, %v845
  %v850 = vxor.u32 %v848, 2147483648
  %v851 = vxor.u32 %v849, 2147483648
  %v852 = vmul.f32 %v850, 1.442695
  %v853 = vpow.pop %v852
  %v854 = vmul.f32 %v851, 1.442695
  %v855 = vpow.pop %v854
  %v856 = vadd.f32 %v853, 1.0
  %v857 = vadd.f32 %v855, 1.0
  %v858 = vrcp.pop %v856
  %v859 = vmul.f32 %v856, %v858
  %v860 = vsub.f32 1.0, %v859
  %v861 = vmul.f32 %v858, %v860
  %v862 = vadd.f32 %v858, %v861
  %vm863 = vweird.f32 %v856
  %vm864 = vweird.f32 %v858
  %vm865 = vmor %vm863, %vm864
  %v866 = vsel %vm865, %v858, %v862
  %v867 = vand.u32 2147483647, %v856
  %vm868 = vcmp.eq.f32.partialorder %v867, 8.507059e+37
  %v869 = vand.u32 %v856, 2147483648
  %v870 = vor.u32 1.1754944e-38, %v869
  %v871 = vsel %vm868, %v870, %v866
  %v872 = vmul.f32 1.0, %v871
  %v873 = vrcp.pop %v857
  %v874 = vmul.f32 %v857, %v873
  %v875 = vsub.f32 1.0, %v874
  %v876 = vmul.f32 %v873, %v875
  %v877 = vadd.f32 %v873, %v876
  %vm878 = vweird.f32 %v857
  %vm879 = vweird.f32 %v873
  %vm880 = vmor %vm878, %vm879
  %v881 = vsel %vm880, %v873, %v877
  %v882 = vand.u32 2147483647, %v857
  %vm883 = vcmp.eq.f32.partialorder %v882, 8.507059e+37
  %v884 = vand.u32 %v857, 2147483648
  %v885 = vor.u32 1.1754944e-38, %v884
  %v886 = vsel %vm883, %v885, %v881
  %v887 = vmul.f32 1.0, %v886
  %v889 = vrot.slane %v796, 5
  %v890 = vrot.slane %v796, 6
  %v893 = vmul.f32 %v827, %v889
  %v894 = vmul.f32 %v842, %v890
  %v895 = vadd.f32 %v152, %v893
  %v896 = vadd.f32 %v155, %v894
  %v897 = vtanh.pop %v895
  %v898 = vtanh.pop %v896
  %v899 = vsub.f32 1.0, %v872
  %v900 = vsub.f32 1.0, %v887
  %v901 = vmul.f32 %v899, %v897
  %v902 = vmul.f32 %v900, %v898
  %v903 = vrot.slane %v730, 7
  %v904 = vrot.slane %v731, 7
  %v907 = vmul.f32 %v872, %v903
  %v908 = vmul.f32 %v887, %v904
  %v909 = vadd.f32 %v901, %v907
  %v910 = vadd.f32 %v902, %v908
  %v913 = vrot.slane %v909, 3
  %v914 = vrot.slane %v910, 2
  %v915 = vsel %vm382, %v914, %v913
  %917 = vmatpush.msra.mxu0 %v202
  %918 = vmatpush.msra.mxu0 %v199
  %919 = vmatpush.msra.mxu0 %v196
  %920 = vmatpush.msra.mxu0 %v193
  %921 = vmatpush.msra.mxu0 %v190
  %922 = vmatpush.msra.mxu0 %v187
  %923 = vmatpush.msra.mxu0 %v184
  %924 = vmatpush.msra.mxu0 %v181
  %925 = vmatpush.msra.mxu0 %v178
  %926 = vmatpush.msra.mxu0 %v175
  %927 = vmatpush.msra.mxu0 %v172
  %928 = vmatpush.msra.mxu0 %v169
  %929 = vmatpush.msra.mxu0 %v166
  %930 = vmatpush.msra.mxu0 %v163
  %931 = vmatpush.msra.mxu0 %v160
  %932 = vmatpush.msra.mxu0 %v157
  %933 = vmatmul.f32.gmra.mxu0 %v915
  %v934 = vpop.f32.mrf.mxu0
  %v935 = vadd.f32 %v207, %v934
  %936 = vdwg.mxu0
  %937 = vmatpush.msra.mxu0 %v203
  %938 = vmatpush.msra.mxu0 %v200
  %939 = vmatpush.msra.mxu0 %v197
  %940 = vmatpush.msra.mxu0 %v194
  %941 = vmatpush.msra.mxu0 %v191
  %942 = vmatpush.msra.mxu0 %v188
  %943 = vmatpush.msra.mxu0 %v185
  %944 = vmatpush.msra.mxu0 %v182
  %945 = vmatpush.msra.mxu0 %v179
  %946 = vmatpush.msra.mxu0 %v176
  %947 = vmatpush.msra.mxu0 %v173
  %948 = vmatpush.msra.mxu0 %v170
  %949 = vmatpush.msra.mxu0 %v167
  %950 = vmatpush.msra.mxu0 %v164
  %951 = vmatpush.msra.mxu0 %v161
  %952 = vmatpush.msra.mxu0 %v158
  %953 = vmatmul.f32.gmra.mxu0 %v915
  %v954 = vpop.f32.mrf.mxu0
  %v955 = vadd.f32 %v208, %v954
  %956 = vdwg.mxu0
  %957 = vmatpush.msra.mxu0 %v204
  %958 = vmatpush.msra.mxu0 %v201
  %959 = vmatpush.msra.mxu0 %v198
  %960 = vmatpush.msra.mxu0 %v195
  %961 = vmatpush.msra.mxu0 %v192
  %962 = vmatpush.msra.mxu0 %v189
  %963 = vmatpush.msra.mxu0 %v186
  %964 = vmatpush.msra.mxu0 %v183
  %965 = vmatpush.msra.mxu0 %v180
  %966 = vmatpush.msra.mxu0 %v177
  %967 = vmatpush.msra.mxu0 %v174
  %968 = vmatpush.msra.mxu0 %v171
  %969 = vmatpush.msra.mxu0 %v168
  %970 = vmatpush.msra.mxu0 %v165
  %971 = vmatpush.msra.mxu0 %v162
  %972 = vmatpush.msra.mxu0 %v159
  %973 = vmatmul.f32.gmra.mxu0 %v915
  %v974 = vpop.f32.mrf.mxu0
  %v975 = vadd.f32 %v209, %v974
  %976 = vdwg.mxu0
  %v978 = vrot.slane %v935, 4
  %v979 = vrot.slane %v935, 5
  %v982 = vadd.f32 %v106, %v978
  %v983 = vadd.f32 %v109, %v979
  %v984 = vxor.u32 %v982, 2147483648
  %v985 = vxor.u32 %v983, 2147483648
  %v986 = vmul.f32 %v984, 1.442695
  %v987 = vpow.pop %v986
  %v988 = vmul.f32 %v985, 1.442695
  %v989 = vpow.pop %v988
  %v990 = vadd.f32 %v987, 1.0
  %v991 = vadd.f32 %v989, 1.0
  %v992 = vrcp.pop %v990
  %v993 = vmul.f32 %v990, %v992
  %v994 = vsub.f32 1.0, %v993
  %v995 = vmul.f32 %v992, %v994
  %v996 = vadd.f32 %v992, %v995
  %vm997 = vweird.f32 %v990
  %vm998 = vweird.f32 %v992
  %vm999 = vmor %vm997, %vm998
  %v1000 = vsel %vm999, %v992, %v996
  %v1001 = vand.u32 2147483647, %v990
  %vm1002 = vcmp.eq.f32.partialorder %v1001, 8.507059e+37
  %v1003 = vand.u32 %v990, 2147483648
  %v1004 = vor.u32 1.1754944e-38, %v1003
  %v1005 = vsel %vm1002, %v1004, %v1000
  %v1006 = vmul.f32 1.0, %v1005
  %v1007 = vrcp.pop %v991
  %v1008 = vmul.f32 %v991, %v1007
  %v1009 = vsub.f32 1.0, %v1008
  %v1010 = vmul.f32 %v1007, %v1009
  %v1011 = vadd.f32 %v1007, %v1010
  %vm1012 = vweird.f32 %v991
  %vm1013 = vweird.f32 %v1007
  %vm1014 = vmor %vm1012, %vm1013
  %v1015 = vsel %vm1014, %v1007, %v1011
  %v1016 = vand.u32 2147483647, %v991
  %vm1017 = vcmp.eq.f32.partialorder %v1016, 8.507059e+37
  %v1018 = vand.u32 %v991, 2147483648
  %v1019 = vor.u32 1.1754944e-38, %v1018
  %v1020 = vsel %vm1017, %v1019, %v1015
  %v1021 = vmul.f32 1.0, %v1020
  %v1023 = vrot.slane %v955, 4
  %v1024 = vrot.slane %v955, 5
  %v1027 = vadd.f32 %v129, %v1023
  %v1028 = vadd.f32 %v132, %v1024
  %v1029 = vxor.u32 %v1027, 2147483648
  %v1030 = vxor.u32 %v1028, 2147483648
  %v1031 = vmul.f32 %v1029, 1.442695
  %v1032 = vpow.pop %v1031
  %v1033 = vmul.f32 %v1030, 1.442695
  %v1034 = vpow.pop %v1033
  %v1035 = vadd.f32 %v1032, 1.0
  %v1036 = vadd.f32 %v1034, 1.0
  %v1037 = vrcp.pop %v1035
  %v1038 = vmul.f32 %v1035, %v1037
  %v1039 = vsub.f32 1.0, %v1038
  %v1040 = vmul.f32 %v1037, %v1039
  %v1041 = vadd.f32 %v1037, %v1040
  %vm1042 = vweird.f32 %v1035
  %vm1043 = vweird.f32 %v1037
  %vm1044 = vmor %vm1042, %vm1043
  %v1045 = vsel %vm1044, %v1037, %v1041
  %v1046 = vand.u32 2147483647, %v1035
  %vm1047 = vcmp.eq.f32.partialorder %v1046, 8.507059e+37
  %v1048 = vand.u32 %v1035, 2147483648
  %v1049 = vor.u32 1.1754944e-38, %v1048
  %v1050 = vsel %vm1047, %v1049, %v1045
  %v1051 = vmul.f32 1.0, %v1050
  %v1052 = vrcp.pop %v1036
  %v1053 = vmul.f32 %v1036, %v1052
  %v1054 = vsub.f32 1.0, %v1053
  %v1055 = vmul.f32 %v1052, %v1054
  %v1056 = vadd.f32 %v1052, %v1055
  %vm1057 = vweird.f32 %v1036
  %vm1058 = vweird.f32 %v1052
  %vm1059 = vmor %vm1057, %vm1058
  %v1060 = vsel %vm1059, %v1052, %v1056
  %v1061 = vand.u32 2147483647, %v1036
  %vm1062 = vcmp.eq.f32.partialorder %v1061, 8.507059e+37
  %v1063 = vand.u32 %v1036, 2147483648
  %v1064 = vor.u32 1.1754944e-38, %v1063
  %v1065 = vsel %vm1062, %v1064, %v1060
  %v1066 = vmul.f32 1.0, %v1065
  %v1068 = vrot.slane %v975, 4
  %v1069 = vrot.slane %v975, 5
  %v1072 = vmul.f32 %v1006, %v1068
  %v1073 = vmul.f32 %v1021, %v1069
  %v1074 = vadd.f32 %v152, %v1072
  %v1075 = vadd.f32 %v155, %v1073
  %v1076 = vtanh.pop %v1074
  %v1077 = vtanh.pop %v1075
  %v1078 = vsub.f32 1.0, %v1051
  %v1079 = vsub.f32 1.0, %v1066
  %v1080 = vmul.f32 %v1078, %v1076
  %v1081 = vmul.f32 %v1079, %v1077
  %v1082 = vrot.slane %v909, 7
  %v1083 = vrot.slane %v910, 7
  %v1086 = vmul.f32 %v1051, %v1082
  %v1087 = vmul.f32 %v1066, %v1083
  %v1088 = vadd.f32 %v1080, %v1086
  %v1089 = vadd.f32 %v1081, %v1087
  %v1092 = vrot.slane %v1088, 4
  %v1093 = vrot.slane %v1089, 3
  %v1094 = vsel %vm382, %v1093, %v1092
  %1096 = vmatpush.msra.mxu0 %v202
  %1097 = vmatpush.msra.mxu0 %v199
  %1098 = vmatpush.msra.mxu0 %v196
  %1099 = vmatpush.msra.mxu0 %v193
  %1100 = vmatpush.msra.mxu0 %v190
  %1101 = vmatpush.msra.mxu0 %v187
  %1102 = vmatpush.msra.mxu0 %v184
  %1103 = vmatpush.msra.mxu0 %v181
  %1104 = vmatpush.msra.mxu0 %v178
  %1105 = vmatpush.msra.mxu0 %v175
  %1106 = vmatpush.msra.mxu0 %v172
  %1107 = vmatpush.msra.mxu0 %v169
  %1108 = vmatpush.msra.mxu0 %v166
  %1109 = vmatpush.msra.mxu0 %v163
  %1110 = vmatpush.msra.mxu0 %v160
  %1111 = vmatpush.msra.mxu0 %v157
  %1112 = vmatmul.f32.gmra.mxu0 %v1094
  %v1113 = vpop.f32.mrf.mxu0
  %v1114 = vadd.f32 %v207, %v1113
  %1115 = vdwg.mxu0
  %1116 = vmatpush.msra.mxu0 %v203
  %1117 = vmatpush.msra.mxu0 %v200
  %1118 = vmatpush.msra.mxu0 %v197
  %1119 = vmatpush.msra.mxu0 %v194
  %1120 = vmatpush.msra.mxu0 %v191
  %1121 = vmatpush.msra.mxu0 %v188
  %1122 = vmatpush.msra.mxu0 %v185
  %1123 = vmatpush.msra.mxu0 %v182
  %1124 = vmatpush.msra.mxu0 %v179
  %1125 = vmatpush.msra.mxu0 %v176
  %1126 = vmatpush.msra.mxu0 %v173
  %1127 = vmatpush.msra.mxu0 %v170
  %1128 = vmatpush.msra.mxu0 %v167
  %1129 = vmatpush.msra.mxu0 %v164
  %1130 = vmatpush.msra.mxu0 %v161
  %1131 = vmatpush.msra.mxu0 %v158
  %1132 = vmatmul.f32.gmra.mxu0 %v1094
  %v1133 = vpop.f32.mrf.mxu0
  %v1134 = vadd.f32 %v208, %v1133
  %1135 = vdwg.mxu0
  %1136 = vmatpush.msra.mxu0 %v204
  %1137 = vmatpush.msra.mxu0 %v201
  %1138 = vmatpush.msra.mxu0 %v198
  %1139 = vmatpush.msra.mxu0 %v195
  %1140 = vmatpush.msra.mxu0 %v192
  %1141 = vmatpush.msra.mxu0 %v189
  %1142 = vmatpush.msra.mxu0 %v186
  %1143 = vmatpush.msra.mxu0 %v183
  %1144 = vmatpush.msra.mxu0 %v180
  %1145 = vmatpush.msra.mxu0 %v177
  %1146 = vmatpush.msra.mxu0 %v174
  %1147 = vmatpush.msra.mxu0 %v171
  %1148 = vmatpush.msra.mxu0 %v168
  %1149 = vmatpush.msra.mxu0 %v165
  %1150 = vmatpush.msra.mxu0 %v162
  %1151 = vmatpush.msra.mxu0 %v159
  %1152 = vmatmul.f32.gmra.mxu0 %v1094
  %v1153 = vpop.f32.mrf.mxu0
  %v1154 = vadd.f32 %v209, %v1153
  %1155 = vdwg.mxu0
  %v1157 = vrot.slane %v1114, 3
  %v1158 = vrot.slane %v1114, 4
  %v1161 = vadd.f32 %v106, %v1157
  %v1162 = vadd.f32 %v109, %v1158
  %v1163 = vxor.u32 %v1161, 2147483648
  %v1164 = vxor.u32 %v1162, 2147483648
  %v1165 = vmul.f32 %v1163, 1.442695
  %v1166 = vpow.pop %v1165
  %v1167 = vmul.f32 %v1164, 1.442695
  %v1168 = vpow.pop %v1167
  %v1169 = vadd.f32 %v1166, 1.0
  %v1170 = vadd.f32 %v1168, 1.0
  %v1171 = vrcp.pop %v1169
  %v1172 = vmul.f32 %v1169, %v1171
  %v1173 = vsub.f32 1.0, %v1172
  %v1174 = vmul.f32 %v1171, %v1173
  %v1175 = vadd.f32 %v1171, %v1174
  %vm1176 = vweird.f32 %v1169
  %vm1177 = vweird.f32 %v1171
  %vm1178 = vmor %vm1176, %vm1177
  %v1179 = vsel %vm1178, %v1171, %v1175
  %v1180 = vand.u32 2147483647, %v1169
  %vm1181 = vcmp.eq.f32.partialorder %v1180, 8.507059e+37
  %v1182 = vand.u32 %v1169, 2147483648
  %v1183 = vor.u32 1.1754944e-38, %v1182
  %v1184 = vsel %vm1181, %v1183, %v1179
  %v1185 = vmul.f32 1.0, %v1184
  %v1186 = vrcp.pop %v1170
  %v1187 = vmul.f32 %v1170, %v1186
  %v1188 = vsub.f32 1.0, %v1187
  %v1189 = vmul.f32 %v1186, %v1188
  %v1190 = vadd.f32 %v1186, %v1189
  %vm1191 = vweird.f32 %v1170
  %vm1192 = vweird.f32 %v1186
  %vm1193 = vmor %vm1191, %vm1192
  %v1194 = vsel %vm1193, %v1186, %v1190
  %v1195 = vand.u32 2147483647, %v1170
  %vm1196 = vcmp.eq.f32.partialorder %v1195, 8.507059e+37
  %v1197 = vand.u32 %v1170, 2147483648
  %v1198 = vor.u32 1.1754944e-38, %v1197
  %v1199 = vsel %vm1196, %v1198, %v1194
  %v1200 = vmul.f32 1.0, %v1199
  %v1202 = vrot.slane %v1134, 3
  %v1203 = vrot.slane %v1134, 4
  %v1206 = vadd.f32 %v129, %v1202
  %v1207 = vadd.f32 %v132, %v1203
  %v1208 = vxor.u32 %v1206, 2147483648
  %v1209 = vxor.u32 %v1207, 2147483648
  %v1210 = vmul.f32 %v1208, 1.442695
  %v1211 = vpow.pop %v1210
  %v1212 = vmul.f32 %v1209, 1.442695
  %v1213 = vpow.pop %v1212
  %v1214 = vadd.f32 %v1211, 1.0
  %v1215 = vadd.f32 %v1213, 1.0
  %v1216 = vrcp.pop %v1214
  %v1217 = vmul.f32 %v1214, %v1216
  %v1218 = vsub.f32 1.0, %v1217
  %v1219 = vmul.f32 %v1216, %v1218
  %v1220 = vadd.f32 %v1216, %v1219
  %vm1221 = vweird.f32 %v1214
  %vm1222 = vweird.f32 %v1216
  %vm1223 = vmor %vm1221, %vm1222
  %v1224 = vsel %vm1223, %v1216, %v1220
  %v1225 = vand.u32 2147483647, %v1214
  %vm1226 = vcmp.eq.f32.partialorder %v1225, 8.507059e+37
  %v1227 = vand.u32 %v1214, 2147483648
  %v1228 = vor.u32 1.1754944e-38, %v1227
  %v1229 = vsel %vm1226, %v1228, %v1224
  %v1230 = vmul.f32 1.0, %v1229
  %v1231 = vrcp.pop %v1215
  %v1232 = vmul.f32 %v1215, %v1231
  %v1233 = vsub.f32 1.0, %v1232
  %v1234 = vmul.f32 %v1231, %v1233
  %v1235 = vadd.f32 %v1231, %v1234
  %vm1236 = vweird.f32 %v1215
  %vm1237 = vweird.f32 %v1231
  %vm1238 = vmor %vm1236, %vm1237
  %v1239 = vsel %vm1238, %v1231, %v1235
  %v1240 = vand.u32 2147483647, %v1215
  %vm1241 = vcmp.eq.f32.partialorder %v1240, 8.507059e+37
  %v1242 = vand.u32 %v1215, 2147483648
  %v1243 = vor.u32 1.1754944e-38, %v1242
  %v1244 = vsel %vm1241, %v1243, %v1239
  %v1245 = vmul.f32 1.0, %v1244
  %v1247 = vrot.slane %v1154, 3
  %v1248 = vrot.slane %v1154, 4
  %v1251 = vmul.f32 %v1185, %v1247
  %v1252 = vmul.f32 %v1200, %v1248
  %v1253 = vadd.f32 %v152, %v1251
  %v1254 = vadd.f32 %v155, %v1252
  %v1255 = vtanh.pop %v1253
  %v1256 = vtanh.pop %v1254
  %v1257 = vsub.f32 1.0, %v1230
  %v1258 = vsub.f32 1.0, %v1245
  %v1259 = vmul.f32 %v1257, %v1255
  %v1260 = vmul.f32 %v1258, %v1256
  %v1261 = vrot.slane %v1088, 7
  %v1262 = vrot.slane %v1089, 7
  %v1265 = vmul.f32 %v1230, %v1261
  %v1266 = vmul.f32 %v1245, %v1262
  %v1267 = vadd.f32 %v1259, %v1265
  %v1268 = vadd.f32 %v1260, %v1266
  %v1271 = vrot.slane %v1267, 5
  %v1272 = vrot.slane %v1268, 4
  %v1273 = vsel %vm382, %v1272, %v1271
  %1275 = vmatpush.msra.mxu0 %v202
  %1276 = vmatpush.msra.mxu0 %v199
  %1277 = vmatpush.msra.mxu0 %v196
  %1278 = vmatpush.msra.mxu0 %v193
  %1279 = vmatpush.msra.mxu0 %v190
  %1280 = vmatpush.msra.mxu0 %v187
  %1281 = vmatpush.msra.mxu0 %v184
  %1282 = vmatpush.msra.mxu0 %v181
  %1283 = vmatpush.msra.mxu0 %v178
  %1284 = vmatpush.msra.mxu0 %v175
  %1285 = vmatpush.msra.mxu0 %v172
  %1286 = vmatpush.msra.mxu0 %v169
  %1287 = vmatpush.msra.mxu0 %v166
  %1288 = vmatpush.msra.mxu0 %v163
  %1289 = vmatpush.msra.mxu0 %v160
  %1290 = vmatpush.msra.mxu0 %v157
  %1291 = vmatmul.f32.gmra.mxu0 %v1273
  %v1292 = vpop.f32.mrf.mxu0
  %v1293 = vadd.f32 %v207, %v1292
  %1294 = vdwg.mxu0
  %1295 = vmatpush.msra.mxu0 %v203
  %1296 = vmatpush.msra.mxu0 %v200
  %1297 = vmatpush.msra.mxu0 %v197
  %1298 = vmatpush.msra.mxu0 %v194
  %1299 = vmatpush.msra.mxu0 %v191
  %1300 = vmatpush.msra.mxu0 %v188
  %1301 = vmatpush.msra.mxu0 %v185
  %1302 = vmatpush.msra.mxu0 %v182
  %1303 = vmatpush.msra.mxu0 %v179
  %1304 = vmatpush.msra.mxu0 %v176
  %1305 = vmatpush.msra.mxu0 %v173
  %1306 = vmatpush.msra.mxu0 %v170
  %1307 = vmatpush.msra.mxu0 %v167
  %1308 = vmatpush.msra.mxu0 %v164
  %1309 = vmatpush.msra.mxu0 %v161
  %1310 = vmatpush.msra.mxu0 %v158
  %1311 = vmatmul.f32.gmra.mxu0 %v1273
  %v1312 = vpop.f32.mrf.mxu0
  %v1313 = vadd.f32 %v208, %v1312
  %1314 = vdwg.mxu0
  %1315 = vmatpush.msra.mxu0 %v204
  %1316 = vmatpush.msra.mxu0 %v201
  %1317 = vmatpush.msra.mxu0 %v198
  %1318 = vmatpush.msra.mxu0 %v195
  %1319 = vmatpush.msra.mxu0 %v192
  %1320 = vmatpush.msra.mxu0 %v189
  %1321 = vmatpush.msra.mxu0 %v186
  %1322 = vmatpush.msra.mxu0 %v183
  %1323 = vmatpush.msra.mxu0 %v180
  %1324 = vmatpush.msra.mxu0 %v177
  %1325 = vmatpush.msra.mxu0 %v174
  %1326 = vmatpush.msra.mxu0 %v171
  %1327 = vmatpush.msra.mxu0 %v168
  %1328 = vmatpush.msra.mxu0 %v165
  %1329 = vmatpush.msra.mxu0 %v162
  %1330 = vmatpush.msra.mxu0 %v159
  %1331 = vmatmul.f32.gmra.mxu0 %v1273
  %v1332 = vpop.f32.mrf.mxu0
  %v1333 = vadd.f32 %v209, %v1332
  %1334 = vdwg.mxu0
  %v1336 = vrot.slane %v1293, 2
  %v1337 = vrot.slane %v1293, 3
  %v1340 = vadd.f32 %v106, %v1336
  %v1341 = vadd.f32 %v109, %v1337
  %v1342 = vxor.u32 %v1340, 2147483648
  %v1343 = vxor.u32 %v1341, 2147483648
  %v1344 = vmul.f32 %v1342, 1.442695
  %v1345 = vpow.pop %v1344
  %v1346 = vmul.f32 %v1343, 1.442695
  %v1347 = vpow.pop %v1346
  %v1348 = vadd.f32 %v1345, 1.0
  %v1349 = vadd.f32 %v1347, 1.0
  %v1350 = vrcp.pop %v1348
  %v1351 = vmul.f32 %v1348, %v1350
  %v1352 = vsub.f32 1.0, %v1351
  %v1353 = vmul.f32 %v1350, %v1352
  %v1354 = vadd.f32 %v1350, %v1353
  %vm1355 = vweird.f32 %v1348
  %vm1356 = vweird.f32 %v1350
  %vm1357 = vmor %vm1355, %vm1356
  %v1358 = vsel %vm1357, %v1350, %v1354
  %v1359 = vand.u32 2147483647, %v1348
  %vm1360 = vcmp.eq.f32.partialorder %v1359, 8.507059e+37
  %v1361 = vand.u32 %v1348, 2147483648
  %v1362 = vor.u32 1.1754944e-38, %v1361
  %v1363 = vsel %vm1360, %v1362, %v1358
  %v1364 = vmul.f32 1.0, %v1363
  %v1365 = vrcp.pop %v1349
  %v1366 = vmul.f32 %v1349, %v1365
  %v1367 = vsub.f32 1.0, %v1366
  %v1368 = vmul.f32 %v1365, %v1367
  %v1369 = vadd.f32 %v1365, %v1368
  %vm1370 = vweird.f32 %v1349
  %vm1371 = vweird.f32 %v1365
  %vm1372 = vmor %vm1370, %vm1371
  %v1373 = vsel %vm1372, %v1365, %v1369
  %v1374 = vand.u32 2147483647, %v1349
  %vm1375 = vcmp.eq.f32.partialorder %v1374, 8.507059e+37
  %v1376 = vand.u32 %v1349, 2147483648
  %v1377 = vor.u32 1.1754944e-38, %v1376
  %v1378 = vsel %vm1375, %v1377, %v1373
  %v1379 = vmul.f32 1.0, %v1378
  %v1381 = vrot.slane %v1313, 2
  %v1382 = vrot.slane %v1313, 3
  %v1385 = vadd.f32 %v129, %v1381
  %v1386 = vadd.f32 %v132, %v1382
  %v1387 = vxor.u32 %v1385, 2147483648
  %v1388 = vxor.u32 %v1386, 2147483648
  %v1389 = vmul.f32 %v1387, 1.442695
  %v1390 = vpow.pop %v1389
  %v1391 = vmul.f32 %v1388, 1.442695
  %v1392 = vpow.pop %v1391
  %v1393 = vadd.f32 %v1390, 1.0
  %v1394 = vadd.f32 %v1392, 1.0
  %v1395 = vrcp.pop %v1393
  %v1396 = vmul.f32 %v1393, %v1395
  %v1397 = vsub.f32 1.0, %v1396
  %v1398 = vmul.f32 %v1395, %v1397
  %v1399 = vadd.f32 %v1395, %v1398
  %vm1400 = vweird.f32 %v1393
  %vm1401 = vweird.f32 %v1395
  %vm1402 = vmor %vm1400, %vm1401
  %v1403 = vsel %vm1402, %v1395, %v1399
  %v1404 = vand.u32 2147483647, %v1393
  %vm1405 = vcmp.eq.f32.partialorder %v1404, 8.507059e+37
  %v1406 = vand.u32 %v1393, 2147483648
  %v1407 = vor.u32 1.1754944e-38, %v1406
  %v1408 = vsel %vm1405, %v1407, %v1403
  %v1409 = vmul.f32 1.0, %v1408
  %v1410 = vrcp.pop %v1394
  %v1411 = vmul.f32 %v1394, %v1410
  %v1412 = vsub.f32 1.0, %v1411
  %v1413 = vmul.f32 %v1410, %v1412
  %v1414 = vadd.f32 %v1410, %v1413
  %vm1415 = vweird.f32 %v1394
  %vm1416 = vweird.f32 %v1410
  %vm1417 = vmor %vm1415, %vm1416
  %v1418 = vsel %vm1417, %v1410, %v1414
  %v1419 = vand.u32 2147483647, %v1394
  %vm1420 = vcmp.eq.f32.partialorder %v1419, 8.507059e+37
  %v1421 = vand.u32 %v1394, 2147483648
  %v1422 = vor.u32 1.1754944e-38, %v1421
  %v1423 = vsel %vm1420, %v1422, %v1418
  %v1424 = vmul.f32 1.0, %v1423
  %v1426 = vrot.slane %v1333, 2
  %v1427 = vrot.slane %v1333, 3
  %v1430 = vmul.f32 %v1364, %v1426
  %v1431 = vmul.f32 %v1379, %v1427
  %v1432 = vadd.f32 %v152, %v1430
  %v1433 = vadd.f32 %v155, %v1431
  %v1434 = vtanh.pop %v1432
  %v1435 = vtanh.pop %v1433
  %v1436 = vsub.f32 1.0, %v1409
  %v1437 = vsub.f32 1.0, %v1424
  %v1438 = vmul.f32 %v1436, %v1434
  %v1439 = vmul.f32 %v1437, %v1435
  %v1440 = vrot.slane %v1267, 7
  %v1441 = vrot.slane %v1268, 7
  %v1444 = vmul.f32 %v1409, %v1440
  %v1445 = vmul.f32 %v1424, %v1441
  %v1446 = vadd.f32 %v1438, %v1444
  %v1447 = vadd.f32 %v1439, %v1445
  %v1450 = vrot.slane %v1446, 6
  %v1451 = vrot.slane %v1447, 5
  %v1452 = vsel %vm382, %v1451, %v1450
  %1454 = vmatpush.msra.mxu0 %v202
  %1455 = vmatpush.msra.mxu0 %v199
  %1456 = vmatpush.msra.mxu0 %v196
  %1457 = vmatpush.msra.mxu0 %v193
  %1458 = vmatpush.msra.mxu0 %v190
  %1459 = vmatpush.msra.mxu0 %v187
  %1460 = vmatpush.msra.mxu0 %v184
  %1461 = vmatpush.msra.mxu0 %v181
  %1462 = vmatpush.msra.mxu0 %v178
  %1463 = vmatpush.msra.mxu0 %v175
  %1464 = vmatpush.msra.mxu0 %v172
  %1465 = vmatpush.msra.mxu0 %v169
  %1466 = vmatpush.msra.mxu0 %v166
  %1467 = vmatpush.msra.mxu0 %v163
  %1468 = vmatpush.msra.mxu0 %v160
  %1469 = vmatpush.msra.mxu0 %v157
  %1470 = vmatmul.f32.gmra.mxu0 %v1452
  %v1471 = vpop.f32.mrf.mxu0
  %v1472 = vadd.f32 %v207, %v1471
  %1473 = vdwg.mxu0
  %1474 = vmatpush.msra.mxu0 %v203
  %1475 = vmatpush.msra.mxu0 %v200
  %1476 = vmatpush.msra.mxu0 %v197
  %1477 = vmatpush.msra.mxu0 %v194
  %1478 = vmatpush.msra.mxu0 %v191
  %1479 = vmatpush.msra.mxu0 %v188
  %1480 = vmatpush.msra.mxu0 %v185
  %1481 = vmatpush.msra.mxu0 %v182
  %1482 = vmatpush.msra.mxu0 %v179
  %1483 = vmatpush.msra.mxu0 %v176
  %1484 = vmatpush.msra.mxu0 %v173
  %1485 = vmatpush.msra.mxu0 %v170
  %1486 = vmatpush.msra.mxu0 %v167
  %1487 = vmatpush.msra.mxu0 %v164
  %1488 = vmatpush.msra.mxu0 %v161
  %1489 = vmatpush.msra.mxu0 %v158
  %1490 = vmatmul.f32.gmra.mxu0 %v1452
  %v1491 = vpop.f32.mrf.mxu0
  %v1492 = vadd.f32 %v208, %v1491
  %1493 = vdwg.mxu0
  %1494 = vmatpush.msra.mxu0 %v204
  %1495 = vmatpush.msra.mxu0 %v201
  %1496 = vmatpush.msra.mxu0 %v198
  %1497 = vmatpush.msra.mxu0 %v195
  %1498 = vmatpush.msra.mxu0 %v192
  %1499 = vmatpush.msra.mxu0 %v189
  %1500 = vmatpush.msra.mxu0 %v186
  %1501 = vmatpush.msra.mxu0 %v183
  %1502 = vmatpush.msra.mxu0 %v180
  %1503 = vmatpush.msra.mxu0 %v177
  %1504 = vmatpush.msra.mxu0 %v174
  %1505 = vmatpush.msra.mxu0 %v171
  %1506 = vmatpush.msra.mxu0 %v168
  %1507 = vmatpush.msra.mxu0 %v165
  %1508 = vmatpush.msra.mxu0 %v162
  %1509 = vmatpush.msra.mxu0 %v159
  %1510 = vmatmul.f32.gmra.mxu0 %v1452
  %v1511 = vpop.f32.mrf.mxu0
  %v1512 = vadd.f32 %v209, %v1511
  %1513 = vdwg.mxu0
  %v1515 = vrot.slane %v1472, 1
  %v1516 = vrot.slane %v1472, 2
  %v1519 = vadd.f32 %v106, %v1515
  %v1520 = vadd.f32 %v109, %v1516
  %v1521 = vxor.u32 %v1519, 2147483648
  %v1522 = vxor.u32 %v1520, 2147483648
  %v1523 = vmul.f32 %v1521, 1.442695
  %v1524 = vpow.pop %v1523
  %v1525 = vmul.f32 %v1522, 1.442695
  %v1526 = vpow.pop %v1525
  %v1527 = vadd.f32 %v1524, 1.0
  %v1528 = vadd.f32 %v1526, 1.0
  %v1529 = vrcp.pop %v1527
  %v1530 = vmul.f32 %v1527, %v1529
  %v1531 = vsub.f32 1.0, %v1530
  %v1532 = vmul.f32 %v1529, %v1531
  %v1533 = vadd.f32 %v1529, %v1532
  %vm1534 = vweird.f32 %v1527
  %vm1535 = vweird.f32 %v1529
  %vm1536 = vmor %vm1534, %vm1535
  %v1537 = vsel %vm1536, %v1529, %v1533
  %v1538 = vand.u32 2147483647, %v1527
  %vm1539 = vcmp.eq.f32.partialorder %v1538, 8.507059e+37
  %v1540 = vand.u32 %v1527, 2147483648
  %v1541 = vor.u32 1.1754944e-38, %v1540
  %v1542 = vsel %vm1539, %v1541, %v1537
  %v1543 = vmul.f32 1.0, %v1542
  %v1544 = vrcp.pop %v1528
  %v1545 = vmul.f32 %v1528, %v1544
  %v1546 = vsub.f32 1.0, %v1545
  %v1547 = vmul.f32 %v1544, %v1546
  %v1548 = vadd.f32 %v1544, %v1547
  %vm1549 = vweird.f32 %v1528
  %vm1550 = vweird.f32 %v1544
  %vm1551 = vmor %vm1549, %vm1550
  %v1552 = vsel %vm1551, %v1544, %v1548
  %v1553 = vand.u32 2147483647, %v1528
  %vm1554 = vcmp.eq.f32.partialorder %v1553, 8.507059e+37
  %v1555 = vand.u32 %v1528, 2147483648
  %v1556 = vor.u32 1.1754944e-38, %v1555
  %v1557 = vsel %vm1554, %v1556, %v1552
  %v1558 = vmul.f32 1.0, %v1557
  %v1560 = vrot.slane %v1492, 1
  %v1561 = vrot.slane %v1492, 2
  %v1564 = vadd.f32 %v129, %v1560
  %v1565 = vadd.f32 %v132, %v1561
  %v1566 = vxor.u32 %v1564, 2147483648
  %v1567 = vxor.u32 %v1565, 2147483648
  %v1568 = vmul.f32 %v1566, 1.442695
  %v1569 = vpow.pop %v1568
  %v1570 = vmul.f32 %v1567, 1.442695
  %v1571 = vpow.pop %v1570
  %v1572 = vadd.f32 %v1569, 1.0
  %v1573 = vadd.f32 %v1571, 1.0
  %v1574 = vrcp.pop %v1572
  %v1575 = vmul.f32 %v1572, %v1574
  %v1576 = vsub.f32 1.0, %v1575
  %v1577 = vmul.f32 %v1574, %v1576
  %v1578 = vadd.f32 %v1574, %v1577
  %vm1579 = vweird.f32 %v1572
  %vm1580 = vweird.f32 %v1574
  %vm1581 = vmor %vm1579, %vm1580
  %v1582 = vsel %vm1581, %v1574, %v1578
  %v1583 = vand.u32 2147483647, %v1572
  %vm1584 = vcmp.eq.f32.partialorder %v1583, 8.507059e+37
  %v1585 = vand.u32 %v1572, 2147483648
  %v1586 = vor.u32 1.1754944e-38, %v1585
  %v1587 = vsel %vm1584, %v1586, %v1582
  %v1588 = vmul.f32 1.0, %v1587
  %v1589 = vrcp.pop %v1573
  %v1590 = vmul.f32 %v1573, %v1589
  %v1591 = vsub.f32 1.0, %v1590
  %v1592 = vmul.f32 %v1589, %v1591
  %v1593 = vadd.f32 %v1589, %v1592
  %vm1594 = vweird.f32 %v1573
  %vm1595 = vweird.f32 %v1589
  %vm1596 = vmor %vm1594, %vm1595
  %v1597 = vsel %vm1596, %v1589, %v1593
  %v1598 = vand.u32 2147483647, %v1573
  %vm1599 = vcmp.eq.f32.partialorder %v1598, 8.507059e+37
  %v1600 = vand.u32 %v1573, 2147483648
  %v1601 = vor.u32 1.1754944e-38, %v1600
  %v1602 = vsel %vm1599, %v1601, %v1597
  %v1603 = vmul.f32 1.0, %v1602
  %v1605 = vrot.slane %v1512, 1
  %v1606 = vrot.slane %v1512, 2
  %v1609 = vmul.f32 %v1543, %v1605
  %v1610 = vmul.f32 %v1558, %v1606
  %v1611 = vadd.f32 %v152, %v1609
  %v1612 = vadd.f32 %v155, %v1610
  %v1613 = vtanh.pop %v1611
  %v1614 = vtanh.pop %v1612
  %v1615 = vsub.f32 1.0, %v1588
  %v1616 = vsub.f32 1.0, %v1603
  %v1617 = vmul.f32 %v1615, %v1613
  %v1618 = vmul.f32 %v1616, %v1614
  %v1619 = vrot.slane %v1446, 7
  %v1620 = vrot.slane %v1447, 7
  %v1623 = vmul.f32 %v1588, %v1619
  %v1624 = vmul.f32 %v1603, %v1620
  %v1625 = vadd.f32 %v1617, %v1623
  %v1626 = vadd.f32 %v1618, %v1624
  %vm1627 = vcmask 1040384
  %v1628 = vsel %vm1627, %v377, %v552
  %v1629 = vsel %vm1627, %v378, %v553
  %vm1630 = vcmask 1041408
  %v1631 = vsel %vm1630, %v1628, %v730
  %v1632 = vsel %vm1630, %v1629, %v731
  %vm1633 = vcmask 1042432
  %v1634 = vsel %vm1633, %v1631, %v909
  %v1635 = vsel %vm1633, %v1632, %v910
  %vm1636 = vcmask 1043456
  %v1637 = vsel %vm1636, %v1634, %v1088
  %v1638 = vsel %vm1636, %v1635, %v1089
  %vm1639 = vcmask 1044480
  %v1640 = vsel %vm1639, %v1637, %v1267
  %v1641 = vsel %vm1639, %v1638, %v1268
  %vm1642 = vcmask 1045504
  %v1643 = vsel %vm1642, %v1640, %v1446
  %v1644 = vsel %vm1642, %v1641, %v1447
  %vm1645 = vcmask 1046528
  %v1646 = vsel %vm1645, %v1643, %v1625
  %v1647 = vsel %vm1645, %v1644, %v1626
  %v1648 = vld [vmem:[%s6] sm:$0x1]
  %v1650 = vperm.slane %v1648, 0
  %v1652 = vmul.f32 %v1646, %v1650
  %v1653 = vmul.f32 %v1647, %v1650
  %1654 = vadd.xlane.f32.xlu0 %v1652
  %v1655 = vpop.xlane.xlu0 %1654
  %1656 = vadd.xlane.f32.xlu0 %v1653
  %v1657 = vpop.xlane.xlu0 %1656
  %v1660 = vlaneseq
  %v1661 = vand.u32 %v1660, 127
  %v1662 = vperm.slane %v1655, %v1661
  %v1663 = vperm.slane %v1657, %v1661
  %v1664 = vsel %vm382, %v1663, %v1662
  %vm1666 = vcmask 58368
  %v1667 = vsel %vm1666, %v1664, -inf
  %1668 = vmax.xlane.f32.xlu0 %v1667
  %v1669 = vpop.xlane.xlu0 %1668
  %v1671 = vperm.slane %v1669, 0
  %v1672 = vperm.slane %v1669, 1
  %v1675 = vsub.f32 %v1655, %v1671
  %v1676 = vsub.f32 %v1657, %v1672
  %v1677 = vmul.f32 %v1675, 1.442695
  %v1678 = vpow.pop %v1677
  %v1679 = vmul.f32 %v1676, 1.442695
  %v1680 = vpow.pop %v1679
  %1683 = vset.pattern.permute.xlu0 0
  %1684 = vperm.xlu0 %1683, %v1678
  %v1685 = vpop.permute.xlu0 %1684
  %1686 = vset.pattern.permute.xlu0 0
  %1687 = vperm.xlu0 %1686, %v1680
  %v1688 = vpop.permute.xlu0 %1687
  %v1689 = vperm.slane %v1685, %v1661
  %v1690 = vperm.slane %v1688, %v1661
  %v1691 = vsel %vm382, %v1690, %v1689
  %v1693 = vsel %vm1666, %v1691, 0.0
  %1694 = vadd.xlane.f32.xlu0 %v1693
  %v1695 = vpop.xlane.xlu0 %1694
  %v1696 = vrcp.pop %v1695
  %v1697 = vmul.f32 %v1695, %v1696
  %v1698 = vsub.f32 1.0, %v1697
  %v1699 = vmul.f32 %v1696, %v1698
  %v1700 = vadd.f32 %v1696, %v1699
  %vm1701 = vweird.f32 %v1695
  %vm1702 = vweird.f32 %v1696
  %vm1703 = vmor %vm1701, %vm1702
  %v1704 = vsel %vm1703, %v1696, %v1700
  %v1705 = vand.u32 2147483647, %v1695
  %vm1706 = vcmp.eq.f32.partialorder %v1705, 8.507059e+37
  %v1707 = vand.u32 %v1695, 2147483648
  %v1708 = vor.u32 1.1754944e-38, %v1707
  %v1709 = vsel %vm1706, %v1708, %v1704
  %v1711 = vperm.slane %v1709, 0
  %v1712 = vperm.slane %v1709, 1
  %v1715 = vmul.f32 %v1678, %v1711
  %v1716 = vmul.f32 %v1680, %v1712
  %1718 = vset.pattern.permute.xlu0 0
  %1719 = vperm.xlu0 %1718, %v1715
  %v1720 = vpop.permute.xlu0 %1719
  %1723 = vset.pattern.permute.xlu0 0
  %1724 = vperm.xlu0 %1723, %v1716
  %v1725 = vpop.permute.xlu0 %1724
  %v1727 = vmul.f32 %v1720, %v1646
  %v1728 = vmul.f32 %v1725, %v1647
  %v1729 = vrot.slane %v1727, 4
  %v1730 = vadd.f32 %v1727, %v1729
  %v1731 = vrot.slane %v1730, 2
  %v1732 = vadd.f32 %v1730, %v1731
  %v1733 = vrot.slane %v1732, 1
  %v1734 = vadd.f32 %v1732, %v1733
  %v1735 = vrot.slane %v1728, 4
  %v1736 = vadd.f32 %v1728, %v1735
  %v1737 = vrot.slane %v1736, 2
  %v1738 = vadd.f32 %v1736, %v1737
  %v1739 = vrot.slane %v1738, 1
  %v1740 = vadd.f32 %v1738, %v1739
  %v1741 = vld [vmem:[%s1] sm:$0x1f]
  %v1742 = vld [vmem:[%s1 + $0x8] sm:$0x1f]
  %v1745 = vrot.slane %v1741, 1
  %v1746 = vrot.slane %v1741, 2
  %v1747 = vrot.slane %v1741, 3
  %v1748 = vrot.slane %v1741, 4
  %v1749 = vrot.slane %v1742, 1
  %v1750 = vrot.slane %v1742, 2
  %v1751 = vrot.slane %v1742, 3
  %v1752 = vrot.slane %v1742, 4
  %v1753 = vld [vmem:[%s7] sm:$0xff]
  %v1754 = vld [vmem:[%s7 + $0x8] sm:$0xff]
  %v1755 = vld [vmem:[%s7 + $0x10] sm:$0xff]
  %v1756 = vld [vmem:[%s7 + $0x18] sm:$0xff]
  %v1757 = vld [vmem:[%s7 + $0x20] sm:$0xff]
  %v1758 = vld [vmem:[%s7 + $0x28] sm:$0xff]
  %1759 = vst [vmem:[#allocation1] ss:$9 sm:$0xff] %v1741
  %s1760 = scalar_lea.vmem [#allocation1], 1
  %1761 = vst [vmem:[%s1760] ss:$9 sm:$0xff] %v1745
  %s1762 = scalar_lea.vmem [#allocation1], 2
  %1763 = vst [vmem:[%s1762] ss:$9 sm:$0xff] %v1746
  %s1764 = scalar_lea.vmem [#allocation1], 3
  %1765 = vst [vmem:[%s1764] ss:$9 sm:$0xff] %v1747
  %s1766 = scalar_lea.vmem [#allocation1], 4
  %1767 = vst [vmem:[%s1766] ss:$9 sm:$0xff] %v1748
  %s1768 = scalar_lea.vmem [#allocation1], 5
  %1769 = vst [vmem:[%s1768] ss:$9 sm:$0xff] %v1742
  %s1770 = scalar_lea.vmem [#allocation1], 6
  %1771 = vst [vmem:[%s1770] ss:$9 sm:$0xff] %v1749
  %s1772 = scalar_lea.vmem [#allocation1], 7
  %1773 = vst [vmem:[%s1772] ss:$9 sm:$0xff] %v1750
  %v1774 = vld [vmem:[#allocation1] sm:$0xff]
  %1775 = vst [vmem:[#allocation1] ss:$9 sm:$0xff] %v1751
  %1776 = vst [vmem:[%s1760] ss:$9 sm:$0xff] %v1752
  %v1777 = vld [vmem:[#allocation1] sm:$0xff]
  %vm1778 = vcmask 130048
  %v1779 = vsel %vm1778, %v1774, 0
  %v1781 = vsel %vm1778, %v1777, 0
  %1783 = vmatpush.msra.mxu0 0.0
  %1784 = vmatpush.msra.mxu0 0.0
  %1785 = vmatpush.msra.mxu0 0.0
  %1786 = vmatpush.msra.mxu0 0.0
  %1787 = vmatpush.msra.mxu0 0.0
  %1788 = vmatpush.msra.mxu0 0.0
  %1789 = vmatpush.msra.mxu0 0.0
  %1790 = vmatpush.msra.mxu0 0.0
  %1791 = vmatpush.msra.mxu0 0.0
  %1792 = vmatpush.msra.mxu0 0.0
  %1793 = vmatpush.msra.mxu0 0.0
  %1794 = vmatpush.msra.mxu0 0.0
  %1795 = vmatpush.msra.mxu0 0.0
  %1796 = vmatpush.msra.mxu0 0.0
  %1797 = vmatpush.msra.mxu0 %v1756
  %1798 = vmatpush.msra.mxu0 %v1753
  %1799 = vmatmul.f32.gmra.mxu0 %v1779
  %v1800 = vpop.f32.mrf.mxu0
  %v1801 = vadd.f32 0.0, %v1800
  %1802 = vmatmul.f32.gmra.mxu0 %v1781
  %v1803 = vpop.f32.mrf.mxu0
  %v1804 = vadd.f32 0.0, %v1803
  %1805 = vdwg.mxu0
  %1806 = vmatpush.msra.mxu0 0.0
  %1807 = vmatpush.msra.mxu0 0.0
  %1808 = vmatpush.msra.mxu0 0.0
  %1809 = vmatpush.msra.mxu0 0.0
  %1810 = vmatpush.msra.mxu0 0.0
  %1811 = vmatpush.msra.mxu0 0.0
  %1812 = vmatpush.msra.mxu0 0.0
  %1813 = vmatpush.msra.mxu0 0.0
  %1814 = vmatpush.msra.mxu0 0.0
  %1815 = vmatpush.msra.mxu0 0.0
  %1816 = vmatpush.msra.mxu0 0.0
  %1817 = vmatpush.msra.mxu0 0.0
  %1818 = vmatpush.msra.mxu0 0.0
  %1819 = vmatpush.msra.mxu0 0.0
  %1820 = vmatpush.msra.mxu0 %v1757
  %1821 = vmatpush.msra.mxu0 %v1754
  %1822 = vmatmul.f32.gmra.mxu0 %v1779
  %v1823 = vpop.f32.mrf.mxu0
  %v1824 = vadd.f32 0.0, %v1823
  %1825 = vmatmul.f32.gmra.mxu0 %v1781
  %v1826 = vpop.f32.mrf.mxu0
  %v1827 = vadd.f32 0.0, %v1826
  %1828 = vdwg.mxu0
  %1829 = vmatpush.msra.mxu0 0.0
  %1830 = vmatpush.msra.mxu0 0.0
  %1831 = vmatpush.msra.mxu0 0.0
  %1832 = vmatpush.msra.mxu0 0.0
  %1833 = vmatpush.msra.mxu0 0.0
  %1834 = vmatpush.msra.mxu0 0.0
  %1835 = vmatpush.msra.mxu0 0.0
  %1836 = vmatpush.msra.mxu0 0.0
  %1837 = vmatpush.msra.mxu0 0.0
  %1838 = vmatpush.msra.mxu0 0.0
  %1839 = vmatpush.msra.mxu0 0.0
  %1840 = vmatpush.msra.mxu0 0.0
  %1841 = vmatpush.msra.mxu0 0.0
  %1842 = vmatpush.msra.mxu0 0.0
  %1843 = vmatpush.msra.mxu0 %v1758
  %1844 = vmatpush.msra.mxu0 %v1755
  %1845 = vmatmul.f32.gmra.mxu0 %v1779
  %v1846 = vpop.f32.mrf.mxu0
  %v1847 = vadd.f32 0.0, %v1846
  %1848 = vmatmul.f32.gmra.mxu0 %v1781
  %v1849 = vpop.f32.mrf.mxu0
  %v1850 = vadd.f32 0.0, %v1849
  %1851 = vdwg.mxu0
  %v1858 = vrot.slane %v1824, 7
  %v1859 = vrot.slane %v1847, 6
  %v1860 = vrot.slane %v1827, 7
  %v1861 = vrot.slane %v1850, 6
  %v1862 = vsel %vm1627, %v1801, %v1858
  %v1863 = vsel %vm1630, %v1862, %v1859
  %v1864 = vsel %vm382, %v1801, %v1858
  %vm1865 = vcmask 1042433
  %v1866 = vsel %vm1865, %v1864, %v1859
  %v1867 = vrot.slane %v1866, 1
  %vm1868 = vcmask 1042434
  %v1869 = vsel %vm1868, %v1801, %v1858
  %vm1870 = vcmask 1043458
  %v1871 = vsel %vm1870, %v1869, %v1859
  %v1872 = vrot.slane %v1871, 2
  %vm1873 = vcmask 1043459
  %v1874 = vsel %vm1873, %v1801, %v1858
  %vm1875 = vcmask 1044483
  %v1876 = vsel %vm1875, %v1874, %v1859
  %v1877 = vrot.slane %v1876, 3
  %vm1878 = vcmask 1044484
  %v1879 = vsel %vm1878, %v1801, %v1858
  %vm1880 = vcmask 1045508
  %v1881 = vsel %vm1880, %v1879, %v1859
  %v1882 = vrot.slane %v1881, 4
  %vm1883 = vcmask 1045509
  %v1884 = vsel %vm1883, %v1801, %v1858
  %vm1885 = vcmask 1046533
  %v1886 = vsel %vm1885, %v1884, %v1859
  %v1887 = vrot.slane %v1886, 5
  %vm1888 = vcmask 1046534
  %v1889 = vsel %vm1888, %v1801, %v1858
  %v1890 = vsel %vm1642, %v1859, %v1889
  %v1891 = vrot.slane %v1890, 6
  %v1892 = vsel %vm1645, %v1858, %v1801
  %vm1893 = vcmask 1046529
  %v1894 = vsel %vm1893, %v1859, %v1892
  %v1895 = vrot.slane %v1894, 7
  %v1896 = vsel %vm1627, %v1804, %v1860
  %v1897 = vsel %vm1630, %v1896, %v1861
  %v1898 = vsel %vm382, %v1804, %v1860
  %v1899 = vsel %vm1865, %v1898, %v1861
  %v1900 = vrot.slane %v1899, 1
  %v1911 = vld [vmem:[%s8] sm:$0xff]
  %v1912 = vld [vmem:[%s8 + $0x8] sm:$0xff]
  %v1913 = vld [vmem:[%s8 + $0x10] sm:$0xff]
  %v1914 = vld [vmem:[%s8 + $0x18] sm:$0xff]
  %v1915 = vld [vmem:[%s8 + $0x20] sm:$0xff]
  %v1916 = vld [vmem:[%s8 + $0x28] sm:$0xff]
  %v1917 = vld [vmem:[%s8 + $0x30] sm:$0xff]
  %v1918 = vld [vmem:[%s8 + $0x38] sm:$0xff]
  %v1919 = vld [vmem:[%s8 + $0x40] sm:$0xff]
  %v1920 = vld [vmem:[%s8 + $0x48] sm:$0xff]
  %v1921 = vld [vmem:[%s8 + $0x50] sm:$0xff]
  %v1922 = vld [vmem:[%s8 + $0x58] sm:$0xff]
  %v1923 = vld [vmem:[%s8 + $0x60] sm:$0xff]
  %v1924 = vld [vmem:[%s8 + $0x68] sm:$0xff]
  %v1925 = vld [vmem:[%s8 + $0x70] sm:$0xff]
  %v1926 = vld [vmem:[%s8 + $0x78] sm:$0xff]
  %v1927 = vld [vmem:[%s8 + $0x80] sm:$0xff]
  %v1928 = vld [vmem:[%s8 + $0x88] sm:$0xff]
  %v1929 = vld [vmem:[%s8 + $0x90] sm:$0xff]
  %v1930 = vld [vmem:[%s8 + $0x98] sm:$0xff]
  %v1931 = vld [vmem:[%s8 + $0xa0] sm:$0xff]
  %v1932 = vld [vmem:[%s8 + $0xa8] sm:$0xff]
  %v1933 = vld [vmem:[%s8 + $0xb0] sm:$0xff]
  %v1934 = vld [vmem:[%s8 + $0xb8] sm:$0xff]
  %v1935 = vld [vmem:[%s8 + $0xc0] sm:$0xff]
  %v1936 = vld [vmem:[%s8 + $0xc8] sm:$0xff]
  %v1937 = vld [vmem:[%s8 + $0xd0] sm:$0xff]
  %v1938 = vld [vmem:[%s8 + $0xd8] sm:$0xff]
  %v1939 = vld [vmem:[%s8 + $0xe0] sm:$0xff]
  %v1940 = vld [vmem:[%s8 + $0xe8] sm:$0xff]
  %v1941 = vld [vmem:[%s8 + $0xf0] sm:$0xff]
  %v1942 = vld [vmem:[%s8 + $0xf8] sm:$0xff]
  %v1943 = vld [vmem:[%s8 + $0x100] sm:$0xff]
  %v1944 = vld [vmem:[%s8 + $0x108] sm:$0xff]
  %v1945 = vld [vmem:[%s8 + $0x110] sm:$0xff]
  %v1946 = vld [vmem:[%s8 + $0x118] sm:$0xff]
  %v1947 = vld [vmem:[%s8 + $0x120] sm:$0xff]
  %v1948 = vld [vmem:[%s8 + $0x128] sm:$0xff]
  %v1949 = vld [vmem:[%s8 + $0x130] sm:$0xff]
  %v1950 = vld [vmem:[%s8 + $0x138] sm:$0xff]
  %v1951 = vld [vmem:[%s8 + $0x140] sm:$0xff]
  %v1952 = vld [vmem:[%s8 + $0x148] sm:$0xff]
  %v1953 = vld [vmem:[%s8 + $0x150] sm:$0xff]
  %v1954 = vld [vmem:[%s8 + $0x158] sm:$0xff]
  %v1955 = vld [vmem:[%s8 + $0x160] sm:$0xff]
  %v1956 = vld [vmem:[%s8 + $0x168] sm:$0xff]
  %v1957 = vld [vmem:[%s8 + $0x170] sm:$0xff]
  %v1958 = vld [vmem:[%s8 + $0x178] sm:$0xff]
  %v1959 = vld [vmem:[%s9] sm:$0x7]
  %v1961 = vperm.slane %v1959, 0
  %v1962 = vperm.slane %v1959, 1
  %v1963 = vperm.slane %v1959, 2
  %v1969 = vsel %vm382, %v1740, %v1734
  %1971 = vmatpush.msra.mxu0 %v1956
  %1972 = vmatpush.msra.mxu0 %v1953
  %1973 = vmatpush.msra.mxu0 %v1950
  %1974 = vmatpush.msra.mxu0 %v1947
  %1975 = vmatpush.msra.mxu0 %v1944
  %1976 = vmatpush.msra.mxu0 %v1941
  %1977 = vmatpush.msra.mxu0 %v1938
  %1978 = vmatpush.msra.mxu0 %v1935
  %1979 = vmatpush.msra.mxu0 %v1932
  %1980 = vmatpush.msra.mxu0 %v1929
  %1981 = vmatpush.msra.mxu0 %v1926
  %1982 = vmatpush.msra.mxu0 %v1923
  %1983 = vmatpush.msra.mxu0 %v1920
  %1984 = vmatpush.msra.mxu0 %v1917
  %1985 = vmatpush.msra.mxu0 %v1914
  %1986 = vmatpush.msra.mxu0 %v1911
  %1987 = vmatmul.f32.gmra.mxu0 %v1969
  %v1988 = vpop.f32.mrf.mxu0
  %v1989 = vadd.f32 %v1961, %v1988
  %1990 = vdwg.mxu0
  %1991 = vmatpush.msra.mxu0 %v1957
  %1992 = vmatpush.msra.mxu0 %v1954
  %1993 = vmatpush.msra.mxu0 %v1951
  %1994 = vmatpush.msra.mxu0 %v1948
  %1995 = vmatpush.msra.mxu0 %v1945
  %1996 = vmatpush.msra.mxu0 %v1942
  %1997 = vmatpush.msra.mxu0 %v1939
  %1998 = vmatpush.msra.mxu0 %v1936
  %1999 = vmatpush.msra.mxu0 %v1933
  %2000 = vmatpush.msra.mxu0 %v1930
  %2001 = vmatpush.msra.mxu0 %v1927
  %2002 = vmatpush.msra.mxu0 %v1924
  %2003 = vmatpush.msra.mxu0 %v1921
  %2004 = vmatpush.msra.mxu0 %v1918
  %2005 = vmatpush.msra.mxu0 %v1915
  %2006 = vmatpush.msra.mxu0 %v1912
  %2007 = vmatmul.f32.gmra.mxu0 %v1969
  %v2008 = vpop.f32.mrf.mxu0
  %v2009 = vadd.f32 %v1962, %v2008
  %2010 = vdwg.mxu0
  %2011 = vmatpush.msra.mxu0 %v1958
  %2012 = vmatpush.msra.mxu0 %v1955
  %2013 = vmatpush.msra.mxu0 %v1952
  %2014 = vmatpush.msra.mxu0 %v1949
  %2015 = vmatpush.msra.mxu0 %v1946
  %2016 = vmatpush.msra.mxu0 %v1943
  %2017 = vmatpush.msra.mxu0 %v1940
  %2018 = vmatpush.msra.mxu0 %v1937
  %2019 = vmatpush.msra.mxu0 %v1934
  %2020 = vmatpush.msra.mxu0 %v1931
  %2021 = vmatpush.msra.mxu0 %v1928
  %2022 = vmatpush.msra.mxu0 %v1925
  %2023 = vmatpush.msra.mxu0 %v1922
  %2024 = vmatpush.msra.mxu0 %v1919
  %2025 = vmatpush.msra.mxu0 %v1916
  %2026 = vmatpush.msra.mxu0 %v1913
  %2027 = vmatmul.f32.gmra.mxu0 %v1969
  %v2028 = vpop.f32.mrf.mxu0
  %v2029 = vadd.f32 %v1963, %v2028
  %2030 = vdwg.mxu0
  %v2031 = vld [vmem:[%s10] sm:$0xff]
  %v2032 = vld [vmem:[%s10 + $0x8] sm:$0xff]
  %v2033 = vld [vmem:[%s10 + $0x10] sm:$0xff]
  %v2034 = vld [vmem:[%s10 + $0x18] sm:$0xff]
  %v2035 = vld [vmem:[%s10 + $0x20] sm:$0xff]
  %v2036 = vld [vmem:[%s10 + $0x28] sm:$0xff]
  %v2037 = vld [vmem:[%s10 + $0x30] sm:$0xff]
  %v2038 = vld [vmem:[%s10 + $0x38] sm:$0xff]
  %v2039 = vld [vmem:[%s10 + $0x40] sm:$0xff]
  %v2040 = vld [vmem:[%s10 + $0x48] sm:$0xff]
  %v2041 = vld [vmem:[%s10 + $0x50] sm:$0xff]
  %v2042 = vld [vmem:[%s10 + $0x58] sm:$0xff]
  %v2043 = vld [vmem:[%s10 + $0x60] sm:$0xff]
  %v2044 = vld [vmem:[%s10 + $0x68] sm:$0xff]
  %v2045 = vld [vmem:[%s10 + $0x70] sm:$0xff]
  %v2046 = vld [vmem:[%s10 + $0x78] sm:$0xff]
  %v2047 = vld [vmem:[%s10 + $0x80] sm:$0xff]
  %v2048 = vld [vmem:[%s10 + $0x88] sm:$0xff]
  %v2049 = vld [vmem:[%s10 + $0x90] sm:$0xff]
  %v2050 = vld [vmem:[%s10 + $0x98] sm:$0xff]
  %v2051 = vld [vmem:[%s10 + $0xa0] sm:$0xff]
  %v2052 = vld [vmem:[%s10 + $0xa8] sm:$0xff]
  %v2053 = vld [vmem:[%s10 + $0xb0] sm:$0xff]
  %v2054 = vld [vmem:[%s10 + $0xb8] sm:$0xff]
  %v2055 = vld [vmem:[%s10 + $0xc0] sm:$0xff]
  %v2056 = vld [vmem:[%s10 + $0xc8] sm:$0xff]
  %v2057 = vld [vmem:[%s10 + $0xd0] sm:$0xff]
  %v2058 = vld [vmem:[%s10 + $0xd8] sm:$0xff]
  %v2059 = vld [vmem:[%s10 + $0xe0] sm:$0xff]
  %v2060 = vld [vmem:[%s10 + $0xe8] sm:$0xff]
  %v2061 = vld [vmem:[%s10 + $0xf0] sm:$0xff]
  %v2062 = vld [vmem:[%s10 + $0xf8] sm:$0xff]
  %v2063 = vld [vmem:[%s10 + $0x100] sm:$0xff]
  %v2064 = vld [vmem:[%s10 + $0x108] sm:$0xff]
  %v2065 = vld [vmem:[%s10 + $0x110] sm:$0xff]
  %v2066 = vld [vmem:[%s10 + $0x118] sm:$0xff]
  %v2067 = vld [vmem:[%s10 + $0x120] sm:$0xff]
  %v2068 = vld [vmem:[%s10 + $0x128] sm:$0xff]
  %v2069 = vld [vmem:[%s10 + $0x130] sm:$0xff]
  %v2070 = vld [vmem:[%s10 + $0x138] sm:$0xff]
  %v2071 = vld [vmem:[%s10 + $0x140] sm:$0xff]
  %v2072 = vld [vmem:[%s10 + $0x148] sm:$0xff]
  %v2073 = vld [vmem:[%s10 + $0x150] sm:$0xff]
  %v2074 = vld [vmem:[%s10 + $0x158] sm:$0xff]
  %v2075 = vld [vmem:[%s10 + $0x160] sm:$0xff]
  %v2076 = vld [vmem:[%s10 + $0x168] sm:$0xff]
  %v2077 = vld [vmem:[%s10 + $0x170] sm:$0xff]
  %v2078 = vld [vmem:[%s10 + $0x178] sm:$0xff]
  %v2079 = vld [vmem:[%s11] sm:$0x7]
  %v2081 = vperm.slane %v2079, 0
  %v2082 = vperm.slane %v2079, 1
  %v2083 = vperm.slane %v2079, 2
  %2087 = vmatpush.msra.mxu0 %v2076
  %2088 = vmatpush.msra.mxu0 %v2073
  %2089 = vmatpush.msra.mxu0 %v2070
  %2090 = vmatpush.msra.mxu0 %v2067
  %2091 = vmatpush.msra.mxu0 %v2064
  %2092 = vmatpush.msra.mxu0 %v2061
  %2093 = vmatpush.msra.mxu0 %v2058
  %2094 = vmatpush.msra.mxu0 %v2055
  %2095 = vmatpush.msra.mxu0 %v2052
  %2096 = vmatpush.msra.mxu0 %v2049
  %2097 = vmatpush.msra.mxu0 %v2046
  %2098 = vmatpush.msra.mxu0 %v2043
  %2099 = vmatpush.msra.mxu0 %v2040
  %2100 = vmatpush.msra.mxu0 %v2037
  %2101 = vmatpush.msra.mxu0 %v2034
  %2102 = vmatpush.msra.mxu0 %v2031
  %2103 = vmatmul.f32.gmra.mxu0 0.0
  %v2104 = vpop.f32.mrf.mxu0
  %v2105 = vadd.f32 %v2081, %v2104
  %2106 = vdwg.mxu0
  %2107 = vmatpush.msra.mxu0 %v2077
  %2108 = vmatpush.msra.mxu0 %v2074
  %2109 = vmatpush.msra.mxu0 %v2071
  %2110 = vmatpush.msra.mxu0 %v2068
  %2111 = vmatpush.msra.mxu0 %v2065
  %2112 = vmatpush.msra.mxu0 %v2062
  %2113 = vmatpush.msra.mxu0 %v2059
  %2114 = vmatpush.msra.mxu0 %v2056
  %2115 = vmatpush.msra.mxu0 %v2053
  %2116 = vmatpush.msra.mxu0 %v2050
  %2117 = vmatpush.msra.mxu0 %v2047
  %2118 = vmatpush.msra.mxu0 %v2044
  %2119 = vmatpush.msra.mxu0 %v2041
  %2120 = vmatpush.msra.mxu0 %v2038
  %2121 = vmatpush.msra.mxu0 %v2035
  %2122 = vmatpush.msra.mxu0 %v2032
  %2123 = vmatmul.f32.gmra.mxu0 0.0
  %v2124 = vpop.f32.mrf.mxu0
  %v2125 = vadd.f32 %v2082, %v2124
  %2126 = vdwg.mxu0
  %2127 = vmatpush.msra.mxu0 %v2078
  %2128 = vmatpush.msra.mxu0 %v2075
  %2129 = vmatpush.msra.mxu0 %v2072
  %2130 = vmatpush.msra.mxu0 %v2069
  %2131 = vmatpush.msra.mxu0 %v2066
  %2132 = vmatpush.msra.mxu0 %v2063
  %2133 = vmatpush.msra.mxu0 %v2060
  %2134 = vmatpush.msra.mxu0 %v2057
  %2135 = vmatpush.msra.mxu0 %v2054
  %2136 = vmatpush.msra.mxu0 %v2051
  %2137 = vmatpush.msra.mxu0 %v2048
  %2138 = vmatpush.msra.mxu0 %v2045
  %2139 = vmatpush.msra.mxu0 %v2042
  %2140 = vmatpush.msra.mxu0 %v2039
  %2141 = vmatpush.msra.mxu0 %v2036
  %2142 = vmatpush.msra.mxu0 %v2033
  %2143 = vmatmul.f32.gmra.mxu0 0.0
  %v2144 = vpop.f32.mrf.mxu0
  %v2145 = vadd.f32 %v2083, %v2144
  %2146 = vdwg.mxu0
  %v2150 = vrot.slane %v2009, 7
  %v2151 = vrot.slane %v2029, 6
  %v2152 = vsel %vm1627, %v1989, %v2150
  %v2153 = vsel %vm1630, %v2152, %v2151
  %v2154 = vsel %vm382, %v1989, %v2150
  %v2155 = vsel %vm1865, %v2154, %v2151
  %v2156 = vrot.slane %v2155, 1
  %v2159 = vadd.f32 %v1863, %v2153
  %v2160 = vadd.f32 %v1887, %v2156
  %v2162 = vrot.slane %v2105, 1
  %v2164 = vadd.f32 %v2159, %v2105
  %v2165 = vadd.f32 %v2160, %v2162
  %v2166 = vxor.u32 %v2164, 2147483648
  %v2167 = vxor.u32 %v2165, 2147483648
  %v2168 = vmul.f32 %v2166, 1.442695
  %v2169 = vpow.pop %v2168
  %v2170 = vmul.f32 %v2167, 1.442695
  %v2171 = vpow.pop %v2170
  %v2172 = vadd.f32 %v2169, 1.0
  %v2173 = vadd.f32 %v2171, 1.0
  %v2174 = vrcp.pop %v2172
  %v2175 = vmul.f32 %v2172, %v2174
  %v2176 = vsub.f32 1.0, %v2175
  %v2177 = vmul.f32 %v2174, %v2176
  %v2178 = vadd.f32 %v2174, %v2177
  %vm2179 = vweird.f32 %v2172
  %vm2180 = vweird.f32 %v2174
  %vm2181 = vmor %vm2179, %vm2180
  %v2182 = vsel %vm2181, %v2174, %v2178
  %v2183 = vand.u32 2147483647, %v2172
  %vm2184 = vcmp.eq.f32.partialorder %v2183, 8.507059e+37
  %v2185 = vand.u32 %v2172, 2147483648
  %v2186 = vor.u32 1.1754944e-38, %v2185
  %v2187 = vsel %vm2184, %v2186, %v2182
  %v2188 = vmul.f32 1.0, %v2187
  %v2189 = vrcp.pop %v2173
  %v2190 = vmul.f32 %v2173, %v2189
  %v2191 = vsub.f32 1.0, %v2190
  %v2192 = vmul.f32 %v2189, %v2191
  %v2193 = vadd.f32 %v2189, %v2192
  %vm2194 = vweird.f32 %v2173
  %vm2195 = vweird.f32 %v2189
  %vm2196 = vmor %vm2194, %vm2195
  %v2197 = vsel %vm2196, %v2189, %v2193
  %v2198 = vand.u32 2147483647, %v2173
  %vm2199 = vcmp.eq.f32.partialorder %v2198, 8.507059e+37
  %v2200 = vand.u32 %v2173, 2147483648
  %v2201 = vor.u32 1.1754944e-38, %v2200
  %v2202 = vsel %vm2199, %v2201, %v2197
  %v2203 = vmul.f32 1.0, %v2202
  %v2206 = vrot.slane %v2159, 1
  %v2207 = vrot.slane %v2160, 1
  %v2211 = vrot.slane %v2125, 1
  %v2213 = vadd.f32 %v2206, %v2125
  %v2214 = vadd.f32 %v2207, %v2211
  %v2215 = vxor.u32 %v2213, 2147483648
  %v2216 = vxor.u32 %v2214, 2147483648
  %v2217 = vmul.f32 %v2215, 1.442695
  %v2218 = vpow.pop %v2217
  %v2219 = vmul.f32 %v2216, 1.442695
  %v2220 = vpow.pop %v2219
  %v2221 = vadd.f32 %v2218, 1.0
  %v2222 = vadd.f32 %v2220, 1.0
  %v2223 = vrcp.pop %v2221
  %v2224 = vmul.f32 %v2221, %v2223
  %v2225 = vsub.f32 1.0, %v2224
  %v2226 = vmul.f32 %v2223, %v2225
  %v2227 = vadd.f32 %v2223, %v2226
  %vm2228 = vweird.f32 %v2221
  %vm2229 = vweird.f32 %v2223
  %vm2230 = vmor %vm2228, %vm2229
  %v2231 = vsel %vm2230, %v2223, %v2227
  %v2232 = vand.u32 2147483647, %v2221
  %vm2233 = vcmp.eq.f32.partialorder %v2232, 8.507059e+37
  %v2234 = vand.u32 %v2221, 2147483648
  %v2235 = vor.u32 1.1754944e-38, %v2234
  %v2236 = vsel %vm2233, %v2235, %v2231
  %v2237 = vmul.f32 1.0, %v2236
  %v2238 = vrcp.pop %v2222
  %v2239 = vmul.f32 %v2222, %v2238
  %v2240 = vsub.f32 1.0, %v2239
  %v2241 = vmul.f32 %v2238, %v2240
  %v2242 = vadd.f32 %v2238, %v2241
  %vm2243 = vweird.f32 %v2222
  %vm2244 = vweird.f32 %v2238
  %vm2245 = vmor %vm2243, %vm2244
  %v2246 = vsel %vm2245, %v2238, %v2242
  %v2247 = vand.u32 2147483647, %v2222
  %vm2248 = vcmp.eq.f32.partialorder %v2247, 8.507059e+37
  %v2249 = vand.u32 %v2222, 2147483648
  %v2250 = vor.u32 1.1754944e-38, %v2249
  %v2251 = vsel %vm2248, %v2250, %v2246
  %v2252 = vmul.f32 1.0, %v2251
  %v2254 = vrot.slane %v2145, 1
  %v2256 = vmul.f32 %v2188, %v2145
  %v2257 = vmul.f32 %v2203, %v2254
  %v2258 = vrot.slane %v2159, 2
  %v2259 = vrot.slane %v2160, 2
  %v2262 = vadd.f32 %v2258, %v2256
  %v2263 = vadd.f32 %v2259, %v2257
  %v2264 = vtanh.pop %v2262
  %v2265 = vtanh.pop %v2263
  %v2266 = vsub.f32 1.0, %v2237
  %v2267 = vsub.f32 1.0, %v2252
  %v2268 = vmul.f32 %v2266, %v2264
  %v2269 = vmul.f32 %v2267, %v2265
  %v2270 = vmul.f32 %v2237, 0.0
  %v2271 = vmul.f32 %v2252, 0.0
  %v2272 = vadd.f32 %v2268, %v2270
  %v2273 = vadd.f32 %v2269, %v2271
  %2276 = vst [vmem:[#allocation1] ss:$9 sm:$0xff] %v2272
  %s2277 = scalar_lea.vmem [#allocation1], 1
  %2278 = vst [vmem:[%s2277] ss:$9 sm:$0xff] %v2273
  %v2279 = vld [vmem:[#allocation1] sm:$0xff]
  %2281 = vmatpush.msra.mxu0 %v2076
  %2282 = vmatpush.msra.mxu0 %v2073
  %2283 = vmatpush.msra.mxu0 %v2070
  %2284 = vmatpush.msra.mxu0 %v2067
  %2285 = vmatpush.msra.mxu0 %v2064
  %2286 = vmatpush.msra.mxu0 %v2061
  %2287 = vmatpush.msra.mxu0 %v2058
  %2288 = vmatpush.msra.mxu0 %v2055
  %2289 = vmatpush.msra.mxu0 %v2052
  %2290 = vmatpush.msra.mxu0 %v2049
  %2291 = vmatpush.msra.mxu0 %v2046
  %2292 = vmatpush.msra.mxu0 %v2043
  %2293 = vmatpush.msra.mxu0 %v2040
  %2294 = vmatpush.msra.mxu0 %v2037
  %2295 = vmatpush.msra.mxu0 %v2034
  %2296 = vmatpush.msra.mxu0 %v2031
  %2297 = vmatmul.f32.gmra.mxu0 %v2279
  %v2298 = vpop.f32.mrf.mxu0
  %v2299 = vadd.f32 %v2081, %v2298
  %2300 = vdwg.mxu0
  %2301 = vmatpush.msra.mxu0 %v2077
  %2302 = vmatpush.msra.mxu0 %v2074
  %2303 = vmatpush.msra.mxu0 %v2071
  %2304 = vmatpush.msra.mxu0 %v2068
  %2305 = vmatpush.msra.mxu0 %v2065
  %2306 = vmatpush.msra.mxu0 %v2062
  %2307 = vmatpush.msra.mxu0 %v2059
  %2308 = vmatpush.msra.mxu0 %v2056
  %2309 = vmatpush.msra.mxu0 %v2053
  %2310 = vmatpush.msra.mxu0 %v2050
  %2311 = vmatpush.msra.mxu0 %v2047
  %2312 = vmatpush.msra.mxu0 %v2044
  %2313 = vmatpush.msra.mxu0 %v2041
  %2314 = vmatpush.msra.mxu0 %v2038
  %2315 = vmatpush.msra.mxu0 %v2035
  %2316 = vmatpush.msra.mxu0 %v2032
  %2317 = vmatmul.f32.gmra.mxu0 %v2279
  %v2318 = vpop.f32.mrf.mxu0
  %v2319 = vadd.f32 %v2082, %v2318
  %2320 = vdwg.mxu0
  %2321 = vmatpush.msra.mxu0 %v2078
  %2322 = vmatpush.msra.mxu0 %v2075
  %2323 = vmatpush.msra.mxu0 %v2072
  %2324 = vmatpush.msra.mxu0 %v2069
  %2325 = vmatpush.msra.mxu0 %v2066
  %2326 = vmatpush.msra.mxu0 %v2063
  %2327 = vmatpush.msra.mxu0 %v2060
  %2328 = vmatpush.msra.mxu0 %v2057
  %2329 = vmatpush.msra.mxu0 %v2054
  %2330 = vmatpush.msra.mxu0 %v2051
  %2331 = vmatpush.msra.mxu0 %v2048
  %2332 = vmatpush.msra.mxu0 %v2045
  %2333 = vmatpush.msra.mxu0 %v2042
  %2334 = vmatpush.msra.mxu0 %v2039
  %2335 = vmatpush.msra.mxu0 %v2036
  %2336 = vmatpush.msra.mxu0 %v2033
  %2337 = vmatmul.f32.gmra.mxu0 %v2279
  %v2338 = vpop.f32.mrf.mxu0
  %v2339 = vadd.f32 %v2083, %v2338
  %2340 = vdwg.mxu0
  %v2341 = vadd.f32 %v1867, %v2153
  %v2342 = vadd.f32 %v1891, %v2156
  %v2344 = vrot.slane %v2299, 1
  %v2346 = vadd.f32 %v2341, %v2299
  %v2347 = vadd.f32 %v2342, %v2344
  %v2348 = vxor.u32 %v2346, 2147483648
  %v2349 = vxor.u32 %v2347, 2147483648
  %v2350 = vmul.f32 %v2348, 1.442695
  %v2351 = vpow.pop %v2350
  %v2352 = vmul.f32 %v2349, 1.442695
  %v2353 = vpow.pop %v2352
  %v2354 = vadd.f32 %v2351, 1.0
  %v2355 = vadd.f32 %v2353, 1.0
  %v2356 = vrcp.pop %v2354
  %v2357 = vmul.f32 %v2354, %v2356
  %v2358 = vsub.f32 1.0, %v2357
  %v2359 = vmul.f32 %v2356, %v2358
  %v2360 = vadd.f32 %v2356, %v2359
  %vm2361 = vweird.f32 %v2354
  %vm2362 = vweird.f32 %v2356
  %vm2363 = vmor %vm2361, %vm2362
  %v2364 = vsel %vm2363, %v2356, %v2360
  %v2365 = vand.u32 2147483647, %v2354
  %vm2366 = vcmp.eq.f32.partialorder %v2365, 8.507059e+37
  %v2367 = vand.u32 %v2354, 2147483648
  %v2368 = vor.u32 1.1754944e-38, %v2367
  %v2369 = vsel %vm2366, %v2368, %v2364
  %v2370 = vmul.f32 1.0, %v2369
  %v2371 = vrcp.pop %v2355
  %v2372 = vmul.f32 %v2355, %v2371
  %v2373 = vsub.f32 1.0, %v2372
  %v2374 = vmul.f32 %v2371, %v2373
  %v2375 = vadd.f32 %v2371, %v2374
  %vm2376 = vweird.f32 %v2355
  %vm2377 = vweird.f32 %v2371
  %vm2378 = vmor %vm2376, %vm2377
  %v2379 = vsel %vm2378, %v2371, %v2375
  %v2380 = vand.u32 2147483647, %v2355
  %vm2381 = vcmp.eq.f32.partialorder %v2380, 8.507059e+37
  %v2382 = vand.u32 %v2355, 2147483648
  %v2383 = vor.u32 1.1754944e-38, %v2382
  %v2384 = vsel %vm2381, %v2383, %v2379
  %v2385 = vmul.f32 1.0, %v2384
  %v2388 = vrot.slane %v2341, 1
  %v2389 = vrot.slane %v2342, 1
  %v2393 = vrot.slane %v2319, 1
  %v2395 = vadd.f32 %v2388, %v2319
  %v2396 = vadd.f32 %v2389, %v2393
  %v2397 = vxor.u32 %v2395, 2147483648
  %v2398 = vxor.u32 %v2396, 2147483648
  %v2399 = vmul.f32 %v2397, 1.442695
  %v2400 = vpow.pop %v2399
  %v2401 = vmul.f32 %v2398, 1.442695
  %v2402 = vpow.pop %v2401
  %v2403 = vadd.f32 %v2400, 1.0
  %v2404 = vadd.f32 %v2402, 1.0
  %v2405 = vrcp.pop %v2403
  %v2406 = vmul.f32 %v2403, %v2405
  %v2407 = vsub.f32 1.0, %v2406
  %v2408 = vmul.f32 %v2405, %v2407
  %v2409 = vadd.f32 %v2405, %v2408
  %vm2410 = vweird.f32 %v2403
  %vm2411 = vweird.f32 %v2405
  %vm2412 = vmor %vm2410, %vm2411
  %v2413 = vsel %vm2412, %v2405, %v2409
  %v2414 = vand.u32 2147483647, %v2403
  %vm2415 = vcmp.eq.f32.partialorder %v2414, 8.507059e+37
  %v2416 = vand.u32 %v2403, 2147483648
  %v2417 = vor.u32 1.1754944e-38, %v2416
  %v2418 = vsel %vm2415, %v2417, %v2413
  %v2419 = vmul.f32 1.0, %v2418
  %v2420 = vrcp.pop %v2404
  %v2421 = vmul.f32 %v2404, %v2420
  %v2422 = vsub.f32 1.0, %v2421
  %v2423 = vmul.f32 %v2420, %v2422
  %v2424 = vadd.f32 %v2420, %v2423
  %vm2425 = vweird.f32 %v2404
  %vm2426 = vweird.f32 %v2420
  %vm2427 = vmor %vm2425, %vm2426
  %v2428 = vsel %vm2427, %v2420, %v2424
  %v2429 = vand.u32 2147483647, %v2404
  %vm2430 = vcmp.eq.f32.partialorder %v2429, 8.507059e+37
  %v2431 = vand.u32 %v2404, 2147483648
  %v2432 = vor.u32 1.1754944e-38, %v2431
  %v2433 = vsel %vm2430, %v2432, %v2428
  %v2434 = vmul.f32 1.0, %v2433
  %v2436 = vrot.slane %v2339, 1
  %v2438 = vmul.f32 %v2370, %v2339
  %v2439 = vmul.f32 %v2385, %v2436
  %v2440 = vrot.slane %v2341, 2
  %v2441 = vrot.slane %v2342, 2
  %v2444 = vadd.f32 %v2440, %v2438
  %v2445 = vadd.f32 %v2441, %v2439
  %v2446 = vtanh.pop %v2444
  %v2447 = vtanh.pop %v2445
  %v2448 = vsub.f32 1.0, %v2419
  %v2449 = vsub.f32 1.0, %v2434
  %v2450 = vmul.f32 %v2448, %v2446
  %v2451 = vmul.f32 %v2449, %v2447
  %v2452 = vmul.f32 %v2419, %v2272
  %v2453 = vmul.f32 %v2434, %v2273
  %v2454 = vadd.f32 %v2450, %v2452
  %v2455 = vadd.f32 %v2451, %v2453
  %2458 = vst [vmem:[#allocation1] ss:$9 sm:$0xff] %v2454
  %s2459 = scalar_lea.vmem [#allocation1], 1
  %2460 = vst [vmem:[%s2459] ss:$9 sm:$0xff] %v2455
  %v2461 = vld [vmem:[#allocation1] sm:$0xff]
  %2463 = vmatpush.msra.mxu0 %v2076
  %2464 = vmatpush.msra.mxu0 %v2073
  %2465 = vmatpush.msra.mxu0 %v2070
  %2466 = vmatpush.msra.mxu0 %v2067
  %2467 = vmatpush.msra.mxu0 %v2064
  %2468 = vmatpush.msra.mxu0 %v2061
  %2469 = vmatpush.msra.mxu0 %v2058
  %2470 = vmatpush.msra.mxu0 %v2055
  %2471 = vmatpush.msra.mxu0 %v2052
  %2472 = vmatpush.msra.mxu0 %v2049
  %2473 = vmatpush.msra.mxu0 %v2046
  %2474 = vmatpush.msra.mxu0 %v2043
  %2475 = vmatpush.msra.mxu0 %v2040
  %2476 = vmatpush.msra.mxu0 %v2037
  %2477 = vmatpush.msra.mxu0 %v2034
  %2478 = vmatpush.msra.mxu0 %v2031
  %2479 = vmatmul.f32.gmra.mxu0 %v2461
  %v2480 = vpop.f32.mrf.mxu0
  %v2481 = vadd.f32 %v2081, %v2480
  %2482 = vdwg.mxu0
  %2483 = vmatpush.msra.mxu0 %v2077
  %2484 = vmatpush.msra.mxu0 %v2074
  %2485 = vmatpush.msra.mxu0 %v2071
  %2486 = vmatpush.msra.mxu0 %v2068
  %2487 = vmatpush.msra.mxu0 %v2065
  %2488 = vmatpush.msra.mxu0 %v2062
  %2489 = vmatpush.msra.mxu0 %v2059
  %2490 = vmatpush.msra.mxu0 %v2056
  %2491 = vmatpush.msra.mxu0 %v2053
  %2492 = vmatpush.msra.mxu0 %v2050
  %2493 = vmatpush.msra.mxu0 %v2047
  %2494 = vmatpush.msra.mxu0 %v2044
  %2495 = vmatpush.msra.mxu0 %v2041
  %2496 = vmatpush.msra.mxu0 %v2038
  %2497 = vmatpush.msra.mxu0 %v2035
  %2498 = vmatpush.msra.mxu0 %v2032
  %2499 = vmatmul.f32.gmra.mxu0 %v2461
  %v2500 = vpop.f32.mrf.mxu0
  %v2501 = vadd.f32 %v2082, %v2500
  %2502 = vdwg.mxu0
  %2503 = vmatpush.msra.mxu0 %v2078
  %2504 = vmatpush.msra.mxu0 %v2075
  %2505 = vmatpush.msra.mxu0 %v2072
  %2506 = vmatpush.msra.mxu0 %v2069
  %2507 = vmatpush.msra.mxu0 %v2066
  %2508 = vmatpush.msra.mxu0 %v2063
  %2509 = vmatpush.msra.mxu0 %v2060
  %2510 = vmatpush.msra.mxu0 %v2057
  %2511 = vmatpush.msra.mxu0 %v2054
  %2512 = vmatpush.msra.mxu0 %v2051
  %2513 = vmatpush.msra.mxu0 %v2048
  %2514 = vmatpush.msra.mxu0 %v2045
  %2515 = vmatpush.msra.mxu0 %v2042
  %2516 = vmatpush.msra.mxu0 %v2039
  %2517 = vmatpush.msra.mxu0 %v2036
  %2518 = vmatpush.msra.mxu0 %v2033
  %2519 = vmatmul.f32.gmra.mxu0 %v2461
  %v2520 = vpop.f32.mrf.mxu0
  %v2521 = vadd.f32 %v2083, %v2520
  %2522 = vdwg.mxu0
  %v2523 = vadd.f32 %v1872, %v2153
  %v2524 = vadd.f32 %v1895, %v2156
  %v2526 = vrot.slane %v2481, 1
  %v2528 = vadd.f32 %v2523, %v2481
  %v2529 = vadd.f32 %v2524, %v2526
  %v2530 = vxor.u32 %v2528, 2147483648
  %v2531 = vxor.u32 %v2529, 2147483648
  %v2532 = vmul.f32 %v2530, 1.442695
  %v2533 = vpow.pop %v2532
  %v2534 = vmul.f32 %v2531, 1.442695
  %v2535 = vpow.pop %v2534
  %v2536 = vadd.f32 %v2533, 1.0
  %v2537 = vadd.f32 %v2535, 1.0
  %v2538 = vrcp.pop %v2536
  %v2539 = vmul.f32 %v2536, %v2538
  %v2540 = vsub.f32 1.0, %v2539
  %v2541 = vmul.f32 %v2538, %v2540
  %v2542 = vadd.f32 %v2538, %v2541
  %vm2543 = vweird.f32 %v2536
  %vm2544 = vweird.f32 %v2538
  %vm2545 = vmor %vm2543, %vm2544
  %v2546 = vsel %vm2545, %v2538, %v2542
  %v2547 = vand.u32 2147483647, %v2536
  %vm2548 = vcmp.eq.f32.partialorder %v2547, 8.507059e+37
  %v2549 = vand.u32 %v2536, 2147483648
  %v2550 = vor.u32 1.1754944e-38, %v2549
  %v2551 = vsel %vm2548, %v2550, %v2546
  %v2552 = vmul.f32 1.0, %v2551
  %v2553 = vrcp.pop %v2537
  %v2554 = vmul.f32 %v2537, %v2553
  %v2555 = vsub.f32 1.0, %v2554
  %v2556 = vmul.f32 %v2553, %v2555
  %v2557 = vadd.f32 %v2553, %v2556
  %vm2558 = vweird.f32 %v2537
  %vm2559 = vweird.f32 %v2553
  %vm2560 = vmor %vm2558, %vm2559
  %v2561 = vsel %vm2560, %v2553, %v2557
  %v2562 = vand.u32 2147483647, %v2537
  %vm2563 = vcmp.eq.f32.partialorder %v2562, 8.507059e+37
  %v2564 = vand.u32 %v2537, 2147483648
  %v2565 = vor.u32 1.1754944e-38, %v2564
  %v2566 = vsel %vm2563, %v2565, %v2561
  %v2567 = vmul.f32 1.0, %v2566
  %v2570 = vrot.slane %v2523, 1
  %v2571 = vrot.slane %v2524, 1
  %v2575 = vrot.slane %v2501, 1
  %v2577 = vadd.f32 %v2570, %v2501
  %v2578 = vadd.f32 %v2571, %v2575
  %v2579 = vxor.u32 %v2577, 2147483648
  %v2580 = vxor.u32 %v2578, 2147483648
  %v2581 = vmul.f32 %v2579, 1.442695
  %v2582 = vpow.pop %v2581
  %v2583 = vmul.f32 %v2580, 1.442695
  %v2584 = vpow.pop %v2583
  %v2585 = vadd.f32 %v2582, 1.0
  %v2586 = vadd.f32 %v2584, 1.0
  %v2587 = vrcp.pop %v2585
  %v2588 = vmul.f32 %v2585, %v2587
  %v2589 = vsub.f32 1.0, %v2588
  %v2590 = vmul.f32 %v2587, %v2589
  %v2591 = vadd.f32 %v2587, %v2590
  %vm2592 = vweird.f32 %v2585
  %vm2593 = vweird.f32 %v2587
  %vm2594 = vmor %vm2592, %vm2593
  %v2595 = vsel %vm2594, %v2587, %v2591
  %v2596 = vand.u32 2147483647, %v2585
  %vm2597 = vcmp.eq.f32.partialorder %v2596, 8.507059e+37
  %v2598 = vand.u32 %v2585, 2147483648
  %v2599 = vor.u32 1.1754944e-38, %v2598
  %v2600 = vsel %vm2597, %v2599, %v2595
  %v2601 = vmul.f32 1.0, %v2600
  %v2602 = vrcp.pop %v2586
  %v2603 = vmul.f32 %v2586, %v2602
  %v2604 = vsub.f32 1.0, %v2603
  %v2605 = vmul.f32 %v2602, %v2604
  %v2606 = vadd.f32 %v2602, %v2605
  %vm2607 = vweird.f32 %v2586
  %vm2608 = vweird.f32 %v2602
  %vm2609 = vmor %vm2607, %vm2608
  %v2610 = vsel %vm2609, %v2602, %v2606
  %v2611 = vand.u32 2147483647, %v2586
  %vm2612 = vcmp.eq.f32.partialorder %v2611, 8.507059e+37
  %v2613 = vand.u32 %v2586, 2147483648
  %v2614 = vor.u32 1.1754944e-38, %v2613
  %v2615 = vsel %vm2612, %v2614, %v2610
  %v2616 = vmul.f32 1.0, %v2615
  %v2618 = vrot.slane %v2521, 1
  %v2620 = vmul.f32 %v2552, %v2521
  %v2621 = vmul.f32 %v2567, %v2618
  %v2622 = vrot.slane %v2523, 2
  %v2623 = vrot.slane %v2524, 2
  %v2626 = vadd.f32 %v2622, %v2620
  %v2627 = vadd.f32 %v2623, %v2621
  %v2628 = vtanh.pop %v2626
  %v2629 = vtanh.pop %v2627
  %v2630 = vsub.f32 1.0, %v2601
  %v2631 = vsub.f32 1.0, %v2616
  %v2632 = vmul.f32 %v2630, %v2628
  %v2633 = vmul.f32 %v2631, %v2629
  %v2634 = vmul.f32 %v2601, %v2454
  %v2635 = vmul.f32 %v2616, %v2455
  %v2636 = vadd.f32 %v2632, %v2634
  %v2637 = vadd.f32 %v2633, %v2635
  %2640 = vst [vmem:[#allocation1] ss:$9 sm:$0xff] %v2636
  %s2641 = scalar_lea.vmem [#allocation1], 1
  %2642 = vst [vmem:[%s2641] ss:$9 sm:$0xff] %v2637
  %v2643 = vld [vmem:[#allocation1] sm:$0xff]
  %2645 = vmatpush.msra.mxu0 %v2076
  %2646 = vmatpush.msra.mxu0 %v2073
  %2647 = vmatpush.msra.mxu0 %v2070
  %2648 = vmatpush.msra.mxu0 %v2067
  %2649 = vmatpush.msra.mxu0 %v2064
  %2650 = vmatpush.msra.mxu0 %v2061
  %2651 = vmatpush.msra.mxu0 %v2058
  %2652 = vmatpush.msra.mxu0 %v2055
  %2653 = vmatpush.msra.mxu0 %v2052
  %2654 = vmatpush.msra.mxu0 %v2049
  %2655 = vmatpush.msra.mxu0 %v2046
  %2656 = vmatpush.msra.mxu0 %v2043
  %2657 = vmatpush.msra.mxu0 %v2040
  %2658 = vmatpush.msra.mxu0 %v2037
  %2659 = vmatpush.msra.mxu0 %v2034
  %2660 = vmatpush.msra.mxu0 %v2031
  %2661 = vmatmul.f32.gmra.mxu0 %v2643
  %v2662 = vpop.f32.mrf.mxu0
  %v2663 = vadd.f32 %v2081, %v2662
  %2664 = vdwg.mxu0
  %2665 = vmatpush.msra.mxu0 %v2077
  %2666 = vmatpush.msra.mxu0 %v2074
  %2667 = vmatpush.msra.mxu0 %v2071
  %2668 = vmatpush.msra.mxu0 %v2068
  %2669 = vmatpush.msra.mxu0 %v2065
  %2670 = vmatpush.msra.mxu0 %v2062
  %2671 = vmatpush.msra.mxu0 %v2059
  %2672 = vmatpush.msra.mxu0 %v2056
  %2673 = vmatpush.msra.mxu0 %v2053
  %2674 = vmatpush.msra.mxu0 %v2050
  %2675 = vmatpush.msra.mxu0 %v2047
  %2676 = vmatpush.msra.mxu0 %v2044
  %2677 = vmatpush.msra.mxu0 %v2041
  %2678 = vmatpush.msra.mxu0 %v2038
  %2679 = vmatpush.msra.mxu0 %v2035
  %2680 = vmatpush.msra.mxu0 %v2032
  %2681 = vmatmul.f32.gmra.mxu0 %v2643
  %v2682 = vpop.f32.mrf.mxu0
  %v2683 = vadd.f32 %v2082, %v2682
  %2684 = vdwg.mxu0
  %2685 = vmatpush.msra.mxu0 %v2078
  %2686 = vmatpush.msra.mxu0 %v2075
  %2687 = vmatpush.msra.mxu0 %v2072
  %2688 = vmatpush.msra.mxu0 %v2069
  %2689 = vmatpush.msra.mxu0 %v2066
  %2690 = vmatpush.msra.mxu0 %v2063
  %2691 = vmatpush.msra.mxu0 %v2060
  %2692 = vmatpush.msra.mxu0 %v2057
  %2693 = vmatpush.msra.mxu0 %v2054
  %2694 = vmatpush.msra.mxu0 %v2051
  %2695 = vmatpush.msra.mxu0 %v2048
  %2696 = vmatpush.msra.mxu0 %v2045
  %2697 = vmatpush.msra.mxu0 %v2042
  %2698 = vmatpush.msra.mxu0 %v2039
  %2699 = vmatpush.msra.mxu0 %v2036
  %2700 = vmatpush.msra.mxu0 %v2033
  %2701 = vmatmul.f32.gmra.mxu0 %v2643
  %v2702 = vpop.f32.mrf.mxu0
  %v2703 = vadd.f32 %v2083, %v2702
  %2704 = vdwg.mxu0
  %v2705 = vadd.f32 %v1877, %v2153
  %v2706 = vadd.f32 %v1897, %v2156
  %v2708 = vrot.slane %v2663, 1
  %v2710 = vadd.f32 %v2705, %v2663
  %v2711 = vadd.f32 %v2706, %v2708
  %v2712 = vxor.u32 %v2710, 2147483648
  %v2713 = vxor.u32 %v2711, 2147483648
  %v2714 = vmul.f32 %v2712, 1.442695
  %v2715 = vpow.pop %v2714
  %v2716 = vmul.f32 %v2713, 1.442695
  %v2717 = vpow.pop %v2716
  %v2718 = vadd.f32 %v2715, 1.0
  %v2719 = vadd.f32 %v2717, 1.0
  %v2720 = vrcp.pop %v2718
  %v2721 = vmul.f32 %v2718, %v2720
  %v2722 = vsub.f32 1.0, %v2721
  %v2723 = vmul.f32 %v2720, %v2722
  %v2724 = vadd.f32 %v2720, %v2723
  %vm2725 = vweird.f32 %v2718
  %vm2726 = vweird.f32 %v2720
  %vm2727 = vmor %vm2725, %vm2726
  %v2728 = vsel %vm2727, %v2720, %v2724
  %v2729 = vand.u32 2147483647, %v2718
  %vm2730 = vcmp.eq.f32.partialorder %v2729, 8.507059e+37
  %v2731 = vand.u32 %v2718, 2147483648
  %v2732 = vor.u32 1.1754944e-38, %v2731
  %v2733 = vsel %vm2730, %v2732, %v2728
  %v2734 = vmul.f32 1.0, %v2733
  %v2735 = vrcp.pop %v2719
  %v2736 = vmul.f32 %v2719, %v2735
  %v2737 = vsub.f32 1.0, %v2736
  %v2738 = vmul.f32 %v2735, %v2737
  %v2739 = vadd.f32 %v2735, %v2738
  %vm2740 = vweird.f32 %v2719
  %vm2741 = vweird.f32 %v2735
  %vm2742 = vmor %vm2740, %vm2741
  %v2743 = vsel %vm2742, %v2735, %v2739
  %v2744 = vand.u32 2147483647, %v2719
  %vm2745 = vcmp.eq.f32.partialorder %v2744, 8.507059e+37
  %v2746 = vand.u32 %v2719, 2147483648
  %v2747 = vor.u32 1.1754944e-38, %v2746
  %v2748 = vsel %vm2745, %v2747, %v2743
  %v2749 = vmul.f32 1.0, %v2748
  %v2752 = vrot.slane %v2705, 1
  %v2753 = vrot.slane %v2706, 1
  %v2757 = vrot.slane %v2683, 1
  %v2759 = vadd.f32 %v2752, %v2683
  %v2760 = vadd.f32 %v2753, %v2757
  %v2761 = vxor.u32 %v2759, 2147483648
  %v2762 = vxor.u32 %v2760, 2147483648
  %v2763 = vmul.f32 %v2761, 1.442695
  %v2764 = vpow.pop %v2763
  %v2765 = vmul.f32 %v2762, 1.442695
  %v2766 = vpow.pop %v2765
  %v2767 = vadd.f32 %v2764, 1.0
  %v2768 = vadd.f32 %v2766, 1.0
  %v2769 = vrcp.pop %v2767
  %v2770 = vmul.f32 %v2767, %v2769
  %v2771 = vsub.f32 1.0, %v2770
  %v2772 = vmul.f32 %v2769, %v2771
  %v2773 = vadd.f32 %v2769, %v2772
  %vm2774 = vweird.f32 %v2767
  %vm2775 = vweird.f32 %v2769
  %vm2776 = vmor %vm2774, %vm2775
  %v2777 = vsel %vm2776, %v2769, %v2773
  %v2778 = vand.u32 2147483647, %v2767
  %vm2779 = vcmp.eq.f32.partialorder %v2778, 8.507059e+37
  %v2780 = vand.u32 %v2767, 2147483648
  %v2781 = vor.u32 1.1754944e-38, %v2780
  %v2782 = vsel %vm2779, %v2781, %v2777
  %v2783 = vmul.f32 1.0, %v2782
  %v2784 = vrcp.pop %v2768
  %v2785 = vmul.f32 %v2768, %v2784
  %v2786 = vsub.f32 1.0, %v2785
  %v2787 = vmul.f32 %v2784, %v2786
  %v2788 = vadd.f32 %v2784, %v2787
  %vm2789 = vweird.f32 %v2768
  %vm2790 = vweird.f32 %v2784
  %vm2791 = vmor %vm2789, %vm2790
  %v2792 = vsel %vm2791, %v2784, %v2788
  %v2793 = vand.u32 2147483647, %v2768
  %vm2794 = vcmp.eq.f32.partialorder %v2793, 8.507059e+37
  %v2795 = vand.u32 %v2768, 2147483648
  %v2796 = vor.u32 1.1754944e-38, %v2795
  %v2797 = vsel %vm2794, %v2796, %v2792
  %v2798 = vmul.f32 1.0, %v2797
  %v2800 = vrot.slane %v2703, 1
  %v2802 = vmul.f32 %v2734, %v2703
  %v2803 = vmul.f32 %v2749, %v2800
  %v2804 = vrot.slane %v2705, 2
  %v2805 = vrot.slane %v2706, 2
  %v2808 = vadd.f32 %v2804, %v2802
  %v2809 = vadd.f32 %v2805, %v2803
  %v2810 = vtanh.pop %v2808
  %v2811 = vtanh.pop %v2809
  %v2812 = vsub.f32 1.0, %v2783
  %v2813 = vsub.f32 1.0, %v2798
  %v2814 = vmul.f32 %v2812, %v2810
  %v2815 = vmul.f32 %v2813, %v2811
  %v2816 = vmul.f32 %v2783, %v2636
  %v2817 = vmul.f32 %v2798, %v2637
  %v2818 = vadd.f32 %v2814, %v2816
  %v2819 = vadd.f32 %v2815, %v2817
  %2822 = vst [vmem:[#allocation1] ss:$9 sm:$0xff] %v2818
  %s2823 = scalar_lea.vmem [#allocation1], 1
  %2824 = vst [vmem:[%s2823] ss:$9 sm:$0xff] %v2819
  %v2825 = vld [vmem:[#allocation1] sm:$0xff]
  %2827 = vmatpush.msra.mxu0 %v2076
  %2828 = vmatpush.msra.mxu0 %v2073
  %2829 = vmatpush.msra.mxu0 %v2070
  %2830 = vmatpush.msra.mxu0 %v2067
  %2831 = vmatpush.msra.mxu0 %v2064
  %2832 = vmatpush.msra.mxu0 %v2061
  %2833 = vmatpush.msra.mxu0 %v2058
  %2834 = vmatpush.msra.mxu0 %v2055
  %2835 = vmatpush.msra.mxu0 %v2052
  %2836 = vmatpush.msra.mxu0 %v2049
  %2837 = vmatpush.msra.mxu0 %v2046
  %2838 = vmatpush.msra.mxu0 %v2043
  %2839 = vmatpush.msra.mxu0 %v2040
  %2840 = vmatpush.msra.mxu0 %v2037
  %2841 = vmatpush.msra.mxu0 %v2034
  %2842 = vmatpush.msra.mxu0 %v2031
  %2843 = vmatmul.f32.gmra.mxu0 %v2825
  %v2844 = vpop.f32.mrf.mxu0
  %v2845 = vadd.f32 %v2081, %v2844
  %2846 = vdwg.mxu0
  %2847 = vmatpush.msra.mxu0 %v2077
  %2848 = vmatpush.msra.mxu0 %v2074
  %2849 = vmatpush.msra.mxu0 %v2071
  %2850 = vmatpush.msra.mxu0 %v2068
  %2851 = vmatpush.msra.mxu0 %v2065
  %2852 = vmatpush.msra.mxu0 %v2062
  %2853 = vmatpush.msra.mxu0 %v2059
  %2854 = vmatpush.msra.mxu0 %v2056
  %2855 = vmatpush.msra.mxu0 %v2053
  %2856 = vmatpush.msra.mxu0 %v2050
  %2857 = vmatpush.msra.mxu0 %v2047
  %2858 = vmatpush.msra.mxu0 %v2044
  %2859 = vmatpush.msra.mxu0 %v2041
  %2860 = vmatpush.msra.mxu0 %v2038
  %2861 = vmatpush.msra.mxu0 %v2035
  %2862 = vmatpush.msra.mxu0 %v2032
  %2863 = vmatmul.f32.gmra.mxu0 %v2825
  %v2864 = vpop.f32.mrf.mxu0
  %v2865 = vadd.f32 %v2082, %v2864
  %2866 = vdwg.mxu0
  %2867 = vmatpush.msra.mxu0 %v2078
  %2868 = vmatpush.msra.mxu0 %v2075
  %2869 = vmatpush.msra.mxu0 %v2072
  %2870 = vmatpush.msra.mxu0 %v2069
  %2871 = vmatpush.msra.mxu0 %v2066
  %2872 = vmatpush.msra.mxu0 %v2063
  %2873 = vmatpush.msra.mxu0 %v2060
  %2874 = vmatpush.msra.mxu0 %v2057
  %2875 = vmatpush.msra.mxu0 %v2054
  %2876 = vmatpush.msra.mxu0 %v2051
  %2877 = vmatpush.msra.mxu0 %v2048
  %2878 = vmatpush.msra.mxu0 %v2045
  %2879 = vmatpush.msra.mxu0 %v2042
  %2880 = vmatpush.msra.mxu0 %v2039
  %2881 = vmatpush.msra.mxu0 %v2036
  %2882 = vmatpush.msra.mxu0 %v2033
  %2883 = vmatmul.f32.gmra.mxu0 %v2825
  %v2884 = vpop.f32.mrf.mxu0
  %v2885 = vadd.f32 %v2083, %v2884
  %2886 = vdwg.mxu0
  %v2887 = vadd.f32 %v1882, %v2153
  %v2888 = vadd.f32 %v1900, %v2156
  %v2890 = vrot.slane %v2845, 1
  %v2892 = vadd.f32 %v2887, %v2845
  %v2893 = vadd.f32 %v2888, %v2890
  %v2894 = vxor.u32 %v2892, 2147483648
  %v2895 = vxor.u32 %v2893, 2147483648
  %v2896 = vmul.f32 %v2894, 1.442695
  %v2897 = vpow.pop %v2896
  %v2898 = vmul.f32 %v2895, 1.442695
  %v2899 = vpow.pop %v2898
  %v2900 = vadd.f32 %v2897, 1.0
  %v2901 = vadd.f32 %v2899, 1.0
  %v2902 = vrcp.pop %v2900
  %v2903 = vmul.f32 %v2900, %v2902
  %v2904 = vsub.f32 1.0, %v2903
  %v2905 = vmul.f32 %v2902, %v2904
  %v2906 = vadd.f32 %v2902, %v2905
  %vm2907 = vweird.f32 %v2900
  %vm2908 = vweird.f32 %v2902
  %vm2909 = vmor %vm2907, %vm2908
  %v2910 = vsel %vm2909, %v2902, %v2906
  %v2911 = vand.u32 2147483647, %v2900
  %vm2912 = vcmp.eq.f32.partialorder %v2911, 8.507059e+37
  %v2913 = vand.u32 %v2900, 2147483648
  %v2914 = vor.u32 1.1754944e-38, %v2913
  %v2915 = vsel %vm2912, %v2914, %v2910
  %v2916 = vmul.f32 1.0, %v2915
  %v2917 = vrcp.pop %v2901
  %v2918 = vmul.f32 %v2901, %v2917
  %v2919 = vsub.f32 1.0, %v2918
  %v2920 = vmul.f32 %v2917, %v2919
  %v2921 = vadd.f32 %v2917, %v2920
  %vm2922 = vweird.f32 %v2901
  %vm2923 = vweird.f32 %v2917
  %vm2924 = vmor %vm2922, %vm2923
  %v2925 = vsel %vm2924, %v2917, %v2921
  %v2926 = vand.u32 2147483647, %v2901
  %vm2927 = vcmp.eq.f32.partialorder %v2926, 8.507059e+37
  %v2928 = vand.u32 %v2901, 2147483648
  %v2929 = vor.u32 1.1754944e-38, %v2928
  %v2930 = vsel %vm2927, %v2929, %v2925
  %v2931 = vmul.f32 1.0, %v2930
  %v2934 = vrot.slane %v2887, 1
  %v2935 = vrot.slane %v2888, 1
  %v2939 = vrot.slane %v2865, 1
  %v2941 = vadd.f32 %v2934, %v2865
  %v2942 = vadd.f32 %v2935, %v2939
  %v2943 = vxor.u32 %v2941, 2147483648
  %v2944 = vxor.u32 %v2942, 2147483648
  %v2945 = vmul.f32 %v2943, 1.442695
  %v2946 = vpow.pop %v2945
  %v2947 = vmul.f32 %v2944, 1.442695
  %v2948 = vpow.pop %v2947
  %v2949 = vadd.f32 %v2946, 1.0
  %v2950 = vadd.f32 %v2948, 1.0
  %v2951 = vrcp.pop %v2949
  %v2952 = vmul.f32 %v2949, %v2951
  %v2953 = vsub.f32 1.0, %v2952
  %v2954 = vmul.f32 %v2951, %v2953
  %v2955 = vadd.f32 %v2951, %v2954
  %vm2956 = vweird.f32 %v2949
  %vm2957 = vweird.f32 %v2951
  %vm2958 = vmor %vm2956, %vm2957
  %v2959 = vsel %vm2958, %v2951, %v2955
  %v2960 = vand.u32 2147483647, %v2949
  %vm2961 = vcmp.eq.f32.partialorder %v2960, 8.507059e+37
  %v2962 = vand.u32 %v2949, 2147483648
  %v2963 = vor.u32 1.1754944e-38, %v2962
  %v2964 = vsel %vm2961, %v2963, %v2959
  %v2965 = vmul.f32 1.0, %v2964
  %v2966 = vrcp.pop %v2950
  %v2967 = vmul.f32 %v2950, %v2966
  %v2968 = vsub.f32 1.0, %v2967
  %v2969 = vmul.f32 %v2966, %v2968
  %v2970 = vadd.f32 %v2966, %v2969
  %vm2971 = vweird.f32 %v2950
  %vm2972 = vweird.f32 %v2966
  %vm2973 = vmor %vm2971, %vm2972
  %v2974 = vsel %vm2973, %v2966, %v2970
  %v2975 = vand.u32 2147483647, %v2950
  %vm2976 = vcmp.eq.f32.partialorder %v2975, 8.507059e+37
  %v2977 = vand.u32 %v2950, 2147483648
  %v2978 = vor.u32 1.1754944e-38, %v2977
  %v2979 = vsel %vm2976, %v2978, %v2974
  %v2980 = vmul.f32 1.0, %v2979
  %v2982 = vrot.slane %v2885, 1
  %v2984 = vmul.f32 %v2916, %v2885
  %v2985 = vmul.f32 %v2931, %v2982
  %v2986 = vrot.slane %v2887, 2
  %v2987 = vrot.slane %v2888, 2
  %v2990 = vadd.f32 %v2986, %v2984
  %v2991 = vadd.f32 %v2987, %v2985
  %v2992 = vtanh.pop %v2990
  %v2993 = vtanh.pop %v2991
  %v2994 = vsub.f32 1.0, %v2965
  %v2995 = vsub.f32 1.0, %v2980
  %v2996 = vmul.f32 %v2994, %v2992
  %v2997 = vmul.f32 %v2995, %v2993
  %v2998 = vmul.f32 %v2965, %v2818
  %v2999 = vmul.f32 %v2980, %v2819
  %v3000 = vadd.f32 %v2996, %v2998
  %v3001 = vadd.f32 %v2997, %v2999
  %3002 = vst [vmem:[#allocation1] ss:$9 sm:$0xff] %v2272
  %s3003 = scalar_lea.vmem [#allocation1], 1
  %3004 = vst [vmem:[%s3003] ss:$9 sm:$0xff] %v2273
  %v3005 = vld [vmem:[#allocation1] sm:$0xff]
  %s3007 = scalar_lea.vmem [#allocation1], 2
  %3008 = vst [vmem:[%s3007] ss:$9 sm:$0xff] %v2454
  %s3009 = scalar_lea.vmem [#allocation1], 3
  %3010 = vst [vmem:[%s3009] ss:$9 sm:$0xff] %v2455
  %v3011 = vld [vmem:[#allocation1] sm:$0xff]
  %s3013 = scalar_lea.vmem [#allocation1], 4
  %3014 = vst [vmem:[%s3013] ss:$9 sm:$0xff] %v2636
  %s3015 = scalar_lea.vmem [#allocation1], 5
  %3016 = vst [vmem:[%s3015] ss:$9 sm:$0xff] %v2637
  %v3017 = vld [vmem:[#allocation1] sm:$0xff]
  %s3019 = scalar_lea.vmem [#allocation1], 6
  %3020 = vst [vmem:[%s3019] ss:$9 sm:$0xff] %v2818
  %s3021 = scalar_lea.vmem [#allocation1], 7
  %3022 = vst [vmem:[%s3021] ss:$9 sm:$0xff] %v2819
  %v3023 = vld [vmem:[#allocation1] sm:$0xff]
  %3027 = vst [vmem:[#allocation1] ss:$9 sm:$0xff] %v3000
  %s3028 = scalar_lea.vmem [#allocation1], 1
  %3029 = vst [vmem:[%s3028] ss:$9 sm:$0xff] %v3001
  %v3030 = vld [vmem:[#allocation1] sm:$0xff]
  %v3032 = vsel %vm1630, %v3005, %v3011
  %v3033 = vsel %vm1636, %v3032, %v3017
  %v3034 = vsel %vm1642, %v3033, %v3023
  %v3035 = vld [vmem:[%s12] sm:$0xff]
  %v3036 = vld [vmem:[%s12 + $0x8] sm:$0xff]
  %v3037 = vld [vmem:[%s12 + $0x10] sm:$0xff]
  %v3038 = vld [vmem:[%s12 + $0x18] sm:$0xff]
  %v3039 = vld [vmem:[%s12 + $0x20] sm:$0xff]
  %v3040 = vld [vmem:[%s12 + $0x28] sm:$0xff]
  %v3041 = vld [vmem:[%s12 + $0x30] sm:$0xff]
  %v3042 = vld [vmem:[%s12 + $0x38] sm:$0xff]
  %v3043 = vld [vmem:[%s12 + $0x40] sm:$0xff]
  %v3044 = vld [vmem:[%s12 + $0x48] sm:$0xff]
  %v3045 = vld [vmem:[%s12 + $0x50] sm:$0xff]
  %v3046 = vld [vmem:[%s12 + $0x58] sm:$0xff]
  %v3047 = vld [vmem:[%s12 + $0x60] sm:$0xff]
  %v3048 = vld [vmem:[%s12 + $0x68] sm:$0xff]
  %v3049 = vld [vmem:[%s12 + $0x70] sm:$0xff]
  %v3050 = vld [vmem:[%s12 + $0x78] sm:$0xff]
  %v3051 = vld [vmem:[%s13] sm:$0x1]
  %v3053 = vperm.slane %v3051, 0
  %3055 = vmatpush.msra.mxu0 %v3050
  %3056 = vmatpush.msra.mxu0 %v3049
  %3057 = vmatpush.msra.mxu0 %v3048
  %3058 = vmatpush.msra.mxu0 %v3047
  %3059 = vmatpush.msra.mxu0 %v3046
  %3060 = vmatpush.msra.mxu0 %v3045
  %3061 = vmatpush.msra.mxu0 %v3044
  %3062 = vmatpush.msra.mxu0 %v3043
  %3063 = vmatpush.msra.mxu0 %v3042
  %3064 = vmatpush.msra.mxu0 %v3041
  %3065 = vmatpush.msra.mxu0 %v3040
  %3066 = vmatpush.msra.mxu0 %v3039
  %3067 = vmatpush.msra.mxu0 %v3038
  %3068 = vmatpush.msra.mxu0 %v3037
  %3069 = vmatpush.msra.mxu0 %v3036
  %3070 = vmatpush.msra.mxu0 %v3035
  %3071 = vmatmul.f32.gmra.mxu0 %v3034
  %v3072 = vpop.f32.mrf.mxu0
  %v3073 = vadd.f32 %v3053, %v3072
  %3074 = vmatmul.f32.gmra.mxu0 %v3030
  %v3075 = vpop.f32.mrf.mxu0
  %v3076 = vadd.f32 %v3053, %v3075
  %3077 = vdwg.mxu0
  %3078 = vst [vmem:[%s14] sm:$0xff] %v3073
  %3079 = vst [vmem:[%s14 + $0x8] sm:$0x3] %v3076
  // Predicated region
  $region58: #{s2vt_forward.1} parent=0 // pred_check
    _
  $region59: #{s2vt_forward.1} parent=0 // pred_check_branch
    %3081 = sbr.rel (0) target = $region61
  $region60: #{s2vt_forward.1} parent=0 // pred_region
    _
  $region61: #{s2vt_forward.1} parent=0 // pred_fallthru
    _
  // Predicated region
  $region62: #{s2vt_forward.1} parent=0 // pred_check
    _
  $region63: #{s2vt_forward.1} parent=0 // pred_check_branch
    %3083 = sbr.rel (0) target = $region65
  $region64: #{s2vt_forward.1} parent=0 // pred_region
    _
  $region65: #{s2vt_forward.1} parent=0 // pred_fallthru
    _

</llo_original>
